<compile_context>
chip_gen: v7x
topology: tpu7x:2x2x1
jax: 0.10.0
libtpu: 0.0.40
codegen_flags: <defaults>
</compile_context>

<pallas_src>
import math
import functools

import jax
import jax.numpy as jnp
from jax.experimental import pallas as pl
from jax.experimental.pallas import tpu as pltpu  # noqa: F401  (tiny fused kernel; no TPU-specific params needed)


# ----------------------------------------------------------------------------------
# In-kernel helpers
# ----------------------------------------------------------------------------------
def _layer_norm(x, g, b, eps):
    mean = jnp.mean(x, axis=-1, keepdims=True)
    var = jnp.mean((x - mean) ** 2, axis=-1, keepdims=True)
    return (x - mean) * jax.lax.rsqrt(var + eps) * g + b


def _decoder_block(q2d, kv2d, mask_bias, refs, *, B, L, H, eps):
    """Post-norm MHA + residual + LN + FFN + residual + LN on a (B*L, D) slab.

    q2d: (B*L, D) query stream.  kv2d: (B*L, D) key/value stream, or None if the
    K/V stream is identical to the query stream (lets us use one fused QKV matmul).
    mask_bias: (B, L, L) additive mask (0 = attend, -1e9 = masked).
    refs: 12 weight refs (loaded lazily at use sites).
    """
    (wqkv_ref, bqkv_ref, wo_ref, bo_ref,
     g1_ref, b1_ref, g2_ref, b2_ref,
     w1_ref, c1_ref, w2_ref, c2_ref) = refs

    D = q2d.shape[-1]
    dh = D // H
    scale = 1.0 / math.sqrt(dh)

    # --- fused QKV projection (one wide MXU matmul when q == kv) ---
    if kv2d is None:
        qkv = jnp.dot(q2d, wqkv_ref[...], preferred_element_type=jnp.float32) + bqkv_ref[...]
        q2 = qkv[:, 0 * D:1 * D]
        k2 = qkv[:, 1 * D:2 * D]
        v2 = qkv[:, 2 * D:3 * D]
    else:
        q2 = (jnp.dot(q2d, wqkv_ref[:, :D], preferred_element_type=jnp.float32)
              + bqkv_ref[:, :D])
        kv = (jnp.dot(kv2d, wqkv_ref[:, D:], preferred_element_type=jnp.float32)
              + bqkv_ref[:, D:])
        k2 = kv[:, :D]
        v2 = kv[:, D:]

    # (B*L, D) -> (B, L, D): leading-dim split only, lane layout unchanged.
    q3 = q2.reshape(B, L, D)
    k3 = k2.reshape(B, L, D)
    v3 = v2.reshape(B, L, D)

    # --- attention: B-batched matmuls per head (static loop over H) ---
    heads = []
    for h in range(H):
        sl = slice(h * dh, (h + 1) * dh)
        s = jnp.einsum('bqe,bke->bqk', q3[:, :, sl], k3[:, :, sl],
                       preferred_element_type=jnp.float32) * scale
        s = s + mask_bias                                   # additive mask (no cmp/select)
        s = s - jnp.max(s, axis=-1, keepdims=True)
        p = jnp.exp(s)
        p = p * pl.reciprocal(jnp.sum(p, axis=-1, keepdims=True), approx=True)
        heads.append(jnp.einsum('bqk,bke->bqe', p, v3[:, :, sl],
                                preferred_element_type=jnp.float32))

    # head merge -> single (B*L, D) x (D, D) output projection
    attn = jnp.concatenate(heads, axis=-1).reshape(B * L, D)
    attn = jnp.dot(attn, wo_ref[...], preferred_element_type=jnp.float32) + bo_ref[...]

    # Residual + LN 1 (dropout = identity in eval mode).
    x = _layer_norm(q2d + attn, g1_ref[...], b1_ref[...], eps)

    # Feed-forward + residual + LN 2.
    ff = jnp.maximum(jnp.dot(x, w1_ref[...], preferred_element_type=jnp.float32)
                     + c1_ref[...], 0.0)
    ff = jnp.dot(ff, w2_ref[...], preferred_element_type=jnp.float32) + c2_ref[...]
    return _layer_norm(x + ff, g2_ref[...], b2_ref[...], eps)


# ----------------------------------------------------------------------------------
# Single fused kernel for the whole forward pass
# ----------------------------------------------------------------------------------
def _fused_transformer_kernel(*refs, B, L, nhead, d_long, eps):
    (longf_ref, basef_ref, maskb_ref, pe_obs_ref, pe_pred_ref,
     ew1l_ref, ew1b_ref, eb1_ref, elng_ref, elnb_ref, ew2_ref, eb2_ref) = refs[:12]
    dec_refs = refs[12:24]
    pred_refs = refs[24:36]
    hw_ref = refs[36]
    hb_ref = refs[37]
    out_ref = refs[38]

    # --- Decoder.embedding: Linear -> ReLU -> Dropout(id) -> LayerNorm -> Linear ---
    # concat(long, base) @ W1 computed as a split matmul (no in-kernel concat).
    x = (jnp.dot(longf_ref[...], ew1l_ref[...], preferred_element_type=jnp.float32)
         + jnp.dot(basef_ref[...], ew1b_ref[...], preferred_element_type=jnp.float32)
         + eb1_ref[...])
    x = jnp.maximum(x, 0.0)
    x = _layer_norm(x, elng_ref[...], elnb_ref[...], eps)
    x = jnp.dot(x, ew2_ref[...], preferred_element_type=jnp.float32) + eb2_ref[...]
    h = x + pe_obs_ref[...]                                  # (B*L, D)

    mask_bias = maskb_ref[...]                               # (B, L, L), additive

    # Last decoder layer only (reference loop is unchained; earlier layers are dead).
    dec_out = _decoder_block(h, None, mask_bias, dec_refs, B=B, L=L, H=nhead, eps=eps)

    # Decoder_p: q gets pred-time PE, kv stays the un-shifted decoding.
    q_pred = dec_out + pe_pred_ref[...]
    y = _decoder_block(q_pred, dec_out, mask_bias, pred_refs, B=B, L=L, H=nhead, eps=eps)

    # Fused, lane-dense (128-wide, zero-padded) output head.
    # Column d_long is the survival logit -> stable sigmoid; columns [0:d_long] are
    # the longitudinal head; padded columns stay 0.
    z = jnp.dot(y, hw_ref[...], preferred_element_type=jnp.float32) + hb_ref[...]
    col = jax.lax.broadcasted_iota(jnp.int32, z.shape, 1)
    sig = 0.5 * (jnp.tanh(0.5 * z) + 1.0)                    # numerically stable sigmoid
    out_ref[...] = jnp.where(col == d_long, sig, z)


# ----------------------------------------------------------------------------------
# Host-side glue
# ----------------------------------------------------------------------------------
def positional_encoding(t, d_model):
    # t: (B, L) times.  pe[..., 2k] = sin(t * w_k), pe[..., 2k+1] = cos(t * w_k)
    assert d_model % 2 == 0, "positional_encoding assumes an even d_model"
    B, L = t.shape
    half = d_model // 2
    k = jnp.arange(half, dtype=jnp.float32)
    inv_freq = jnp.exp(-(2.0 * k) * (math.log(10000.0) / d_model))
    ang = t[..., None].astype(jnp.float32) * inv_freq        # (B, L, half)
    return jnp.stack([jnp.sin(ang), jnp.cos(ang)], axis=-1).reshape(B, L, d_model)


def transformer_forward(params, long, base, mask, obs_time, pred_time, *, nhead):
    B, L, d_long = long.shape
    d_base = base.shape[-1]
    d_model = params["dec_emb_w2"].shape[0]

    pe_obs = positional_encoding(obs_time, d_model).reshape(B * L, d_model)
    pe_pred = positional_encoding(pred_time, d_model).reshape(B * L, d_model)

    longf = long.reshape(B * L, d_long).astype(jnp.float32)
    basef = base.reshape(B * L, d_base).astype(jnp.float32)

    # Additive mask bias precomputed host-side (1.0 = attend -> 0, 0.0 = masked -> -1e9).
    mask_bias = jnp.where(mask.astype(jnp.float32) == 0.0, -1e9, 0.0).astype(jnp.float32)

    # (top-level Transformer.embedding output is discarded by the reference -> skipped)
    # Only the last decoder layer's output survives the reference's unchained loop.
    dec = params["decoder_layers"][-1]
    pred = params["pred_layer"]

    emb_args = (params["dec_emb_w1_long"], params["dec_emb_w1_base"], params["dec_emb_b1"],
                params["dec_emb_ln_g"], params["dec_emb_ln_b"],
                params["dec_emb_w2"], params["dec_emb_b2"])

    out_width = params["head_w"].shape[1]                    # lane-dense padded width (>=128)

    out = pl.pallas_call(
        functools.partial(_fused_transformer_kernel,
                          B=B, L=L, nhead=nhead, d_long=d_long, eps=1e-5),
        out_shape=jax.ShapeDtypeStruct((B * L, out_width), jnp.float32),
    )(longf, basef, mask_bias, pe_obs, pe_pred,
      *emb_args, *dec, *pred, params["head_w"], params["head_b"])

    long_out = out[:, :d_long].reshape(B, L, d_long)
    surv = out[:, d_long:d_long + 1].reshape(B, L, 1)
    return long_out, surv


# ----------------------------------------------------------------------------------
# Parameters (built once in kernel-ready layouts)
# ----------------------------------------------------------------------------------
def prepare_layer_params(p):
    """Convert standard layer params to the kernel layout (fused QKV weight, 2D biases)."""
    D = p["wq"].shape[0]
    wqkv = jnp.concatenate([p["wq"], p["wk"], p["wv"]], axis=1)          # (D, 3D)
    bqkv = jnp.concatenate([p["bq"], p["bk"], p["bv"]]).reshape(1, 3 * D)
    return (
        wqkv, bqkv,
        p["wo"], p["bo"].reshape(1, D),
        p["ln1_g"].reshape(1, D), p["ln1_b"].reshape(1, D),
        p["ln2_g"].reshape(1, D), p["ln2_b"].reshape(1, D),
        p["w1"], p["c1"].reshape(1, -1),
        p["w2"], p["c2"].reshape(1, D),
    )


def make_params(key, d_long, d_base, d_model, nhead, num_decoder_layers, d_ff):
    keys = iter(jax.random.split(key, 256))

    def w(shape, scale=0.05):
        return scale * jax.random.normal(next(keys), shape, jnp.float32)

    def layer_params():
        raw = dict(
            wq=w((d_model, d_model)), bq=w((d_model,)),
            wk=w((d_model, d_model)), bk=w((d_model,)),
            wv=w((d_model, d_model)), bv=w((d_model,)),
            wo=w((d_model, d_model)), bo=w((d_model,)),
            ln1_g=jnp.ones((d_model,), jnp.float32),
            ln1_b=jnp.zeros((d_model,), jnp.float32),
            ln2_g=jnp.ones((d_model,), jnp.float32),
            ln2_b=jnp.zeros((d_model,), jnp.float32),
            w1=w((d_model, d_ff)), c1=w((d_ff,)),
            w2=w((d_ff, d_model)), c2=w((d_model,)),
        )
        return prepare_layer_params(raw)

    emb_w1 = w((d_long + d_base, d_model))
    long_w, long_b = w((d_model, d_long)), w((d_long,))
    surv_w, surv_b = w((d_model, 1)), w((1,))

    # Lane-dense fused output head: [long | surv | zero padding] -> >=128 columns.
    n_real = d_long + 1
    out_width = max(128, ((n_real + 127) // 128) * 128)
    head_w = jnp.zeros((d_model, out_width), jnp.float32)
    head_w = head_w.at[:, :d_long].set(long_w).at[:, d_long:n_real].set(surv_w)
    head_b = jnp.zeros((1, out_width), jnp.float32)
    head_b = head_b.at[0, :d_long].set(long_b).at[0, d_long:n_real].set(surv_b)

    return {
        # Decoder.embedding (first Linear's weight split by input block -> no concat)
        "dec_emb_w1_long": emb_w1[:d_long],
        "dec_emb_w1_base": emb_w1[d_long:],
        "dec_emb_b1": w((d_model,)).reshape(1, d_model),
        "dec_emb_ln_g": jnp.ones((1, d_model), jnp.float32),
        "dec_emb_ln_b": jnp.zeros((1, d_model), jnp.float32),
        "dec_emb_w2": w((d_model, d_model)),
        "dec_emb_b2": w((d_model,)).reshape(1, d_model),
        "decoder_layers": [layer_params() for _ in range(num_decoder_layers)],
        "pred_layer": layer_params(),
        "head_w": head_w,
        "head_b": head_b,
    }


if __name__ == "__main__":
    d_long, d_base = 3, 2
    d_model, nhead, num_decoder_layers, d_ff = 32, 4, 3, 64
    B, L = 2, 8

    key = jax.random.PRNGKey(0)
    kp, k1, k2 = jax.random.split(key, 3)

    params = make_params(kp, d_long, d_base, d_model, nhead, num_decoder_layers, d_ff)

    long = jax.random.normal(k1, (B, L, d_long), jnp.float32)
    base = jax.random.normal(k2, (B, L, d_base), jnp.float32)
    obs_time = jnp.tile(jnp.arange(L, dtype=jnp.float32)[None, :], (B, 1))
    pred_time = obs_time + 1.0
    # causal attention mask: 1.0 = attend, 0.0 = masked
    mask = jnp.tile(jnp.tril(jnp.ones((L, L), jnp.float32))[None, :, :], (B, 1, 1))

    fwd = jax.jit(functools.partial(transformer_forward, nhead=nhead))
    long_out, surv_out = fwd(params, long, base, mask, obs_time, pred_time)
    jax.block_until_ready((long_out, surv_out))

    assert long_out.shape == (B, L, d_long)
    assert surv_out.shape == (B, L, 1)
    assert bool(jnp.all(jnp.isfinite(long_out))) and bool(jnp.all(jnp.isfinite(surv_out)))
    assert bool(jnp.all(surv_out >= 0.0)) and bool(jnp.all(surv_out <= 1.0))
    print("KERNEL_OK")
</pallas_src>

<mosaic_0001>
module attributes {stable_mosaic.version = 11 : i64} {
  func.func @_fused_transformer_kernel(%arg0: memref<16x3xf32, #tpu.memory_space<vmem>>, %arg1: memref<16x2xf32, #tpu.memory_space<vmem>>, %arg2: memref<2x8x8xf32, #tpu.memory_space<vmem>>, %arg3: memref<16x32xf32, #tpu.memory_space<vmem>>, %arg4: memref<16x32xf32, #tpu.memory_space<vmem>>, %arg5: memref<3x32xf32, #tpu.memory_space<vmem>>, %arg6: memref<2x32xf32, #tpu.memory_space<vmem>>, %arg7: memref<1x32xf32, #tpu.memory_space<vmem>>, %arg8: memref<1x32xf32, #tpu.memory_space<vmem>>, %arg9: memref<1x32xf32, #tpu.memory_space<vmem>>, %arg10: memref<32x32xf32, #tpu.memory_space<vmem>>, %arg11: memref<1x32xf32, #tpu.memory_space<vmem>>, %arg12: memref<32x96xf32, #tpu.memory_space<vmem>>, %arg13: memref<1x96xf32, #tpu.memory_space<vmem>>, %arg14: memref<32x32xf32, #tpu.memory_space<vmem>>, %arg15: memref<1x32xf32, #tpu.memory_space<vmem>>, %arg16: memref<1x32xf32, #tpu.memory_space<vmem>>, %arg17: memref<1x32xf32, #tpu.memory_space<vmem>>, %arg18: memref<1x32xf32, #tpu.memory_space<vmem>>, %arg19: memref<1x32xf32, #tpu.memory_space<vmem>>, %arg20: memref<32x64xf32, #tpu.memory_space<vmem>>, %arg21: memref<1x64xf32, #tpu.memory_space<vmem>>, %arg22: memref<64x32xf32, #tpu.memory_space<vmem>>, %arg23: memref<1x32xf32, #tpu.memory_space<vmem>>, %arg24: memref<32x96xf32, #tpu.memory_space<vmem>>, %arg25: memref<1x96xf32, #tpu.memory_space<vmem>>, %arg26: memref<32x32xf32, #tpu.memory_space<vmem>>, %arg27: memref<1x32xf32, #tpu.memory_space<vmem>>, %arg28: memref<1x32xf32, #tpu.memory_space<vmem>>, %arg29: memref<1x32xf32, #tpu.memory_space<vmem>>, %arg30: memref<1x32xf32, #tpu.memory_space<vmem>>, %arg31: memref<1x32xf32, #tpu.memory_space<vmem>>, %arg32: memref<32x64xf32, #tpu.memory_space<vmem>>, %arg33: memref<1x64xf32, #tpu.memory_space<vmem>>, %arg34: memref<64x32xf32, #tpu.memory_space<vmem>>, %arg35: memref<1x32xf32, #tpu.memory_space<vmem>>, %arg36: memref<32x128xf32, #tpu.memory_space<vmem>>, %arg37: memref<1x128xf32, #tpu.memory_space<vmem>>, %arg38: memref<16x128xf32, #tpu.memory_space<vmem>>) attributes {dimension_semantics = [], scalar_prefetch = 0 : i64, scratch_operands = 0 : i64, tpu.core_type = #tpu.core_type<tc>} {
    %c0 = arith.constant 0 : index
    %c0_0 = arith.constant 0 : index
    %0 = vector.load %arg0[%c0, %c0_0] : memref<16x3xf32, #tpu.memory_space<vmem>>, vector<16x3xf32>
    %c0_1 = arith.constant 0 : index
    %c0_2 = arith.constant 0 : index
    %1 = vector.load %arg5[%c0_1, %c0_2] : memref<3x32xf32, #tpu.memory_space<vmem>>, vector<3x32xf32>
    %cst = arith.constant dense<0.000000e+00> : vector<16x32xf32>
    %2 = tpu.matmul %0, %1, %cst {dimension_numbers = #tpu.dot_dimension_numbers<[1], [0], [0], [1], [0, 0, 1, 1], [], []>} : vector<16x3xf32>, vector<3x32xf32>, vector<16x32xf32> -> vector<16x32xf32>
    %c0_3 = arith.constant 0 : index
    %c0_4 = arith.constant 0 : index
    %3 = vector.load %arg1[%c0_3, %c0_4] : memref<16x2xf32, #tpu.memory_space<vmem>>, vector<16x2xf32>
    %c0_5 = arith.constant 0 : index
    %c0_6 = arith.constant 0 : index
    %4 = vector.load %arg6[%c0_5, %c0_6] : memref<2x32xf32, #tpu.memory_space<vmem>>, vector<2x32xf32>
    %cst_7 = arith.constant dense<0.000000e+00> : vector<16x32xf32>
    %5 = tpu.matmul %3, %4, %cst_7 {dimension_numbers = #tpu.dot_dimension_numbers<[1], [0], [0], [1], [0, 0, 1, 1], [], []>} : vector<16x2xf32>, vector<2x32xf32>, vector<16x32xf32> -> vector<16x32xf32>
    %6 = arith.addf %2, %5 : vector<16x32xf32>
    %c0_8 = arith.constant 0 : index
    %c0_9 = arith.constant 0 : index
    %7 = vector.load %arg7[%c0_8, %c0_9] : memref<1x32xf32, #tpu.memory_space<vmem>>, vector<1x32xf32>
    %8 = vector.broadcast %7 : vector<1x32xf32> to vector<16x32xf32>
    %9 = arith.addf %6, %8 : vector<16x32xf32>
    %cst_10 = arith.constant 0.000000e+00 : f32
    %10 = vector.broadcast %cst_10 : f32 to vector<16x32xf32>
    %11 = arith.maximumf %9, %10 : vector<16x32xf32>
    %c0_11 = arith.constant 0 : index
    %c0_12 = arith.constant 0 : index
    %12 = vector.load %arg8[%c0_11, %c0_12] : memref<1x32xf32, #tpu.memory_space<vmem>>, vector<1x32xf32>
    %c0_13 = arith.constant 0 : index
    %c0_14 = arith.constant 0 : index
    %13 = vector.load %arg9[%c0_13, %c0_14] : memref<1x32xf32, #tpu.memory_space<vmem>>, vector<1x32xf32>
    %cst_15 = arith.constant dense<0.000000e+00> : vector<16xf32>
    %14 = vector.multi_reduction <add>, %11, %cst_15 [1] : vector<16x32xf32> to vector<16xf32>
    %15 = vector.shape_cast %14 : vector<16xf32> to vector<16x1xf32>
    %cst_16 = arith.constant 3.200000e+01 : f32
    %16 = vector.broadcast %cst_16 : f32 to vector<16x1xf32>
    %17 = arith.divf %15, %16 : vector<16x1xf32>
    %18 = vector.broadcast %17 : vector<16x1xf32> to vector<16x32xf32>
    %19 = arith.subf %11, %18 : vector<16x32xf32>
    %20 = arith.mulf %19, %19 : vector<16x32xf32>
    %cst_17 = arith.constant dense<0.000000e+00> : vector<16xf32>
    %21 = vector.multi_reduction <add>, %20, %cst_17 [1] : vector<16x32xf32> to vector<16xf32>
    %22 = vector.shape_cast %21 : vector<16xf32> to vector<16x1xf32>
    %cst_18 = arith.constant 3.200000e+01 : f32
    %23 = vector.broadcast %cst_18 : f32 to vector<16x1xf32>
    %24 = arith.divf %22, %23 : vector<16x1xf32>
    %25 = vector.broadcast %17 : vector<16x1xf32> to vector<16x32xf32>
    %26 = arith.subf %11, %25 : vector<16x32xf32>
    %cst_19 = arith.constant 9.99999974E-6 : f32
    %27 = vector.broadcast %cst_19 : f32 to vector<16x1xf32>
    %28 = arith.addf %24, %27 : vector<16x1xf32>
    %29 = math.rsqrt %28 : vector<16x1xf32>
    %30 = vector.broadcast %29 : vector<16x1xf32> to vector<16x32xf32>
    %31 = arith.mulf %26, %30 : vector<16x32xf32>
    %32 = vector.broadcast %12 : vector<1x32xf32> to vector<16x32xf32>
    %33 = arith.mulf %31, %32 : vector<16x32xf32>
    %34 = vector.broadcast %13 : vector<1x32xf32> to vector<16x32xf32>
    %35 = arith.addf %33, %34 : vector<16x32xf32>
    %c0_20 = arith.constant 0 : index
    %c0_21 = arith.constant 0 : index
    %36 = vector.load %arg10[%c0_20, %c0_21] : memref<32x32xf32, #tpu.memory_space<vmem>>, vector<32x32xf32>
    %cst_22 = arith.constant dense<0.000000e+00> : vector<16x32xf32>
    %37 = tpu.matmul %35, %36, %cst_22 {dimension_numbers = #tpu.dot_dimension_numbers<[1], [0], [0], [1], [0, 0, 1, 1], [], []>} : vector<16x32xf32>, vector<32x32xf32>, vector<16x32xf32> -> vector<16x32xf32>
    %c0_23 = arith.constant 0 : index
    %c0_24 = arith.constant 0 : index
    %38 = vector.load %arg11[%c0_23, %c0_24] : memref<1x32xf32, #tpu.memory_space<vmem>>, vector<1x32xf32>
    %39 = vector.broadcast %38 : vector<1x32xf32> to vector<16x32xf32>
    %40 = arith.addf %37, %39 : vector<16x32xf32>
    %c0_25 = arith.constant 0 : index
    %c0_26 = arith.constant 0 : index
    %41 = vector.load %arg3[%c0_25, %c0_26] : memref<16x32xf32, #tpu.memory_space<vmem>>, vector<16x32xf32>
    %42 = arith.addf %40, %41 : vector<16x32xf32>
    %c0_27 = arith.constant 0 : index
    %c0_28 = arith.constant 0 : index
    %c0_29 = arith.constant 0 : index
    %43 = vector.load %arg2[%c0_27, %c0_28, %c0_29] : memref<2x8x8xf32, #tpu.memory_space<vmem>>, vector<2x8x8xf32>
    %c0_30 = arith.constant 0 : index
    %c0_31 = arith.constant 0 : index
    %44 = vector.load %arg12[%c0_30, %c0_31] : memref<32x96xf32, #tpu.memory_space<vmem>>, vector<32x96xf32>
    %cst_32 = arith.constant dense<0.000000e+00> : vector<16x96xf32>
    %45 = tpu.matmul %42, %44, %cst_32 {dimension_numbers = #tpu.dot_dimension_numbers<[1], [0], [0], [1], [0, 0, 1, 1], [], []>} : vector<16x32xf32>, vector<32x96xf32>, vector<16x96xf32> -> vector<16x96xf32>
    %c0_33 = arith.constant 0 : index
    %c0_34 = arith.constant 0 : index
    %46 = vector.load %arg13[%c0_33, %c0_34] : memref<1x96xf32, #tpu.memory_space<vmem>>, vector<1x96xf32>
    %47 = vector.broadcast %46 : vector<1x96xf32> to vector<16x96xf32>
    %48 = arith.addf %45, %47 : vector<16x96xf32>
    %49 = vector.extract_strided_slice %48 {offsets = [0, 0], sizes = [16, 32], strides = [1, 1]} : vector<16x96xf32> to vector<16x32xf32>
    %50 = vector.extract_strided_slice %48 {offsets = [0, 32], sizes = [16, 32], strides = [1, 1]} : vector<16x96xf32> to vector<16x32xf32>
    %51 = vector.extract_strided_slice %48 {offsets = [0, 64], sizes = [16, 32], strides = [1, 1]} : vector<16x96xf32> to vector<16x32xf32>
    %52 = vector.shape_cast %49 : vector<16x32xf32> to vector<2x8x32xf32>
    %53 = vector.shape_cast %50 : vector<16x32xf32> to vector<2x8x32xf32>
    %54 = vector.shape_cast %51 : vector<16x32xf32> to vector<2x8x32xf32>
    %55 = vector.extract_strided_slice %52 {offsets = [0, 0, 0], sizes = [2, 8, 8], strides = [1, 1, 1]} : vector<2x8x32xf32> to vector<2x8x8xf32>
    %56 = vector.extract_strided_slice %53 {offsets = [0, 0, 0], sizes = [2, 8, 8], strides = [1, 1, 1]} : vector<2x8x32xf32> to vector<2x8x8xf32>
    "tpu.trace_start"() <{level = 10 : i32, message = "bqe,bke->bqk"}> : () -> ()
    %cst_35 = arith.constant dense<0.000000e+00> : vector<2x8x8xf32>
    %57 = tpu.matmul %55, %56, %cst_35 {dimension_numbers = #tpu.dot_dimension_numbers<[2], [2], [1], [1], [0, 0, 0, 1, 1, 1], [0], [0]>} : vector<2x8x8xf32>, vector<2x8x8xf32>, vector<2x8x8xf32> -> vector<2x8x8xf32>
    "tpu.trace_stop"() : () -> ()
    %cst_36 = arith.constant 0.353553385 : f32
    %58 = vector.broadcast %cst_36 : f32 to vector<2x8x8xf32>
    %59 = arith.mulf %57, %58 : vector<2x8x8xf32>
    %60 = arith.addf %59, %43 : vector<2x8x8xf32>
    %cst_37 = arith.constant dense<0xFF800000> : vector<2x8xf32>
    %61 = vector.multi_reduction <maximumf>, %60, %cst_37 [2] : vector<2x8x8xf32> to vector<2x8xf32>
    %62 = vector.shape_cast %61 : vector<2x8xf32> to vector<2x8x1xf32>
    %63 = vector.broadcast %62 : vector<2x8x1xf32> to vector<2x8x8xf32>
    %64 = arith.subf %60, %63 : vector<2x8x8xf32>
    %65 = math.exp %64 : vector<2x8x8xf32>
    %cst_38 = arith.constant dense<0.000000e+00> : vector<2x8xf32>
    %66 = vector.multi_reduction <add>, %65, %cst_38 [2] : vector<2x8x8xf32> to vector<2x8xf32>
    %67 = vector.shape_cast %66 : vector<2x8xf32> to vector<2x8x1xf32>
    %68 = tpu.reciprocal %67 {approx = true} : vector<2x8x1xf32> -> vector<2x8x1xf32>
    %69 = vector.broadcast %68 : vector<2x8x1xf32> to vector<2x8x8xf32>
    %70 = arith.mulf %65, %69 : vector<2x8x8xf32>
    %71 = vector.extract_strided_slice %54 {offsets = [0, 0, 0], sizes = [2, 8, 8], strides = [1, 1, 1]} : vector<2x8x32xf32> to vector<2x8x8xf32>
    "tpu.trace_start"() <{level = 10 : i32, message = "bqk,bke->bqe"}> : () -> ()
    %cst_39 = arith.constant dense<0.000000e+00> : vector<2x8x8xf32>
    %72 = tpu.matmul %70, %71, %cst_39 {dimension_numbers = #tpu.dot_dimension_numbers<[2], [1], [1], [2], [0, 0, 0, 1, 1, 2], [0], [0]>} : vector<2x8x8xf32>, vector<2x8x8xf32>, vector<2x8x8xf32> -> vector<2x8x8xf32>
    "tpu.trace_stop"() : () -> ()
    %73 = vector.extract_strided_slice %52 {offsets = [0, 0, 8], sizes = [2, 8, 8], strides = [1, 1, 1]} : vector<2x8x32xf32> to vector<2x8x8xf32>
    %74 = vector.extract_strided_slice %53 {offsets = [0, 0, 8], sizes = [2, 8, 8], strides = [1, 1, 1]} : vector<2x8x32xf32> to vector<2x8x8xf32>
    "tpu.trace_start"() <{level = 10 : i32, message = "bqe,bke->bqk"}> : () -> ()
    %cst_40 = arith.constant dense<0.000000e+00> : vector<2x8x8xf32>
    %75 = tpu.matmul %73, %74, %cst_40 {dimension_numbers = #tpu.dot_dimension_numbers<[2], [2], [1], [1], [0, 0, 0, 1, 1, 1], [0], [0]>} : vector<2x8x8xf32>, vector<2x8x8xf32>, vector<2x8x8xf32> -> vector<2x8x8xf32>
    "tpu.trace_stop"() : () -> ()
    %cst_41 = arith.constant 0.353553385 : f32
    %76 = vector.broadcast %cst_41 : f32 to vector<2x8x8xf32>
    %77 = arith.mulf %75, %76 : vector<2x8x8xf32>
    %78 = arith.addf %77, %43 : vector<2x8x8xf32>
    %cst_42 = arith.constant dense<0xFF800000> : vector<2x8xf32>
    %79 = vector.multi_reduction <maximumf>, %78, %cst_42 [2] : vector<2x8x8xf32> to vector<2x8xf32>
    %80 = vector.shape_cast %79 : vector<2x8xf32> to vector<2x8x1xf32>
    %81 = vector.broadcast %80 : vector<2x8x1xf32> to vector<2x8x8xf32>
    %82 = arith.subf %78, %81 : vector<2x8x8xf32>
    %83 = math.exp %82 : vector<2x8x8xf32>
    %cst_43 = arith.constant dense<0.000000e+00> : vector<2x8xf32>
    %84 = vector.multi_reduction <add>, %83, %cst_43 [2] : vector<2x8x8xf32> to vector<2x8xf32>
    %85 = vector.shape_cast %84 : vector<2x8xf32> to vector<2x8x1xf32>
    %86 = tpu.reciprocal %85 {approx = true} : vector<2x8x1xf32> -> vector<2x8x1xf32>
    %87 = vector.broadcast %86 : vector<2x8x1xf32> to vector<2x8x8xf32>
    %88 = arith.mulf %83, %87 : vector<2x8x8xf32>
    %89 = vector.extract_strided_slice %54 {offsets = [0, 0, 8], sizes = [2, 8, 8], strides = [1, 1, 1]} : vector<2x8x32xf32> to vector<2x8x8xf32>
    "tpu.trace_start"() <{level = 10 : i32, message = "bqk,bke->bqe"}> : () -> ()
    %cst_44 = arith.constant dense<0.000000e+00> : vector<2x8x8xf32>
    %90 = tpu.matmul %88, %89, %cst_44 {dimension_numbers = #tpu.dot_dimension_numbers<[2], [1], [1], [2], [0, 0, 0, 1, 1, 2], [0], [0]>} : vector<2x8x8xf32>, vector<2x8x8xf32>, vector<2x8x8xf32> -> vector<2x8x8xf32>
    "tpu.trace_stop"() : () -> ()
    %91 = vector.extract_strided_slice %52 {offsets = [0, 0, 16], sizes = [2, 8, 8], strides = [1, 1, 1]} : vector<2x8x32xf32> to vector<2x8x8xf32>
    %92 = vector.extract_strided_slice %53 {offsets = [0, 0, 16], sizes = [2, 8, 8], strides = [1, 1, 1]} : vector<2x8x32xf32> to vector<2x8x8xf32>
    "tpu.trace_start"() <{level = 10 : i32, message = "bqe,bke->bqk"}> : () -> ()
    %cst_45 = arith.constant dense<0.000000e+00> : vector<2x8x8xf32>
    %93 = tpu.matmul %91, %92, %cst_45 {dimension_numbers = #tpu.dot_dimension_numbers<[2], [2], [1], [1], [0, 0, 0, 1, 1, 1], [0], [0]>} : vector<2x8x8xf32>, vector<2x8x8xf32>, vector<2x8x8xf32> -> vector<2x8x8xf32>
    "tpu.trace_stop"() : () -> ()
    %cst_46 = arith.constant 0.353553385 : f32
    %94 = vector.broadcast %cst_46 : f32 to vector<2x8x8xf32>
    %95 = arith.mulf %93, %94 : vector<2x8x8xf32>
    %96 = arith.addf %95, %43 : vector<2x8x8xf32>
    %cst_47 = arith.constant dense<0xFF800000> : vector<2x8xf32>
    %97 = vector.multi_reduction <maximumf>, %96, %cst_47 [2] : vector<2x8x8xf32> to vector<2x8xf32>
    %98 = vector.shape_cast %97 : vector<2x8xf32> to vector<2x8x1xf32>
    %99 = vector.broadcast %98 : vector<2x8x1xf32> to vector<2x8x8xf32>
    %100 = arith.subf %96, %99 : vector<2x8x8xf32>
    %101 = math.exp %100 : vector<2x8x8xf32>
    %cst_48 = arith.constant dense<0.000000e+00> : vector<2x8xf32>
    %102 = vector.multi_reduction <add>, %101, %cst_48 [2] : vector<2x8x8xf32> to vector<2x8xf32>
    %103 = vector.shape_cast %102 : vector<2x8xf32> to vector<2x8x1xf32>
    %104 = tpu.reciprocal %103 {approx = true} : vector<2x8x1xf32> -> vector<2x8x1xf32>
    %105 = vector.broadcast %104 : vector<2x8x1xf32> to vector<2x8x8xf32>
    %106 = arith.mulf %101, %105 : vector<2x8x8xf32>
    %107 = vector.extract_strided_slice %54 {offsets = [0, 0, 16], sizes = [2, 8, 8], strides = [1, 1, 1]} : vector<2x8x32xf32> to vector<2x8x8xf32>
    "tpu.trace_start"() <{level = 10 : i32, message = "bqk,bke->bqe"}> : () -> ()
    %cst_49 = arith.constant dense<0.000000e+00> : vector<2x8x8xf32>
    %108 = tpu.matmul %106, %107, %cst_49 {dimension_numbers = #tpu.dot_dimension_numbers<[2], [1], [1], [2], [0, 0, 0, 1, 1, 2], [0], [0]>} : vector<2x8x8xf32>, vector<2x8x8xf32>, vector<2x8x8xf32> -> vector<2x8x8xf32>
    "tpu.trace_stop"() : () -> ()
    %109 = vector.extract_strided_slice %52 {offsets = [0, 0, 24], sizes = [2, 8, 8], strides = [1, 1, 1]} : vector<2x8x32xf32> to vector<2x8x8xf32>
    %110 = vector.extract_strided_slice %53 {offsets = [0, 0, 24], sizes = [2, 8, 8], strides = [1, 1, 1]} : vector<2x8x32xf32> to vector<2x8x8xf32>
    "tpu.trace_start"() <{level = 10 : i32, message = "bqe,bke->bqk"}> : () -> ()
    %cst_50 = arith.constant dense<0.000000e+00> : vector<2x8x8xf32>
    %111 = tpu.matmul %109, %110, %cst_50 {dimension_numbers = #tpu.dot_dimension_numbers<[2], [2], [1], [1], [0, 0, 0, 1, 1, 1], [0], [0]>} : vector<2x8x8xf32>, vector<2x8x8xf32>, vector<2x8x8xf32> -> vector<2x8x8xf32>
    "tpu.trace_stop"() : () -> ()
    %cst_51 = arith.constant 0.353553385 : f32
    %112 = vector.broadcast %cst_51 : f32 to vector<2x8x8xf32>
    %113 = arith.mulf %111, %112 : vector<2x8x8xf32>
    %114 = arith.addf %113, %43 : vector<2x8x8xf32>
    %cst_52 = arith.constant dense<0xFF800000> : vector<2x8xf32>
    %115 = vector.multi_reduction <maximumf>, %114, %cst_52 [2] : vector<2x8x8xf32> to vector<2x8xf32>
    %116 = vector.shape_cast %115 : vector<2x8xf32> to vector<2x8x1xf32>
    %117 = vector.broadcast %116 : vector<2x8x1xf32> to vector<2x8x8xf32>
    %118 = arith.subf %114, %117 : vector<2x8x8xf32>
    %119 = math.exp %118 : vector<2x8x8xf32>
    %cst_53 = arith.constant dense<0.000000e+00> : vector<2x8xf32>
    %120 = vector.multi_reduction <add>, %119, %cst_53 [2] : vector<2x8x8xf32> to vector<2x8xf32>
    %121 = vector.shape_cast %120 : vector<2x8xf32> to vector<2x8x1xf32>
    %122 = tpu.reciprocal %121 {approx = true} : vector<2x8x1xf32> -> vector<2x8x1xf32>
    %123 = vector.broadcast %122 : vector<2x8x1xf32> to vector<2x8x8xf32>
    %124 = arith.mulf %119, %123 : vector<2x8x8xf32>
    %125 = vector.extract_strided_slice %54 {offsets = [0, 0, 24], sizes = [2, 8, 8], strides = [1, 1, 1]} : vector<2x8x32xf32> to vector<2x8x8xf32>
    "tpu.trace_start"() <{level = 10 : i32, message = "bqk,bke->bqe"}> : () -> ()
    %cst_54 = arith.constant dense<0.000000e+00> : vector<2x8x8xf32>
    %126 = tpu.matmul %124, %125, %cst_54 {dimension_numbers = #tpu.dot_dimension_numbers<[2], [1], [1], [2], [0, 0, 0, 1, 1, 2], [0], [0]>} : vector<2x8x8xf32>, vector<2x8x8xf32>, vector<2x8x8xf32> -> vector<2x8x8xf32>
    "tpu.trace_stop"() : () -> ()
    %127 = tpu.concatenate %72, %90, %108, %126 in 2 : vector<2x8x8xf32>, vector<2x8x8xf32>, vector<2x8x8xf32>, vector<2x8x8xf32> -> vector<2x8x32xf32>
    %128 = vector.shape_cast %127 : vector<2x8x32xf32> to vector<16x32xf32>
    %c0_55 = arith.constant 0 : index
    %c0_56 = arith.constant 0 : index
    %129 = vector.load %arg14[%c0_55, %c0_56] : memref<32x32xf32, #tpu.memory_space<vmem>>, vector<32x32xf32>
    %cst_57 = arith.constant dense<0.000000e+00> : vector<16x32xf32>
    %130 = tpu.matmul %128, %129, %cst_57 {dimension_numbers = #tpu.dot_dimension_numbers<[1], [0], [0], [1], [0, 0, 1, 1], [], []>} : vector<16x32xf32>, vector<32x32xf32>, vector<16x32xf32> -> vector<16x32xf32>
    %c0_58 = arith.constant 0 : index
    %c0_59 = arith.constant 0 : index
    %131 = vector.load %arg15[%c0_58, %c0_59] : memref<1x32xf32, #tpu.memory_space<vmem>>, vector<1x32xf32>
    %132 = vector.broadcast %131 : vector<1x32xf32> to vector<16x32xf32>
    %133 = arith.addf %130, %132 : vector<16x32xf32>
    %134 = arith.addf %42, %133 : vector<16x32xf32>
    %c0_60 = arith.constant 0 : index
    %c0_61 = arith.constant 0 : index
    %135 = vector.load %arg16[%c0_60, %c0_61] : memref<1x32xf32, #tpu.memory_space<vmem>>, vector<1x32xf32>
    %c0_62 = arith.constant 0 : index
    %c0_63 = arith.constant 0 : index
    %136 = vector.load %arg17[%c0_62, %c0_63] : memref<1x32xf32, #tpu.memory_space<vmem>>, vector<1x32xf32>
    %cst_64 = arith.constant dense<0.000000e+00> : vector<16xf32>
    %137 = vector.multi_reduction <add>, %134, %cst_64 [1] : vector<16x32xf32> to vector<16xf32>
    %138 = vector.shape_cast %137 : vector<16xf32> to vector<16x1xf32>
    %cst_65 = arith.constant 3.200000e+01 : f32
    %139 = vector.broadcast %cst_65 : f32 to vector<16x1xf32>
    %140 = arith.divf %138, %139 : vector<16x1xf32>
    %141 = vector.broadcast %140 : vector<16x1xf32> to vector<16x32xf32>
    %142 = arith.subf %134, %141 : vector<16x32xf32>
    %143 = arith.mulf %142, %142 : vector<16x32xf32>
    %cst_66 = arith.constant dense<0.000000e+00> : vector<16xf32>
    %144 = vector.multi_reduction <add>, %143, %cst_66 [1] : vector<16x32xf32> to vector<16xf32>
    %145 = vector.shape_cast %144 : vector<16xf32> to vector<16x1xf32>
    %cst_67 = arith.constant 3.200000e+01 : f32
    %146 = vector.broadcast %cst_67 : f32 to vector<16x1xf32>
    %147 = arith.divf %145, %146 : vector<16x1xf32>
    %148 = vector.broadcast %140 : vector<16x1xf32> to vector<16x32xf32>
    %149 = arith.subf %134, %148 : vector<16x32xf32>
    %cst_68 = arith.constant 9.99999974E-6 : f32
    %150 = vector.broadcast %cst_68 : f32 to vector<16x1xf32>
    %151 = arith.addf %147, %150 : vector<16x1xf32>
    %152 = math.rsqrt %151 : vector<16x1xf32>
    %153 = vector.broadcast %152 : vector<16x1xf32> to vector<16x32xf32>
    %154 = arith.mulf %149, %153 : vector<16x32xf32>
    %155 = vector.broadcast %135 : vector<1x32xf32> to vector<16x32xf32>
    %156 = arith.mulf %154, %155 : vector<16x32xf32>
    %157 = vector.broadcast %136 : vector<1x32xf32> to vector<16x32xf32>
    %158 = arith.addf %156, %157 : vector<16x32xf32>
    %c0_69 = arith.constant 0 : index
    %c0_70 = arith.constant 0 : index
    %159 = vector.load %arg20[%c0_69, %c0_70] : memref<32x64xf32, #tpu.memory_space<vmem>>, vector<32x64xf32>
    %cst_71 = arith.constant dense<0.000000e+00> : vector<16x64xf32>
    %160 = tpu.matmul %158, %159, %cst_71 {dimension_numbers = #tpu.dot_dimension_numbers<[1], [0], [0], [1], [0, 0, 1, 1], [], []>} : vector<16x32xf32>, vector<32x64xf32>, vector<16x64xf32> -> vector<16x64xf32>
    %c0_72 = arith.constant 0 : index
    %c0_73 = arith.constant 0 : index
    %161 = vector.load %arg21[%c0_72, %c0_73] : memref<1x64xf32, #tpu.memory_space<vmem>>, vector<1x64xf32>
    %162 = vector.broadcast %161 : vector<1x64xf32> to vector<16x64xf32>
    %163 = arith.addf %160, %162 : vector<16x64xf32>
    %cst_74 = arith.constant 0.000000e+00 : f32
    %164 = vector.broadcast %cst_74 : f32 to vector<16x64xf32>
    %165 = arith.maximumf %163, %164 : vector<16x64xf32>
    %c0_75 = arith.constant 0 : index
    %c0_76 = arith.constant 0 : index
    %166 = vector.load %arg22[%c0_75, %c0_76] : memref<64x32xf32, #tpu.memory_space<vmem>>, vector<64x32xf32>
    %cst_77 = arith.constant dense<0.000000e+00> : vector<16x32xf32>
    %167 = tpu.matmul %165, %166, %cst_77 {dimension_numbers = #tpu.dot_dimension_numbers<[1], [0], [0], [1], [0, 0, 1, 1], [], []>} : vector<16x64xf32>, vector<64x32xf32>, vector<16x32xf32> -> vector<16x32xf32>
    %c0_78 = arith.constant 0 : index
    %c0_79 = arith.constant 0 : index
    %168 = vector.load %arg23[%c0_78, %c0_79] : memref<1x32xf32, #tpu.memory_space<vmem>>, vector<1x32xf32>
    %169 = vector.broadcast %168 : vector<1x32xf32> to vector<16x32xf32>
    %170 = arith.addf %167, %169 : vector<16x32xf32>
    %171 = arith.addf %158, %170 : vector<16x32xf32>
    %c0_80 = arith.constant 0 : index
    %c0_81 = arith.constant 0 : index
    %172 = vector.load %arg18[%c0_80, %c0_81] : memref<1x32xf32, #tpu.memory_space<vmem>>, vector<1x32xf32>
    %c0_82 = arith.constant 0 : index
    %c0_83 = arith.constant 0 : index
    %173 = vector.load %arg19[%c0_82, %c0_83] : memref<1x32xf32, #tpu.memory_space<vmem>>, vector<1x32xf32>
    %cst_84 = arith.constant dense<0.000000e+00> : vector<16xf32>
    %174 = vector.multi_reduction <add>, %171, %cst_84 [1] : vector<16x32xf32> to vector<16xf32>
    %175 = vector.shape_cast %174 : vector<16xf32> to vector<16x1xf32>
    %cst_85 = arith.constant 3.200000e+01 : f32
    %176 = vector.broadcast %cst_85 : f32 to vector<16x1xf32>
    %177 = arith.divf %175, %176 : vector<16x1xf32>
    %178 = vector.broadcast %177 : vector<16x1xf32> to vector<16x32xf32>
    %179 = arith.subf %171, %178 : vector<16x32xf32>
    %180 = arith.mulf %179, %179 : vector<16x32xf32>
    %cst_86 = arith.constant dense<0.000000e+00> : vector<16xf32>
    %181 = vector.multi_reduction <add>, %180, %cst_86 [1] : vector<16x32xf32> to vector<16xf32>
    %182 = vector.shape_cast %181 : vector<16xf32> to vector<16x1xf32>
    %cst_87 = arith.constant 3.200000e+01 : f32
    %183 = vector.broadcast %cst_87 : f32 to vector<16x1xf32>
    %184 = arith.divf %182, %183 : vector<16x1xf32>
    %185 = vector.broadcast %177 : vector<16x1xf32> to vector<16x32xf32>
    %186 = arith.subf %171, %185 : vector<16x32xf32>
    %cst_88 = arith.constant 9.99999974E-6 : f32
    %187 = vector.broadcast %cst_88 : f32 to vector<16x1xf32>
    %188 = arith.addf %184, %187 : vector<16x1xf32>
    %189 = math.rsqrt %188 : vector<16x1xf32>
    %190 = vector.broadcast %189 : vector<16x1xf32> to vector<16x32xf32>
    %191 = arith.mulf %186, %190 : vector<16x32xf32>
    %192 = vector.broadcast %172 : vector<1x32xf32> to vector<16x32xf32>
    %193 = arith.mulf %191, %192 : vector<16x32xf32>
    %194 = vector.broadcast %173 : vector<1x32xf32> to vector<16x32xf32>
    %195 = arith.addf %193, %194 : vector<16x32xf32>
    %c0_89 = arith.constant 0 : index
    %c0_90 = arith.constant 0 : index
    %196 = vector.load %arg4[%c0_89, %c0_90] : memref<16x32xf32, #tpu.memory_space<vmem>>, vector<16x32xf32>
    %197 = arith.addf %195, %196 : vector<16x32xf32>
    %c0_91 = arith.constant 0 : index
    %c0_92 = arith.constant 0 : index
    %198 = vector.load %arg24[%c0_91, %c0_92] : memref<32x96xf32, #tpu.memory_space<vmem>>, vector<32x32xf32>
    %cst_93 = arith.constant dense<0.000000e+00> : vector<16x32xf32>
    %199 = tpu.matmul %197, %198, %cst_93 {dimension_numbers = #tpu.dot_dimension_numbers<[1], [0], [0], [1], [0, 0, 1, 1], [], []>} : vector<16x32xf32>, vector<32x32xf32>, vector<16x32xf32> -> vector<16x32xf32>
    %c0_94 = arith.constant 0 : index
    %c0_95 = arith.constant 0 : index
    %200 = vector.load %arg25[%c0_94, %c0_95] : memref<1x96xf32, #tpu.memory_space<vmem>>, vector<1x32xf32>
    %201 = vector.broadcast %200 : vector<1x32xf32> to vector<16x32xf32>
    %202 = arith.addf %199, %201 : vector<16x32xf32>
    %c0_96 = arith.constant 0 : index
    %c32 = arith.constant 32 : index
    %203 = vector.load %arg24[%c0_96, %c32] : memref<32x96xf32, #tpu.memory_space<vmem>>, vector<32x64xf32>
    %cst_97 = arith.constant dense<0.000000e+00> : vector<16x64xf32>
    %204 = tpu.matmul %195, %203, %cst_97 {dimension_numbers = #tpu.dot_dimension_numbers<[1], [0], [0], [1], [0, 0, 1, 1], [], []>} : vector<16x32xf32>, vector<32x64xf32>, vector<16x64xf32> -> vector<16x64xf32>
    %c0_98 = arith.constant 0 : index
    %c32_99 = arith.constant 32 : index
    %205 = vector.load %arg25[%c0_98, %c32_99] : memref<1x96xf32, #tpu.memory_space<vmem>>, vector<1x64xf32>
    %206 = vector.broadcast %205 : vector<1x64xf32> to vector<16x64xf32>
    %207 = arith.addf %204, %206 : vector<16x64xf32>
    %208 = vector.extract_strided_slice %207 {offsets = [0, 0], sizes = [16, 32], strides = [1, 1]} : vector<16x64xf32> to vector<16x32xf32>
    %209 = vector.extract_strided_slice %207 {offsets = [0, 32], sizes = [16, 32], strides = [1, 1]} : vector<16x64xf32> to vector<16x32xf32>
    %210 = vector.shape_cast %202 : vector<16x32xf32> to vector<2x8x32xf32>
    %211 = vector.shape_cast %208 : vector<16x32xf32> to vector<2x8x32xf32>
    %212 = vector.shape_cast %209 : vector<16x32xf32> to vector<2x8x32xf32>
    %213 = vector.extract_strided_slice %210 {offsets = [0, 0, 0], sizes = [2, 8, 8], strides = [1, 1, 1]} : vector<2x8x32xf32> to vector<2x8x8xf32>
    %214 = vector.extract_strided_slice %211 {offsets = [0, 0, 0], sizes = [2, 8, 8], strides = [1, 1, 1]} : vector<2x8x32xf32> to vector<2x8x8xf32>
    "tpu.trace_start"() <{level = 10 : i32, message = "bqe,bke->bqk"}> : () -> ()
    %cst_100 = arith.constant dense<0.000000e+00> : vector<2x8x8xf32>
    %215 = tpu.matmul %213, %214, %cst_100 {dimension_numbers = #tpu.dot_dimension_numbers<[2], [2], [1], [1], [0, 0, 0, 1, 1, 1], [0], [0]>} : vector<2x8x8xf32>, vector<2x8x8xf32>, vector<2x8x8xf32> -> vector<2x8x8xf32>
    "tpu.trace_stop"() : () -> ()
    %cst_101 = arith.constant 0.353553385 : f32
    %216 = vector.broadcast %cst_101 : f32 to vector<2x8x8xf32>
    %217 = arith.mulf %215, %216 : vector<2x8x8xf32>
    %218 = arith.addf %217, %43 : vector<2x8x8xf32>
    %cst_102 = arith.constant dense<0xFF800000> : vector<2x8xf32>
    %219 = vector.multi_reduction <maximumf>, %218, %cst_102 [2] : vector<2x8x8xf32> to vector<2x8xf32>
    %220 = vector.shape_cast %219 : vector<2x8xf32> to vector<2x8x1xf32>
    %221 = vector.broadcast %220 : vector<2x8x1xf32> to vector<2x8x8xf32>
    %222 = arith.subf %218, %221 : vector<2x8x8xf32>
    %223 = math.exp %222 : vector<2x8x8xf32>
    %cst_103 = arith.constant dense<0.000000e+00> : vector<2x8xf32>
    %224 = vector.multi_reduction <add>, %223, %cst_103 [2] : vector<2x8x8xf32> to vector<2x8xf32>
    %225 = vector.shape_cast %224 : vector<2x8xf32> to vector<2x8x1xf32>
    %226 = tpu.reciprocal %225 {approx = true} : vector<2x8x1xf32> -> vector<2x8x1xf32>
    %227 = vector.broadcast %226 : vector<2x8x1xf32> to vector<2x8x8xf32>
    %228 = arith.mulf %223, %227 : vector<2x8x8xf32>
    %229 = vector.extract_strided_slice %212 {offsets = [0, 0, 0], sizes = [2, 8, 8], strides = [1, 1, 1]} : vector<2x8x32xf32> to vector<2x8x8xf32>
    "tpu.trace_start"() <{level = 10 : i32, message = "bqk,bke->bqe"}> : () -> ()
    %cst_104 = arith.constant dense<0.000000e+00> : vector<2x8x8xf32>
    %230 = tpu.matmul %228, %229, %cst_104 {dimension_numbers = #tpu.dot_dimension_numbers<[2], [1], [1], [2], [0, 0, 0, 1, 1, 2], [0], [0]>} : vector<2x8x8xf32>, vector<2x8x8xf32>, vector<2x8x8xf32> -> vector<2x8x8xf32>
    "tpu.trace_stop"() : () -> ()
    %231 = vector.extract_strided_slice %210 {offsets = [0, 0, 8], sizes = [2, 8, 8], strides = [1, 1, 1]} : vector<2x8x32xf32> to vector<2x8x8xf32>
    %232 = vector.extract_strided_slice %211 {offsets = [0, 0, 8], sizes = [2, 8, 8], strides = [1, 1, 1]} : vector<2x8x32xf32> to vector<2x8x8xf32>
    "tpu.trace_start"() <{level = 10 : i32, message = "bqe,bke->bqk"}> : () -> ()
    %cst_105 = arith.constant dense<0.000000e+00> : vector<2x8x8xf32>
    %233 = tpu.matmul %231, %232, %cst_105 {dimension_numbers = #tpu.dot_dimension_numbers<[2], [2], [1], [1], [0, 0, 0, 1, 1, 1], [0], [0]>} : vector<2x8x8xf32>, vector<2x8x8xf32>, vector<2x8x8xf32> -> vector<2x8x8xf32>
    "tpu.trace_stop"() : () -> ()
    %cst_106 = arith.constant 0.353553385 : f32
    %234 = vector.broadcast %cst_106 : f32 to vector<2x8x8xf32>
    %235 = arith.mulf %233, %234 : vector<2x8x8xf32>
    %236 = arith.addf %235, %43 : vector<2x8x8xf32>
    %cst_107 = arith.constant dense<0xFF800000> : vector<2x8xf32>
    %237 = vector.multi_reduction <maximumf>, %236, %cst_107 [2] : vector<2x8x8xf32> to vector<2x8xf32>
    %238 = vector.shape_cast %237 : vector<2x8xf32> to vector<2x8x1xf32>
    %239 = vector.broadcast %238 : vector<2x8x1xf32> to vector<2x8x8xf32>
    %240 = arith.subf %236, %239 : vector<2x8x8xf32>
    %241 = math.exp %240 : vector<2x8x8xf32>
    %cst_108 = arith.constant dense<0.000000e+00> : vector<2x8xf32>
    %242 = vector.multi_reduction <add>, %241, %cst_108 [2] : vector<2x8x8xf32> to vector<2x8xf32>
    %243 = vector.shape_cast %242 : vector<2x8xf32> to vector<2x8x1xf32>
    %244 = tpu.reciprocal %243 {approx = true} : vector<2x8x1xf32> -> vector<2x8x1xf32>
    %245 = vector.broadcast %244 : vector<2x8x1xf32> to vector<2x8x8xf32>
    %246 = arith.mulf %241, %245 : vector<2x8x8xf32>
    %247 = vector.extract_strided_slice %212 {offsets = [0, 0, 8], sizes = [2, 8, 8], strides = [1, 1, 1]} : vector<2x8x32xf32> to vector<2x8x8xf32>
    "tpu.trace_start"() <{level = 10 : i32, message = "bqk,bke->bqe"}> : () -> ()
    %cst_109 = arith.constant dense<0.000000e+00> : vector<2x8x8xf32>
    %248 = tpu.matmul %246, %247, %cst_109 {dimension_numbers = #tpu.dot_dimension_numbers<[2], [1], [1], [2], [0, 0, 0, 1, 1, 2], [0], [0]>} : vector<2x8x8xf32>, vector<2x8x8xf32>, vector<2x8x8xf32> -> vector<2x8x8xf32>
    "tpu.trace_stop"() : () -> ()
    %249 = vector.extract_strided_slice %210 {offsets = [0, 0, 16], sizes = [2, 8, 8], strides = [1, 1, 1]} : vector<2x8x32xf32> to vector<2x8x8xf32>
    %250 = vector.extract_strided_slice %211 {offsets = [0, 0, 16], sizes = [2, 8, 8], strides = [1, 1, 1]} : vector<2x8x32xf32> to vector<2x8x8xf32>
    "tpu.trace_start"() <{level = 10 : i32, message = "bqe,bke->bqk"}> : () -> ()
    %cst_110 = arith.constant dense<0.000000e+00> : vector<2x8x8xf32>
    %251 = tpu.matmul %249, %250, %cst_110 {dimension_numbers = #tpu.dot_dimension_numbers<[2], [2], [1], [1], [0, 0, 0, 1, 1, 1], [0], [0]>} : vector<2x8x8xf32>, vector<2x8x8xf32>, vector<2x8x8xf32> -> vector<2x8x8xf32>
    "tpu.trace_stop"() : () -> ()
    %cst_111 = arith.constant 0.353553385 : f32
    %252 = vector.broadcast %cst_111 : f32 to vector<2x8x8xf32>
    %253 = arith.mulf %251, %252 : vector<2x8x8xf32>
    %254 = arith.addf %253, %43 : vector<2x8x8xf32>
    %cst_112 = arith.constant dense<0xFF800000> : vector<2x8xf32>
    %255 = vector.multi_reduction <maximumf>, %254, %cst_112 [2] : vector<2x8x8xf32> to vector<2x8xf32>
    %256 = vector.shape_cast %255 : vector<2x8xf32> to vector<2x8x1xf32>
    %257 = vector.broadcast %256 : vector<2x8x1xf32> to vector<2x8x8xf32>
    %258 = arith.subf %254, %257 : vector<2x8x8xf32>
    %259 = math.exp %258 : vector<2x8x8xf32>
    %cst_113 = arith.constant dense<0.000000e+00> : vector<2x8xf32>
    %260 = vector.multi_reduction <add>, %259, %cst_113 [2] : vector<2x8x8xf32> to vector<2x8xf32>
    %261 = vector.shape_cast %260 : vector<2x8xf32> to vector<2x8x1xf32>
    %262 = tpu.reciprocal %261 {approx = true} : vector<2x8x1xf32> -> vector<2x8x1xf32>
    %263 = vector.broadcast %262 : vector<2x8x1xf32> to vector<2x8x8xf32>
    %264 = arith.mulf %259, %263 : vector<2x8x8xf32>
    %265 = vector.extract_strided_slice %212 {offsets = [0, 0, 16], sizes = [2, 8, 8], strides = [1, 1, 1]} : vector<2x8x32xf32> to vector<2x8x8xf32>
    "tpu.trace_start"() <{level = 10 : i32, message = "bqk,bke->bqe"}> : () -> ()
    %cst_114 = arith.constant dense<0.000000e+00> : vector<2x8x8xf32>
    %266 = tpu.matmul %264, %265, %cst_114 {dimension_numbers = #tpu.dot_dimension_numbers<[2], [1], [1], [2], [0, 0, 0, 1, 1, 2], [0], [0]>} : vector<2x8x8xf32>, vector<2x8x8xf32>, vector<2x8x8xf32> -> vector<2x8x8xf32>
    "tpu.trace_stop"() : () -> ()
    %267 = vector.extract_strided_slice %210 {offsets = [0, 0, 24], sizes = [2, 8, 8], strides = [1, 1, 1]} : vector<2x8x32xf32> to vector<2x8x8xf32>
    %268 = vector.extract_strided_slice %211 {offsets = [0, 0, 24], sizes = [2, 8, 8], strides = [1, 1, 1]} : vector<2x8x32xf32> to vector<2x8x8xf32>
    "tpu.trace_start"() <{level = 10 : i32, message = "bqe,bke->bqk"}> : () -> ()
    %cst_115 = arith.constant dense<0.000000e+00> : vector<2x8x8xf32>
    %269 = tpu.matmul %267, %268, %cst_115 {dimension_numbers = #tpu.dot_dimension_numbers<[2], [2], [1], [1], [0, 0, 0, 1, 1, 1], [0], [0]>} : vector<2x8x8xf32>, vector<2x8x8xf32>, vector<2x8x8xf32> -> vector<2x8x8xf32>
    "tpu.trace_stop"() : () -> ()
    %cst_116 = arith.constant 0.353553385 : f32
    %270 = vector.broadcast %cst_116 : f32 to vector<2x8x8xf32>
    %271 = arith.mulf %269, %270 : vector<2x8x8xf32>
    %272 = arith.addf %271, %43 : vector<2x8x8xf32>
    %cst_117 = arith.constant dense<0xFF800000> : vector<2x8xf32>
    %273 = vector.multi_reduction <maximumf>, %272, %cst_117 [2] : vector<2x8x8xf32> to vector<2x8xf32>
    %274 = vector.shape_cast %273 : vector<2x8xf32> to vector<2x8x1xf32>
    %275 = vector.broadcast %274 : vector<2x8x1xf32> to vector<2x8x8xf32>
    %276 = arith.subf %272, %275 : vector<2x8x8xf32>
    %277 = math.exp %276 : vector<2x8x8xf32>
    %cst_118 = arith.constant dense<0.000000e+00> : vector<2x8xf32>
    %278 = vector.multi_reduction <add>, %277, %cst_118 [2] : vector<2x8x8xf32> to vector<2x8xf32>
    %279 = vector.shape_cast %278 : vector<2x8xf32> to vector<2x8x1xf32>
    %280 = tpu.reciprocal %279 {approx = true} : vector<2x8x1xf32> -> vector<2x8x1xf32>
    %281 = vector.broadcast %280 : vector<2x8x1xf32> to vector<2x8x8xf32>
    %282 = arith.mulf %277, %281 : vector<2x8x8xf32>
    %283 = vector.extract_strided_slice %212 {offsets = [0, 0, 24], sizes = [2, 8, 8], strides = [1, 1, 1]} : vector<2x8x32xf32> to vector<2x8x8xf32>
    "tpu.trace_start"() <{level = 10 : i32, message = "bqk,bke->bqe"}> : () -> ()
    %cst_119 = arith.constant dense<0.000000e+00> : vector<2x8x8xf32>
    %284 = tpu.matmul %282, %283, %cst_119 {dimension_numbers = #tpu.dot_dimension_numbers<[2], [1], [1], [2], [0, 0, 0, 1, 1, 2], [0], [0]>} : vector<2x8x8xf32>, vector<2x8x8xf32>, vector<2x8x8xf32> -> vector<2x8x8xf32>
    "tpu.trace_stop"() : () -> ()
    %285 = tpu.concatenate %230, %248, %266, %284 in 2 : vector<2x8x8xf32>, vector<2x8x8xf32>, vector<2x8x8xf32>, vector<2x8x8xf32> -> vector<2x8x32xf32>
    %286 = vector.shape_cast %285 : vector<2x8x32xf32> to vector<16x32xf32>
    %c0_120 = arith.constant 0 : index
    %c0_121 = arith.constant 0 : index
    %287 = vector.load %arg26[%c0_120, %c0_121] : memref<32x32xf32, #tpu.memory_space<vmem>>, vector<32x32xf32>
    %cst_122 = arith.constant dense<0.000000e+00> : vector<16x32xf32>
    %288 = tpu.matmul %286, %287, %cst_122 {dimension_numbers = #tpu.dot_dimension_numbers<[1], [0], [0], [1], [0, 0, 1, 1], [], []>} : vector<16x32xf32>, vector<32x32xf32>, vector<16x32xf32> -> vector<16x32xf32>
    %c0_123 = arith.constant 0 : index
    %c0_124 = arith.constant 0 : index
    %289 = vector.load %arg27[%c0_123, %c0_124] : memref<1x32xf32, #tpu.memory_space<vmem>>, vector<1x32xf32>
    %290 = vector.broadcast %289 : vector<1x32xf32> to vector<16x32xf32>
    %291 = arith.addf %288, %290 : vector<16x32xf32>
    %292 = arith.addf %197, %291 : vector<16x32xf32>
    %c0_125 = arith.constant 0 : index
    %c0_126 = arith.constant 0 : index
    %293 = vector.load %arg28[%c0_125, %c0_126] : memref<1x32xf32, #tpu.memory_space<vmem>>, vector<1x32xf32>
    %c0_127 = arith.constant 0 : index
    %c0_128 = arith.constant 0 : index
    %294 = vector.load %arg29[%c0_127, %c0_128] : memref<1x32xf32, #tpu.memory_space<vmem>>, vector<1x32xf32>
    %cst_129 = arith.constant dense<0.000000e+00> : vector<16xf32>
    %295 = vector.multi_reduction <add>, %292, %cst_129 [1] : vector<16x32xf32> to vector<16xf32>
    %296 = vector.shape_cast %295 : vector<16xf32> to vector<16x1xf32>
    %cst_130 = arith.constant 3.200000e+01 : f32
    %297 = vector.broadcast %cst_130 : f32 to vector<16x1xf32>
    %298 = arith.divf %296, %297 : vector<16x1xf32>
    %299 = vector.broadcast %298 : vector<16x1xf32> to vector<16x32xf32>
    %300 = arith.subf %292, %299 : vector<16x32xf32>
    %301 = arith.mulf %300, %300 : vector<16x32xf32>
    %cst_131 = arith.constant dense<0.000000e+00> : vector<16xf32>
    %302 = vector.multi_reduction <add>, %301, %cst_131 [1] : vector<16x32xf32> to vector<16xf32>
    %303 = vector.shape_cast %302 : vector<16xf32> to vector<16x1xf32>
    %cst_132 = arith.constant 3.200000e+01 : f32
    %304 = vector.broadcast %cst_132 : f32 to vector<16x1xf32>
    %305 = arith.divf %303, %304 : vector<16x1xf32>
    %306 = vector.broadcast %298 : vector<16x1xf32> to vector<16x32xf32>
    %307 = arith.subf %292, %306 : vector<16x32xf32>
    %cst_133 = arith.constant 9.99999974E-6 : f32
    %308 = vector.broadcast %cst_133 : f32 to vector<16x1xf32>
    %309 = arith.addf %305, %308 : vector<16x1xf32>
    %310 = math.rsqrt %309 : vector<16x1xf32>
    %311 = vector.broadcast %310 : vector<16x1xf32> to vector<16x32xf32>
    %312 = arith.mulf %307, %311 : vector<16x32xf32>
    %313 = vector.broadcast %293 : vector<1x32xf32> to vector<16x32xf32>
    %314 = arith.mulf %312, %313 : vector<16x32xf32>
    %315 = vector.broadcast %294 : vector<1x32xf32> to vector<16x32xf32>
    %316 = arith.addf %314, %315 : vector<16x32xf32>
    %c0_134 = arith.constant 0 : index
    %c0_135 = arith.constant 0 : index
    %317 = vector.load %arg32[%c0_134, %c0_135] : memref<32x64xf32, #tpu.memory_space<vmem>>, vector<32x64xf32>
    %cst_136 = arith.constant dense<0.000000e+00> : vector<16x64xf32>
    %318 = tpu.matmul %316, %317, %cst_136 {dimension_numbers = #tpu.dot_dimension_numbers<[1], [0], [0], [1], [0, 0, 1, 1], [], []>} : vector<16x32xf32>, vector<32x64xf32>, vector<16x64xf32> -> vector<16x64xf32>
    %c0_137 = arith.constant 0 : index
    %c0_138 = arith.constant 0 : index
    %319 = vector.load %arg33[%c0_137, %c0_138] : memref<1x64xf32, #tpu.memory_space<vmem>>, vector<1x64xf32>
    %320 = vector.broadcast %319 : vector<1x64xf32> to vector<16x64xf32>
    %321 = arith.addf %318, %320 : vector<16x64xf32>
    %cst_139 = arith.constant 0.000000e+00 : f32
    %322 = vector.broadcast %cst_139 : f32 to vector<16x64xf32>
    %323 = arith.maximumf %321, %322 : vector<16x64xf32>
    %c0_140 = arith.constant 0 : index
    %c0_141 = arith.constant 0 : index
    %324 = vector.load %arg34[%c0_140, %c0_141] : memref<64x32xf32, #tpu.memory_space<vmem>>, vector<64x32xf32>
    %cst_142 = arith.constant dense<0.000000e+00> : vector<16x32xf32>
    %325 = tpu.matmul %323, %324, %cst_142 {dimension_numbers = #tpu.dot_dimension_numbers<[1], [0], [0], [1], [0, 0, 1, 1], [], []>} : vector<16x64xf32>, vector<64x32xf32>, vector<16x32xf32> -> vector<16x32xf32>
    %c0_143 = arith.constant 0 : index
    %c0_144 = arith.constant 0 : index
    %326 = vector.load %arg35[%c0_143, %c0_144] : memref<1x32xf32, #tpu.memory_space<vmem>>, vector<1x32xf32>
    %327 = vector.broadcast %326 : vector<1x32xf32> to vector<16x32xf32>
    %328 = arith.addf %325, %327 : vector<16x32xf32>
    %329 = arith.addf %316, %328 : vector<16x32xf32>
    %c0_145 = arith.constant 0 : index
    %c0_146 = arith.constant 0 : index
    %330 = vector.load %arg30[%c0_145, %c0_146] : memref<1x32xf32, #tpu.memory_space<vmem>>, vector<1x32xf32>
    %c0_147 = arith.constant 0 : index
    %c0_148 = arith.constant 0 : index
    %331 = vector.load %arg31[%c0_147, %c0_148] : memref<1x32xf32, #tpu.memory_space<vmem>>, vector<1x32xf32>
    %cst_149 = arith.constant dense<0.000000e+00> : vector<16xf32>
    %332 = vector.multi_reduction <add>, %329, %cst_149 [1] : vector<16x32xf32> to vector<16xf32>
    %333 = vector.shape_cast %332 : vector<16xf32> to vector<16x1xf32>
    %cst_150 = arith.constant 3.200000e+01 : f32
    %334 = vector.broadcast %cst_150 : f32 to vector<16x1xf32>
    %335 = arith.divf %333, %334 : vector<16x1xf32>
    %336 = vector.broadcast %335 : vector<16x1xf32> to vector<16x32xf32>
    %337 = arith.subf %329, %336 : vector<16x32xf32>
    %338 = arith.mulf %337, %337 : vector<16x32xf32>
    %cst_151 = arith.constant dense<0.000000e+00> : vector<16xf32>
    %339 = vector.multi_reduction <add>, %338, %cst_151 [1] : vector<16x32xf32> to vector<16xf32>
    %340 = vector.shape_cast %339 : vector<16xf32> to vector<16x1xf32>
    %cst_152 = arith.constant 3.200000e+01 : f32
    %341 = vector.broadcast %cst_152 : f32 to vector<16x1xf32>
    %342 = arith.divf %340, %341 : vector<16x1xf32>
    %343 = vector.broadcast %335 : vector<16x1xf32> to vector<16x32xf32>
    %344 = arith.subf %329, %343 : vector<16x32xf32>
    %cst_153 = arith.constant 9.99999974E-6 : f32
    %345 = vector.broadcast %cst_153 : f32 to vector<16x1xf32>
    %346 = arith.addf %342, %345 : vector<16x1xf32>
    %347 = math.rsqrt %346 : vector<16x1xf32>
    %348 = vector.broadcast %347 : vector<16x1xf32> to vector<16x32xf32>
    %349 = arith.mulf %344, %348 : vector<16x32xf32>
    %350 = vector.broadcast %330 : vector<1x32xf32> to vector<16x32xf32>
    %351 = arith.mulf %349, %350 : vector<16x32xf32>
    %352 = vector.broadcast %331 : vector<1x32xf32> to vector<16x32xf32>
    %353 = arith.addf %351, %352 : vector<16x32xf32>
    %c0_154 = arith.constant 0 : index
    %c0_155 = arith.constant 0 : index
    %354 = vector.load %arg36[%c0_154, %c0_155] : memref<32x128xf32, #tpu.memory_space<vmem>>, vector<32x128xf32>
    %cst_156 = arith.constant dense<0.000000e+00> : vector<16x128xf32>
    %355 = tpu.matmul %353, %354, %cst_156 {dimension_numbers = #tpu.dot_dimension_numbers<[1], [0], [0], [1], [0, 0, 1, 1], [], []>} : vector<16x32xf32>, vector<32x128xf32>, vector<16x128xf32> -> vector<16x128xf32>
    %c0_157 = arith.constant 0 : index
    %c0_158 = arith.constant 0 : index
    %356 = vector.load %arg37[%c0_157, %c0_158] : memref<1x128xf32, #tpu.memory_space<vmem>>, vector<1x128xf32>
    %357 = vector.broadcast %356 : vector<1x128xf32> to vector<16x128xf32>
    %358 = arith.addf %355, %357 : vector<16x128xf32>
    %359 = tpu.iota {dimensions = array<i32: 1>} : vector<16x128xi32>
    %cst_159 = arith.constant 5.000000e-01 : f32
    %360 = vector.broadcast %cst_159 : f32 to vector<16x128xf32>
    %361 = arith.mulf %360, %358 : vector<16x128xf32>
    %362 = math.tanh %361 : vector<16x128xf32>
    %cst_160 = arith.constant 1.000000e+00 : f32
    %363 = vector.broadcast %cst_160 : f32 to vector<16x128xf32>
    %364 = arith.addf %362, %363 : vector<16x128xf32>
    %cst_161 = arith.constant 5.000000e-01 : f32
    %365 = vector.broadcast %cst_161 : f32 to vector<16x128xf32>
    %366 = arith.mulf %365, %364 : vector<16x128xf32>
    %c3_i32 = arith.constant 3 : i32
    %367 = vector.broadcast %c3_i32 : i32 to vector<16x128xi32>
    %368 = arith.cmpi eq, %359, %367 : vector<16x128xi32>
    %369 = arith.select %368, %366, %358 : vector<16x128xi1>, vector<16x128xf32>
    %c0_162 = arith.constant 0 : index
    %c0_163 = arith.constant 0 : index
    %370 = vector.load %arg38[%c0_162, %c0_163] : memref<16x128xf32, #tpu.memory_space<vmem>>, vector<16x128xf32>
    tpu.vector_store %arg38[%c0_162, %c0_163], %369 {strides = array<i32>} : memref<16x128xf32, #tpu.memory_space<vmem>>, vector<16x128xf32>,
    return
  }
}

</mosaic_0001>

<llo_original>
// kernel: transformer_forward.1
$region0: #{transformer_forward.1}
  #allocation0 [shape = 'u32[]', space=smem, size = 0x4, offset = 0x4, fixed_abs, tag = 'smem constant byte address 0x4 - core index']
  #allocation1 [shape = 'u32[144,128]{1,0:T(1,128)}', space=vmem, size = 0x12000, scoped, tag = 'internal scratch']
  %s0 = inlined_call_operand.smem [shape: u32[39], index: -1, kind: input, shape index: {}]
  %s1 = sld [smem:[%s0]]
  %s2 = scalar_lea.smem %s0, 1
  %s3 = sld [smem:[%s2]]
  %s4 = scalar_lea.smem %s0, 2
  %s5 = sld [smem:[%s4]]
  %s6 = scalar_lea.smem %s0, 3
  %s7 = sld [smem:[%s6]]
  %s8 = scalar_lea.smem %s0, 4
  %s9 = sld [smem:[%s8]]
  %s10 = scalar_lea.smem %s0, 5
  %s11 = sld [smem:[%s10]]
  %s12 = scalar_lea.smem %s0, 6
  %s13 = sld [smem:[%s12]]
  %s14 = scalar_lea.smem %s0, 7
  %s15 = sld [smem:[%s14]]
  %s16 = scalar_lea.smem %s0, 8
  %s17 = sld [smem:[%s16]]
  %s18 = scalar_lea.smem %s0, 9
  %s19 = sld [smem:[%s18]]
  %s20 = scalar_lea.smem %s0, 10
  %s21 = sld [smem:[%s20]]
  %s22 = scalar_lea.smem %s0, 11
  %s23 = sld [smem:[%s22]]
  %s24 = scalar_lea.smem %s0, 12
  %s25 = sld [smem:[%s24]]
  %s26 = scalar_lea.smem %s0, 13
  %s27 = sld [smem:[%s26]]
  %s28 = scalar_lea.smem %s0, 14
  %s29 = sld [smem:[%s28]]
  %s30 = scalar_lea.smem %s0, 15
  %s31 = sld [smem:[%s30]]
  %s32 = scalar_lea.smem %s0, 16
  %s33 = sld [smem:[%s32]]
  %s34 = scalar_lea.smem %s0, 17
  %s35 = sld [smem:[%s34]]
  %s36 = scalar_lea.smem %s0, 18
  %s37 = sld [smem:[%s36]]
  %s38 = scalar_lea.smem %s0, 19
  %s39 = sld [smem:[%s38]]
  %s40 = scalar_lea.smem %s0, 20
  %s41 = sld [smem:[%s40]]
  %s42 = scalar_lea.smem %s0, 21
  %s43 = sld [smem:[%s42]]
  %s44 = scalar_lea.smem %s0, 22
  %s45 = sld [smem:[%s44]]
  %s46 = scalar_lea.smem %s0, 23
  %s47 = sld [smem:[%s46]]
  %s48 = scalar_lea.smem %s0, 24
  %s49 = sld [smem:[%s48]]
  %s50 = scalar_lea.smem %s0, 25
  %s51 = sld [smem:[%s50]]
  %s52 = scalar_lea.smem %s0, 26
  %s53 = sld [smem:[%s52]]
  %s54 = scalar_lea.smem %s0, 27
  %s55 = sld [smem:[%s54]]
  %s56 = scalar_lea.smem %s0, 28
  %s57 = sld [smem:[%s56]]
  %s58 = scalar_lea.smem %s0, 29
  %s59 = sld [smem:[%s58]]
  %s60 = scalar_lea.smem %s0, 30
  %s61 = sld [smem:[%s60]]
  %s62 = scalar_lea.smem %s0, 31
  %s63 = sld [smem:[%s62]]
  %s64 = scalar_lea.smem %s0, 32
  %s65 = sld [smem:[%s64]]
  %s66 = scalar_lea.smem %s0, 33
  %s67 = sld [smem:[%s66]]
  %s68 = scalar_lea.smem %s0, 34
  %s69 = sld [smem:[%s68]]
  %s70 = scalar_lea.smem %s0, 35
  %s71 = sld [smem:[%s70]]
  %s72 = scalar_lea.smem %s0, 36
  %s73 = sld [smem:[%s72]]
  %s74 = scalar_lea.smem %s0, 37
  %s75 = sld [smem:[%s74]]
  %s76 = scalar_lea.smem %s0, 38
  %s77 = sld [smem:[%s76]]
  %s78 = sld [smem:[#allocation0]]
  $region162: #{transformer_forward.1} parent=0
    _
  %s80 = ssub.s32 1, %s78
  %s81 = scalar_select 0, %s80, %s78
  // Predicated region
  $region2: #{transformer_forward.1} parent=0 // pred_check
    _
  $region3: #{transformer_forward.1} parent=0 // pred_check_branch
    %83 = sbr.rel (0) target = $region5
  $region4: #{transformer_forward.1} parent=0 // pred_region
    _
  $region5: #{transformer_forward.1} parent=0 // pred_fallthru
    _
  // Predicated region
  $region6: #{transformer_forward.1} parent=0 // pred_check
    _
  $region7: #{transformer_forward.1} parent=0 // pred_check_branch
    %85 = sbr.rel (0) target = $region9
  $region8: #{transformer_forward.1} parent=0 // pred_region
    _
  $region9: #{transformer_forward.1} parent=0 // pred_fallthru
    _
  // Predicated region
  $region10: #{transformer_forward.1} parent=0 // pred_check
    _
  $region11: #{transformer_forward.1} parent=0 // pred_check_branch
    %87 = sbr.rel (0) target = $region13
  $region12: #{transformer_forward.1} parent=0 // pred_region
    _
  $region13: #{transformer_forward.1} parent=0 // pred_fallthru
    _
  // Predicated region
  $region14: #{transformer_forward.1} parent=0 // pred_check
    _
  $region15: #{transformer_forward.1} parent=0 // pred_check_branch
    %89 = sbr.rel (0) target = $region17
  $region16: #{transformer_forward.1} parent=0 // pred_region
    _
  $region17: #{transformer_forward.1} parent=0 // pred_fallthru
    _
  // Predicated region
  $region18: #{transformer_forward.1} parent=0 // pred_check
    _
  $region19: #{transformer_forward.1} parent=0 // pred_check_branch
    %91 = sbr.rel (0) target = $region21
  $region20: #{transformer_forward.1} parent=0 // pred_region
    _
  $region21: #{transformer_forward.1} parent=0 // pred_fallthru
    _
  // Predicated region
  $region22: #{transformer_forward.1} parent=0 // pred_check
    _
  $region23: #{transformer_forward.1} parent=0 // pred_check_branch
    %93 = sbr.rel (0) target = $region25
  $region24: #{transformer_forward.1} parent=0 // pred_region
    _
  $region25: #{transformer_forward.1} parent=0 // pred_fallthru
    _
  // Predicated region
  $region26: #{transformer_forward.1} parent=0 // pred_check
    _
  $region27: #{transformer_forward.1} parent=0 // pred_check_branch
    %95 = sbr.rel (0) target = $region29
  $region28: #{transformer_forward.1} parent=0 // pred_region
    _
  $region29: #{transformer_forward.1} parent=0 // pred_fallthru
    _
  // Predicated region
  $region30: #{transformer_forward.1} parent=0 // pred_check
    _
  $region31: #{transformer_forward.1} parent=0 // pred_check_branch
    %97 = sbr.rel (0) target = $region33
  $region32: #{transformer_forward.1} parent=0 // pred_region
    _
  $region33: #{transformer_forward.1} parent=0 // pred_fallthru
    _
  // Predicated region
  $region34: #{transformer_forward.1} parent=0 // pred_check
    _
  $region35: #{transformer_forward.1} parent=0 // pred_check_branch
    %99 = sbr.rel (0) target = $region37
  $region36: #{transformer_forward.1} parent=0 // pred_region
    _
  $region37: #{transformer_forward.1} parent=0 // pred_fallthru
    _
  // Predicated region
  $region38: #{transformer_forward.1} parent=0 // pred_check
    _
  $region39: #{transformer_forward.1} parent=0 // pred_check_branch
    %101 = sbr.rel (0) target = $region41
  $region40: #{transformer_forward.1} parent=0 // pred_region
    _
  $region41: #{transformer_forward.1} parent=0 // pred_fallthru
    _
  // Predicated region
  $region42: #{transformer_forward.1} parent=0 // pred_check
    _
  $region43: #{transformer_forward.1} parent=0 // pred_check_branch
    %103 = sbr.rel (0) target = $region45
  $region44: #{transformer_forward.1} parent=0 // pred_region
    _
  $region45: #{transformer_forward.1} parent=0 // pred_fallthru
    _
  // Predicated region
  $region46: #{transformer_forward.1} parent=0 // pred_check
    _
  $region47: #{transformer_forward.1} parent=0 // pred_check_branch
    %105 = sbr.rel (0) target = $region49
  $region48: #{transformer_forward.1} parent=0 // pred_region
    _
  $region49: #{transformer_forward.1} parent=0 // pred_fallthru
    _
  // Predicated region
  $region50: #{transformer_forward.1} parent=0 // pred_check
    _
  $region51: #{transformer_forward.1} parent=0 // pred_check_branch
    %107 = sbr.rel (0) target = $region53
  $region52: #{transformer_forward.1} parent=0 // pred_region
    _
  $region53: #{transformer_forward.1} parent=0 // pred_fallthru
    _
  // Predicated region
  $region54: #{transformer_forward.1} parent=0 // pred_check
    _
  $region55: #{transformer_forward.1} parent=0 // pred_check_branch
    %109 = sbr.rel (0) target = $region57
  $region56: #{transformer_forward.1} parent=0 // pred_region
    _
  $region57: #{transformer_forward.1} parent=0 // pred_fallthru
    _
  // Predicated region
  $region58: #{transformer_forward.1} parent=0 // pred_check
    _
  $region59: #{transformer_forward.1} parent=0 // pred_check_branch
    %111 = sbr.rel (0) target = $region61
  $region60: #{transformer_forward.1} parent=0 // pred_region
    _
  $region61: #{transformer_forward.1} parent=0 // pred_fallthru
    _
  // Predicated region
  $region62: #{transformer_forward.1} parent=0 // pred_check
    _
  $region63: #{transformer_forward.1} parent=0 // pred_check_branch
    %113 = sbr.rel (0) target = $region65
  $region64: #{transformer_forward.1} parent=0 // pred_region
    _
  $region65: #{transformer_forward.1} parent=0 // pred_fallthru
    _
  // Predicated region
  $region66: #{transformer_forward.1} parent=0 // pred_check
    _
  $region67: #{transformer_forward.1} parent=0 // pred_check_branch
    %115 = sbr.rel (0) target = $region69
  $region68: #{transformer_forward.1} parent=0 // pred_region
    _
  $region69: #{transformer_forward.1} parent=0 // pred_fallthru
    _
  // Predicated region
  $region70: #{transformer_forward.1} parent=0 // pred_check
    _
  $region71: #{transformer_forward.1} parent=0 // pred_check_branch
    %117 = sbr.rel (0) target = $region73
  $region72: #{transformer_forward.1} parent=0 // pred_region
    _
  $region73: #{transformer_forward.1} parent=0 // pred_fallthru
    _
  // Predicated region
  $region74: #{transformer_forward.1} parent=0 // pred_check
    _
  $region75: #{transformer_forward.1} parent=0 // pred_check_branch
    %119 = sbr.rel (0) target = $region77
  $region76: #{transformer_forward.1} parent=0 // pred_region
    _
  $region77: #{transformer_forward.1} parent=0 // pred_fallthru
    _
  // Predicated region
  $region78: #{transformer_forward.1} parent=0 // pred_check
    _
  $region79: #{transformer_forward.1} parent=0 // pred_check_branch
    %121 = sbr.rel (0) target = $region81
  $region80: #{transformer_forward.1} parent=0 // pred_region
    _
  $region81: #{transformer_forward.1} parent=0 // pred_fallthru
    _
  // Predicated region
  $region82: #{transformer_forward.1} parent=0 // pred_check
    _
  $region83: #{transformer_forward.1} parent=0 // pred_check_branch
    %123 = sbr.rel (0) target = $region85
  $region84: #{transformer_forward.1} parent=0 // pred_region
    _
  $region85: #{transformer_forward.1} parent=0 // pred_fallthru
    _
  // Predicated region
  $region86: #{transformer_forward.1} parent=0 // pred_check
    _
  $region87: #{transformer_forward.1} parent=0 // pred_check_branch
    %125 = sbr.rel (0) target = $region89
  $region88: #{transformer_forward.1} parent=0 // pred_region
    _
  $region89: #{transformer_forward.1} parent=0 // pred_fallthru
    _
  // Predicated region
  $region90: #{transformer_forward.1} parent=0 // pred_check
    _
  $region91: #{transformer_forward.1} parent=0 // pred_check_branch
    %127 = sbr.rel (0) target = $region93
  $region92: #{transformer_forward.1} parent=0 // pred_region
    _
  $region93: #{transformer_forward.1} parent=0 // pred_fallthru
    _
  // Predicated region
  $region94: #{transformer_forward.1} parent=0 // pred_check
    _
  $region95: #{transformer_forward.1} parent=0 // pred_check_branch
    %129 = sbr.rel (0) target = $region97
  $region96: #{transformer_forward.1} parent=0 // pred_region
    _
  $region97: #{transformer_forward.1} parent=0 // pred_fallthru
    _
  // Predicated region
  $region98: #{transformer_forward.1} parent=0 // pred_check
    _
  $region99: #{transformer_forward.1} parent=0 // pred_check_branch
    %131 = sbr.rel (0) target = $region101
  $region100: #{transformer_forward.1} parent=0 // pred_region
    _
  $region101: #{transformer_forward.1} parent=0 // pred_fallthru
    _
  // Predicated region
  $region102: #{transformer_forward.1} parent=0 // pred_check
    _
  $region103: #{transformer_forward.1} parent=0 // pred_check_branch
    %133 = sbr.rel (0) target = $region105
  $region104: #{transformer_forward.1} parent=0 // pred_region
    _
  $region105: #{transformer_forward.1} parent=0 // pred_fallthru
    _
  // Predicated region
  $region106: #{transformer_forward.1} parent=0 // pred_check
    _
  $region107: #{transformer_forward.1} parent=0 // pred_check_branch
    %135 = sbr.rel (0) target = $region109
  $region108: #{transformer_forward.1} parent=0 // pred_region
    _
  $region109: #{transformer_forward.1} parent=0 // pred_fallthru
    _
  // Predicated region
  $region110: #{transformer_forward.1} parent=0 // pred_check
    _
  $region111: #{transformer_forward.1} parent=0 // pred_check_branch
    %137 = sbr.rel (0) target = $region113
  $region112: #{transformer_forward.1} parent=0 // pred_region
    _
  $region113: #{transformer_forward.1} parent=0 // pred_fallthru
    _
  // Predicated region
  $region114: #{transformer_forward.1} parent=0 // pred_check
    _
  $region115: #{transformer_forward.1} parent=0 // pred_check_branch
    %139 = sbr.rel (0) target = $region117
  $region116: #{transformer_forward.1} parent=0 // pred_region
    _
  $region117: #{transformer_forward.1} parent=0 // pred_fallthru
    _
  // Predicated region
  $region118: #{transformer_forward.1} parent=0 // pred_check
    _
  $region119: #{transformer_forward.1} parent=0 // pred_check_branch
    %141 = sbr.rel (0) target = $region121
  $region120: #{transformer_forward.1} parent=0 // pred_region
    _
  $region121: #{transformer_forward.1} parent=0 // pred_fallthru
    _
  // Predicated region
  $region122: #{transformer_forward.1} parent=0 // pred_check
    _
  $region123: #{transformer_forward.1} parent=0 // pred_check_branch
    %143 = sbr.rel (0) target = $region125
  $region124: #{transformer_forward.1} parent=0 // pred_region
    _
  $region125: #{transformer_forward.1} parent=0 // pred_fallthru
    _
  // Predicated region
  $region126: #{transformer_forward.1} parent=0 // pred_check
    _
  $region127: #{transformer_forward.1} parent=0 // pred_check_branch
    %145 = sbr.rel (0) target = $region129
  $region128: #{transformer_forward.1} parent=0 // pred_region
    _
  $region129: #{transformer_forward.1} parent=0 // pred_fallthru
    _
  // Predicated region
  $region130: #{transformer_forward.1} parent=0 // pred_check
    _
  $region131: #{transformer_forward.1} parent=0 // pred_check_branch
    %147 = sbr.rel (0) target = $region133
  $region132: #{transformer_forward.1} parent=0 // pred_region
    _
  $region133: #{transformer_forward.1} parent=0 // pred_fallthru
    _
  // Predicated region
  $region134: #{transformer_forward.1} parent=0 // pred_check
    _
  $region135: #{transformer_forward.1} parent=0 // pred_check_branch
    %149 = sbr.rel (0) target = $region137
  $region136: #{transformer_forward.1} parent=0 // pred_region
    _
  $region137: #{transformer_forward.1} parent=0 // pred_fallthru
    _
  // Predicated region
  $region138: #{transformer_forward.1} parent=0 // pred_check
    _
  $region139: #{transformer_forward.1} parent=0 // pred_check_branch
    %151 = sbr.rel (0) target = $region141
  $region140: #{transformer_forward.1} parent=0 // pred_region
    _
  $region141: #{transformer_forward.1} parent=0 // pred_fallthru
    _
  // Predicated region
  $region142: #{transformer_forward.1} parent=0 // pred_check
    _
  $region143: #{transformer_forward.1} parent=0 // pred_check_branch
    %153 = sbr.rel (0) target = $region145
  $region144: #{transformer_forward.1} parent=0 // pred_region
    _
  $region145: #{transformer_forward.1} parent=0 // pred_fallthru
    _
  // Predicated region
  $region146: #{transformer_forward.1} parent=0 // pred_check
    _
  $region147: #{transformer_forward.1} parent=0 // pred_check_branch
    %155 = sbr.rel (0) target = $region149
  $region148: #{transformer_forward.1} parent=0 // pred_region
    _
  $region149: #{transformer_forward.1} parent=0 // pred_fallthru
    _
  // Predicated region
  $region150: #{transformer_forward.1} parent=0 // pred_check
    _
  $region151: #{transformer_forward.1} parent=0 // pred_check_branch
    %157 = sbr.rel (0) target = $region153
  $region152: #{transformer_forward.1} parent=0 // pred_region
    _
  $region153: #{transformer_forward.1} parent=0 // pred_fallthru
    _
  %v158 = vld [vmem:[%s1] sm:$0xff]
  %v159 = vld [vmem:[%s1 + $0x8] sm:$0xff]
  %v160 = vld [vmem:[%s11] sm:$0x7]
  %v161 = vld [vmem:[%s3] sm:$0xff]
  %v162 = vld [vmem:[%s3 + $0x8] sm:$0xff]
  %v163 = vld [vmem:[%s13] sm:$0x3]
  %vm164 = vcmask 15360
  %v166 = vsel %vm164, %v161, 0
  %v169 = vsel %vm164, %v162, 0
  %vm171 = vcmask 1041408
  %v173 = vsel %vm171, %v163, 0
  %175 = vmatprep.subr.mxu0 0.0
  %176 = vmatpush1.msra.mxu0 %v173
  %177 = vmatprep.subr.mxu0 0.0
  %178 = vmatpush1.msra.mxu0 0.0
  %179 = vmatprep.subr.mxu0 0.0
  %180 = vmatpush1.msra.mxu0 0.0
  %181 = vmatprep.subr.mxu0 0.0
  %182 = vmatpush1.msra.mxu0 0.0
  %183 = vmatprep.subr.mxu0 0.0
  %184 = vmatpush1.msra.mxu0 0.0
  %185 = vmatprep.subr.mxu0 0.0
  %186 = vmatpush1.msra.mxu0 0.0
  %187 = vmatprep.subr.mxu0 0.0
  %188 = vmatpush1.msra.mxu0 0.0
  %189 = vmatprep.subr.mxu0 0.0
  %190 = vmatpush1.msra.mxu0 0.0
  %191 = vmatprep.subr.mxu0 0.0
  %192 = vmatpush1.msra.mxu0 0.0
  %193 = vmatprep.subr.mxu0 0.0
  %194 = vmatpush1.msra.mxu0 0.0
  %195 = vmatprep.subr.mxu0 0.0
  %196 = vmatpush1.msra.mxu0 0.0
  %197 = vmatprep.subr.mxu0 0.0
  %198 = vmatpush1.msra.mxu0 0.0
  %199 = vmatprep.subr.mxu0 0.0
  %200 = vmatpush1.msra.mxu0 0.0
  %201 = vmatprep.subr.mxu0 0.0
  %202 = vmatpush1.msra.mxu0 0.0
  %203 = vmatprep.subr.mxu0 0.0
  %204 = vmatpush1.msra.mxu0 0.0
  %205 = vmatprep.subr.mxu0 0.0
  %206 = vmatpush1.msra.mxu0 0.0
  %207 = vmatprep.subr.mxu0 0.0
  %208 = vmatpush1.msra.mxu0 0.0
  %209 = vmatprep.subr.mxu0 0.0
  %210 = vmatpush1.msra.mxu0 0.0
  %211 = vmatprep.subr.mxu0 0.0
  %212 = vmatpush1.msra.mxu0 0.0
  %213 = vmatprep.subr.mxu0 0.0
  %214 = vmatpush1.msra.mxu0 0.0
  %215 = vmatprep.subr.mxu0 0.0
  %216 = vmatpush1.msra.mxu0 0.0
  %217 = vmatprep.subr.mxu0 0.0
  %218 = vmatpush1.msra.mxu0 0.0
  %219 = vmatprep.subr.mxu0 0.0
  %220 = vmatpush1.msra.mxu0 0.0
  %221 = vmatprep.subr.mxu0 0.0
  %222 = vmatpush1.msra.mxu0 0.0
  %223 = vmatprep.subr.mxu0 0.0
  %224 = vmatpush1.msra.mxu0 0.0
  %225 = vmatprep.subr.mxu0 0.0
  %226 = vmatpush1.msra.mxu0 0.0
  %227 = vmatprep.subr.mxu0 0.0
  %228 = vmatpush1.msra.mxu0 0.0
  %229 = vmatprep.subr.mxu0 0.0
  %230 = vmatpush1.msra.mxu0 0.0
  %231 = vmatprep.subr.mxu0 0.0
  %232 = vmatpush1.msra.mxu0 0.0
  %233 = vmatprep.subr.mxu0 0.0
  %234 = vmatpush1.msra.mxu0 0.0
  %235 = vmatprep.subr.mxu0 0.0
  %236 = vmatpush1.msra.mxu0 0.0
  %237 = vmatprep.subr.mxu0 0.0
  %238 = vmatpush1.msra.mxu0 0.0
  %239 = vmatprep.mubr.f32.mxu0 0.0
  %240 = vmatmul.mubr.f32.gmra.mrb[0].mxu0 %v166
  %v241 = vpop.f32.mrb[0].mxu0
  %v242 = vadd.f32 0.0, %v241
  %v243 = vpop.f32.mrb[0].mxu0
  %244 = vmatprep.mubr.f32.mxu0 0.0
  %245 = vmatmul.mubr.f32.gmra.mrb[0].mxu0 %v169
  %v246 = vpop.f32.mrb[0].mxu0
  %v247 = vadd.f32 0.0, %v246
  %v248 = vpop.f32.mrb[0].mxu0
  %249 = vdwg.mxu0
  %vm250 = vcmask 23552
  %v252 = vsel %vm250, %v158, 0
  %v255 = vsel %vm250, %v159, 0
  %vm257 = vcmask 1042432
  %v259 = vsel %vm257, %v160, 0
  %261 = vmatprep.subr.mxu0 0.0
  %262 = vmatpush1.msra.mxu0 %v259
  %263 = vmatprep.subr.mxu0 0.0
  %264 = vmatpush1.msra.mxu0 0.0
  %265 = vmatprep.subr.mxu0 0.0
  %266 = vmatpush1.msra.mxu0 0.0
  %267 = vmatprep.subr.mxu0 0.0
  %268 = vmatpush1.msra.mxu0 0.0
  %269 = vmatprep.subr.mxu0 0.0
  %270 = vmatpush1.msra.mxu0 0.0
  %271 = vmatprep.subr.mxu0 0.0
  %272 = vmatpush1.msra.mxu0 0.0
  %273 = vmatprep.subr.mxu0 0.0
  %274 = vmatpush1.msra.mxu0 0.0
  %275 = vmatprep.subr.mxu0 0.0
  %276 = vmatpush1.msra.mxu0 0.0
  %277 = vmatprep.subr.mxu0 0.0
  %278 = vmatpush1.msra.mxu0 0.0
  %279 = vmatprep.subr.mxu0 0.0
  %280 = vmatpush1.msra.mxu0 0.0
  %281 = vmatprep.subr.mxu0 0.0
  %282 = vmatpush1.msra.mxu0 0.0
  %283 = vmatprep.subr.mxu0 0.0
  %284 = vmatpush1.msra.mxu0 0.0
  %285 = vmatprep.subr.mxu0 0.0
  %286 = vmatpush1.msra.mxu0 0.0
  %287 = vmatprep.subr.mxu0 0.0
  %288 = vmatpush1.msra.mxu0 0.0
  %289 = vmatprep.subr.mxu0 0.0
  %290 = vmatpush1.msra.mxu0 0.0
  %291 = vmatprep.subr.mxu0 0.0
  %292 = vmatpush1.msra.mxu0 0.0
  %293 = vmatprep.subr.mxu0 0.0
  %294 = vmatpush1.msra.mxu0 0.0
  %295 = vmatprep.subr.mxu0 0.0
  %296 = vmatpush1.msra.mxu0 0.0
  %297 = vmatprep.subr.mxu0 0.0
  %298 = vmatpush1.msra.mxu0 0.0
  %299 = vmatprep.subr.mxu0 0.0
  %300 = vmatpush1.msra.mxu0 0.0
  %301 = vmatprep.subr.mxu0 0.0
  %302 = vmatpush1.msra.mxu0 0.0
  %303 = vmatprep.subr.mxu0 0.0
  %304 = vmatpush1.msra.mxu0 0.0
  %305 = vmatprep.subr.mxu0 0.0
  %306 = vmatpush1.msra.mxu0 0.0
  %307 = vmatprep.subr.mxu0 0.0
  %308 = vmatpush1.msra.mxu0 0.0
  %309 = vmatprep.subr.mxu0 0.0
  %310 = vmatpush1.msra.mxu0 0.0
  %311 = vmatprep.subr.mxu0 0.0
  %312 = vmatpush1.msra.mxu0 0.0
  %313 = vmatprep.subr.mxu0 0.0
  %314 = vmatpush1.msra.mxu0 0.0
  %315 = vmatprep.subr.mxu0 0.0
  %316 = vmatpush1.msra.mxu0 0.0
  %317 = vmatprep.subr.mxu0 0.0
  %318 = vmatpush1.msra.mxu0 0.0
  %319 = vmatprep.subr.mxu0 0.0
  %320 = vmatpush1.msra.mxu0 0.0
  %321 = vmatprep.subr.mxu0 0.0
  %322 = vmatpush1.msra.mxu0 0.0
  %323 = vmatprep.subr.mxu0 0.0
  %324 = vmatpush1.msra.mxu0 0.0
  %325 = vmatprep.mubr.f32.mxu0 0.0
  %326 = vmatmul.mubr.f32.gmra.mrb[0].mxu0 %v252
  %v327 = vpop.f32.mrb[0].mxu0
  %v328 = vadd.f32 %v242, %v327
  %v329 = vpop.f32.mrb[0].mxu0
  %330 = vmatprep.mubr.f32.mxu0 0.0
  %331 = vmatmul.mubr.f32.gmra.mrb[0].mxu0 %v255
  %v332 = vpop.f32.mrb[0].mxu0
  %v333 = vadd.f32 %v247, %v332
  %v334 = vpop.f32.mrb[0].mxu0
  %335 = vdwg.mxu0
  %v336 = vld [vmem:[%s15] sm:$0x1]
  %v338 = vlaneseq
  %v339 = vshrl.u32 %v338, 7
  %v340 = vsub.s32 0, %v339
  %v341 = vrot.slane %v336, %v340
  %v343 = vadd.f32 %v328, %v341
  %v344 = vadd.f32 %v333, %v341
  %v345 = vmax.f32 %v343, 0.0
  %v346 = vmax.f32 %v344, 0.0
  %v347 = vld [vmem:[%s17] sm:$0x1]
  %v348 = vld [vmem:[%s19] sm:$0x1]
  %vm349 = vcmask 261120
  %v350 = vsel %vm349, %v345, 0.0
  %351 = vadd.xlane.f32.xlu0 %v350
  %v352 = vpop.xlane.xlu0 %351
  %v353 = vsel %vm349, %v346, 0.0
  %354 = vadd.xlane.f32.xlu0 %v353
  %v355 = vpop.xlane.xlu0 %354
  %v356 = vrcp.pop 32.0
  %v357 = vmul.f32 %v352, %v356
  %v358 = vmul.f32 %v355, %v356
  %v359 = vsub.f32 %v345, %v357
  %v360 = vsub.f32 %v346, %v358
  %v361 = vmul.f32 %v359, %v359
  %v362 = vmul.f32 %v360, %v360
  %v363 = vsel %vm349, %v361, 0.0
  %364 = vadd.xlane.f32.xlu0 %v363
  %v365 = vpop.xlane.xlu0 %364
  %v366 = vsel %vm349, %v362, 0.0
  %367 = vadd.xlane.f32.xlu0 %v366
  %v368 = vpop.xlane.xlu0 %367
  %v369 = vmul.f32 %v365, %v356
  %v370 = vmul.f32 %v368, %v356
  %v371 = vadd.f32 %v369, 1e-05
  %v372 = vadd.f32 %v370, 1e-05
  %v373 = vrsqrt.pop %v371
  %v374 = vrsqrt.pop %v372
  %v375 = vmul.f32 %v359, %v373
  %v376 = vmul.f32 %v360, %v374
  %v378 = vlaneseq
  %v379 = vshrl.u32 %v378, 7
  %v380 = vsub.s32 0, %v379
  %v381 = vrot.slane %v347, %v380
  %v383 = vmul.f32 %v375, %v381
  %v384 = vmul.f32 %v376, %v381
  %v386 = vlaneseq
  %v387 = vshrl.u32 %v386, 7
  %v388 = vsub.s32 0, %v387
  %v389 = vrot.slane %v348, %v388
  %v391 = vadd.f32 %v383, %v389
  %v392 = vadd.f32 %v384, %v389
  %v393 = vld [vmem:[%s21] sm:$0xff]
  %v394 = vld [vmem:[%s21 + $0x8] sm:$0xff]
  %v395 = vld [vmem:[%s21 + $0x10] sm:$0xff]
  %v396 = vld [vmem:[%s21 + $0x18] sm:$0xff]
  %v397 = vld [vmem:[%s23] sm:$0x1]
  %v399 = vlaneseq
  %v400 = vshrl.u32 %v399, 7
  %v401 = vsub.s32 0, %v400
  %v402 = vrot.slane %v397, %v401
  %v405 = vsel %vm349, %v391, 0
  %v408 = vsel %vm349, %v392, 0
  %410 = vmatprep.subr.mxu0 0.0
  %411 = vmatpush1.msra.mxu0 %v393
  %412 = vmatprep.subr.mxu0 0.0
  %413 = vmatpush1.msra.mxu0 %v394
  %414 = vmatprep.subr.mxu0 0.0
  %415 = vmatpush1.msra.mxu0 %v395
  %416 = vmatprep.subr.mxu0 0.0
  %417 = vmatpush1.msra.mxu0 %v396
  %418 = vmatprep.subr.mxu0 0.0
  %419 = vmatpush1.msra.mxu0 0.0
  %420 = vmatprep.subr.mxu0 0.0
  %421 = vmatpush1.msra.mxu0 0.0
  %422 = vmatprep.subr.mxu0 0.0
  %423 = vmatpush1.msra.mxu0 0.0
  %424 = vmatprep.subr.mxu0 0.0
  %425 = vmatpush1.msra.mxu0 0.0
  %426 = vmatprep.subr.mxu0 0.0
  %427 = vmatpush1.msra.mxu0 0.0
  %428 = vmatprep.subr.mxu0 0.0
  %429 = vmatpush1.msra.mxu0 0.0
  %430 = vmatprep.subr.mxu0 0.0
  %431 = vmatpush1.msra.mxu0 0.0
  %432 = vmatprep.subr.mxu0 0.0
  %433 = vmatpush1.msra.mxu0 0.0
  %434 = vmatprep.subr.mxu0 0.0
  %435 = vmatpush1.msra.mxu0 0.0
  %436 = vmatprep.subr.mxu0 0.0
  %437 = vmatpush1.msra.mxu0 0.0
  %438 = vmatprep.subr.mxu0 0.0
  %439 = vmatpush1.msra.mxu0 0.0
  %440 = vmatprep.subr.mxu0 0.0
  %441 = vmatpush1.msra.mxu0 0.0
  %442 = vmatprep.subr.mxu0 0.0
  %443 = vmatpush1.msra.mxu0 0.0
  %444 = vmatprep.subr.mxu0 0.0
  %445 = vmatpush1.msra.mxu0 0.0
  %446 = vmatprep.subr.mxu0 0.0
  %447 = vmatpush1.msra.mxu0 0.0
  %448 = vmatprep.subr.mxu0 0.0
  %449 = vmatpush1.msra.mxu0 0.0
  %450 = vmatprep.subr.mxu0 0.0
  %451 = vmatpush1.msra.mxu0 0.0
  %452 = vmatprep.subr.mxu0 0.0
  %453 = vmatpush1.msra.mxu0 0.0
  %454 = vmatprep.subr.mxu0 0.0
  %455 = vmatpush1.msra.mxu0 0.0
  %456 = vmatprep.subr.mxu0 0.0
  %457 = vmatpush1.msra.mxu0 0.0
  %458 = vmatprep.subr.mxu0 0.0
  %459 = vmatpush1.msra.mxu0 0.0
  %460 = vmatprep.subr.mxu0 0.0
  %461 = vmatpush1.msra.mxu0 0.0
  %462 = vmatprep.subr.mxu0 0.0
  %463 = vmatpush1.msra.mxu0 0.0
  %464 = vmatprep.subr.mxu0 0.0
  %465 = vmatpush1.msra.mxu0 0.0
  %466 = vmatprep.subr.mxu0 0.0
  %467 = vmatpush1.msra.mxu0 0.0
  %468 = vmatprep.subr.mxu0 0.0
  %469 = vmatpush1.msra.mxu0 0.0
  %470 = vmatprep.subr.mxu0 0.0
  %471 = vmatpush1.msra.mxu0 0.0
  %472 = vmatprep.subr.mxu0 0.0
  %473 = vmatpush1.msra.mxu0 0.0
  %474 = vmatprep.mubr.f32.mxu0 0.0
  %475 = vmatmul.mubr.f32.gmra.mrb[0].mxu0 %v405
  %v476 = vpop.f32.mrb[0].mxu0
  %v477 = vadd.f32 %v402, %v476
  %v478 = vpop.f32.mrb[0].mxu0
  %479 = vmatprep.mubr.f32.mxu0 0.0
  %480 = vmatmul.mubr.f32.gmra.mrb[0].mxu0 %v408
  %v481 = vpop.f32.mrb[0].mxu0
  %v482 = vadd.f32 %v402, %v481
  %v483 = vpop.f32.mrb[0].mxu0
  %484 = vdwg.mxu0
  %v485 = vld [vmem:[%s7] sm:$0xff]
  %v486 = vld [vmem:[%s7 + $0x8] sm:$0xff]
  %v487 = vadd.f32 %v477, %v485
  %v488 = vadd.f32 %v482, %v486
  %v489 = vld [vmem:[%s5] sm:$0xff]
  %v490 = vld [vmem:[%s5 + $0x8] sm:$0xff]
  %v491 = vld [vmem:[%s25] sm:$0xff]
  %v492 = vld [vmem:[%s25 + $0x8] sm:$0xff]
  %v493 = vld [vmem:[%s25 + $0x10] sm:$0xff]
  %v494 = vld [vmem:[%s25 + $0x18] sm:$0xff]
  %v495 = vld [vmem:[%s27] sm:$0x1]
  %v497 = vlaneseq
  %v498 = vshrl.u32 %v497, 7
  %v499 = vsub.s32 0, %v498
  %v500 = vrot.slane %v495, %v499
  %v503 = vsel %vm349, %v487, 0
  %v506 = vsel %vm349, %v488, 0
  %508 = vmatprep.subr.mxu0 0.0
  %509 = vmatpush1.msra.mxu0 %v491
  %510 = vmatprep.subr.mxu0 0.0
  %511 = vmatpush1.msra.mxu0 %v492
  %512 = vmatprep.subr.mxu0 0.0
  %513 = vmatpush1.msra.mxu0 %v493
  %514 = vmatprep.subr.mxu0 0.0
  %515 = vmatpush1.msra.mxu0 %v494
  %516 = vmatprep.subr.mxu0 0.0
  %517 = vmatpush1.msra.mxu0 0.0
  %518 = vmatprep.subr.mxu0 0.0
  %519 = vmatpush1.msra.mxu0 0.0
  %520 = vmatprep.subr.mxu0 0.0
  %521 = vmatpush1.msra.mxu0 0.0
  %522 = vmatprep.subr.mxu0 0.0
  %523 = vmatpush1.msra.mxu0 0.0
  %524 = vmatprep.subr.mxu0 0.0
  %525 = vmatpush1.msra.mxu0 0.0
  %526 = vmatprep.subr.mxu0 0.0
  %527 = vmatpush1.msra.mxu0 0.0
  %528 = vmatprep.subr.mxu0 0.0
  %529 = vmatpush1.msra.mxu0 0.0
  %530 = vmatprep.subr.mxu0 0.0
  %531 = vmatpush1.msra.mxu0 0.0
  %532 = vmatprep.subr.mxu0 0.0
  %533 = vmatpush1.msra.mxu0 0.0
  %534 = vmatprep.subr.mxu0 0.0
  %535 = vmatpush1.msra.mxu0 0.0
  %536 = vmatprep.subr.mxu0 0.0
  %537 = vmatpush1.msra.mxu0 0.0
  %538 = vmatprep.subr.mxu0 0.0
  %539 = vmatpush1.msra.mxu0 0.0
  %540 = vmatprep.subr.mxu0 0.0
  %541 = vmatpush1.msra.mxu0 0.0
  %542 = vmatprep.subr.mxu0 0.0
  %543 = vmatpush1.msra.mxu0 0.0
  %544 = vmatprep.subr.mxu0 0.0
  %545 = vmatpush1.msra.mxu0 0.0
  %546 = vmatprep.subr.mxu0 0.0
  %547 = vmatpush1.msra.mxu0 0.0
  %548 = vmatprep.subr.mxu0 0.0
  %549 = vmatpush1.msra.mxu0 0.0
  %550 = vmatprep.subr.mxu0 0.0
  %551 = vmatpush1.msra.mxu0 0.0
  %552 = vmatprep.subr.mxu0 0.0
  %553 = vmatpush1.msra.mxu0 0.0
  %554 = vmatprep.subr.mxu0 0.0
  %555 = vmatpush1.msra.mxu0 0.0
  %556 = vmatprep.subr.mxu0 0.0
  %557 = vmatpush1.msra.mxu0 0.0
  %558 = vmatprep.subr.mxu0 0.0
  %559 = vmatpush1.msra.mxu0 0.0
  %560 = vmatprep.subr.mxu0 0.0
  %561 = vmatpush1.msra.mxu0 0.0
  %562 = vmatprep.subr.mxu0 0.0
  %563 = vmatpush1.msra.mxu0 0.0
  %564 = vmatprep.subr.mxu0 0.0
  %565 = vmatpush1.msra.mxu0 0.0
  %566 = vmatprep.subr.mxu0 0.0
  %567 = vmatpush1.msra.mxu0 0.0
  %568 = vmatprep.subr.mxu0 0.0
  %569 = vmatpush1.msra.mxu0 0.0
  %570 = vmatprep.subr.mxu0 0.0
  %571 = vmatpush1.msra.mxu0 0.0
  %572 = vmatprep.mubr.f32.mxu0 0.0
  %573 = vmatmul.mubr.f32.gmra.mrb[0].mxu0 %v503
  %v574 = vpop.f32.mrb[0].mxu0
  %v575 = vadd.f32 %v500, %v574
  %v576 = vpop.f32.mrb[0].mxu0
  %577 = vmatprep.mubr.f32.mxu0 0.0
  %578 = vmatmul.mubr.f32.gmra.mrb[0].mxu0 %v506
  %v579 = vpop.f32.mrb[0].mxu0
  %v580 = vadd.f32 %v500, %v579
  %v581 = vpop.f32.mrb[0].mxu0
  %582 = vdwg.mxu0
  %584 = vrot.lane.b32.xlu0 %v575, 96
  %v585 = vpop.permute.xlu0 %584
  %vm586 = vcmask 64512
  %v587 = vsel %vm586, %v575, 0
  %v589 = vsel %vm586, %v585, 0
  %591 = vmatprep.subr.mxu0 0.0
  %592 = vmatpush1.xpose.msra.mxu0 %v589
  %593 = vmatprep.subr.mxu0 0.0
  %594 = vmatpush1.xpose.msra.mxu0 0.0
  %595 = vmatprep.subr.mxu0 0.0
  %596 = vmatpush1.xpose.msra.mxu0 0.0
  %597 = vmatprep.subr.mxu0 0.0
  %598 = vmatpush1.xpose.msra.mxu0 0.0
  %599 = vmatprep.subr.mxu0 0.0
  %600 = vmatpush1.xpose.msra.mxu0 0.0
  %601 = vmatprep.subr.mxu0 0.0
  %602 = vmatpush1.xpose.msra.mxu0 0.0
  %603 = vmatprep.subr.mxu0 0.0
  %604 = vmatpush1.xpose.msra.mxu0 0.0
  %605 = vmatprep.subr.mxu0 0.0
  %606 = vmatpush1.xpose.msra.mxu0 0.0
  %607 = vmatprep.subr.mxu0 0.0
  %608 = vmatpush1.xpose.msra.mxu0 0.0
  %609 = vmatprep.subr.mxu0 0.0
  %610 = vmatpush1.xpose.msra.mxu0 0.0
  %611 = vmatprep.subr.mxu0 0.0
  %612 = vmatpush1.xpose.msra.mxu0 0.0
  %613 = vmatprep.subr.mxu0 0.0
  %614 = vmatpush1.xpose.msra.mxu0 0.0
  %615 = vmatprep.subr.mxu0 0.0
  %616 = vmatpush1.xpose.msra.mxu0 0.0
  %617 = vmatprep.subr.mxu0 0.0
  %618 = vmatpush1.xpose.msra.mxu0 0.0
  %619 = vmatprep.subr.mxu0 0.0
  %620 = vmatpush1.xpose.msra.mxu0 0.0
  %621 = vmatprep.subr.mxu0 0.0
  %622 = vmatpush1.xpose.msra.mxu0 0.0
  %623 = vmatprep.subr.mxu0 0.0
  %624 = vmatpush1.xpose.msra.mxu0 0.0
  %625 = vmatprep.subr.mxu0 0.0
  %626 = vmatpush1.xpose.msra.mxu0 0.0
  %627 = vmatprep.subr.mxu0 0.0
  %628 = vmatpush1.xpose.msra.mxu0 0.0
  %629 = vmatprep.subr.mxu0 0.0
  %630 = vmatpush1.xpose.msra.mxu0 0.0
  %631 = vmatprep.subr.mxu0 0.0
  %632 = vmatpush1.xpose.msra.mxu0 0.0
  %633 = vmatprep.subr.mxu0 0.0
  %634 = vmatpush1.xpose.msra.mxu0 0.0
  %635 = vmatprep.subr.mxu0 0.0
  %636 = vmatpush1.xpose.msra.mxu0 0.0
  %637 = vmatprep.subr.mxu0 0.0
  %638 = vmatpush1.xpose.msra.mxu0 0.0
  %639 = vmatprep.subr.mxu0 0.0
  %640 = vmatpush1.xpose.msra.mxu0 0.0
  %641 = vmatprep.subr.mxu0 0.0
  %642 = vmatpush1.xpose.msra.mxu0 0.0
  %643 = vmatprep.subr.mxu0 0.0
  %644 = vmatpush1.xpose.msra.mxu0 0.0
  %645 = vmatprep.subr.mxu0 0.0
  %646 = vmatpush1.xpose.msra.mxu0 0.0
  %647 = vmatprep.subr.mxu0 0.0
  %648 = vmatpush1.xpose.msra.mxu0 0.0
  %649 = vmatprep.subr.mxu0 0.0
  %650 = vmatpush1.xpose.msra.mxu0 0.0
  %651 = vmatprep.subr.mxu0 0.0
  %652 = vmatpush1.xpose.msra.mxu0 0.0
  %653 = vmatprep.subr.mxu0 0.0
  %654 = vmatpush1.xpose.msra.mxu0 0.0
  %655 = vmatprep.mubr.f32.mxu0 0.0
  %656 = vmatmul.mubr.f32.gmra.mrb[0].mxu0 %v587
  %v657 = vpop.f32.mrb[0].mxu0
  %v658 = vadd.f32 0.0, %v657
  %v659 = vpop.f32.mrb[0].mxu0
  %660 = vdwg.mxu0
  %662 = vrot.lane.b32.xlu0 %v580, 96
  %v663 = vpop.permute.xlu0 %662
  %v664 = vsel %vm586, %v580, 0
  %v666 = vsel %vm586, %v663, 0
  %668 = vmatprep.subr.mxu0 0.0
  %669 = vmatpush1.xpose.msra.mxu0 %v666
  %670 = vmatprep.subr.mxu0 0.0
  %671 = vmatpush1.xpose.msra.mxu0 0.0
  %672 = vmatprep.subr.mxu0 0.0
  %673 = vmatpush1.xpose.msra.mxu0 0.0
  %674 = vmatprep.subr.mxu0 0.0
  %675 = vmatpush1.xpose.msra.mxu0 0.0
  %676 = vmatprep.subr.mxu0 0.0
  %677 = vmatpush1.xpose.msra.mxu0 0.0
  %678 = vmatprep.subr.mxu0 0.0
  %679 = vmatpush1.xpose.msra.mxu0 0.0
  %680 = vmatprep.subr.mxu0 0.0
  %681 = vmatpush1.xpose.msra.mxu0 0.0
  %682 = vmatprep.subr.mxu0 0.0
  %683 = vmatpush1.xpose.msra.mxu0 0.0
  %684 = vmatprep.subr.mxu0 0.0
  %685 = vmatpush1.xpose.msra.mxu0 0.0
  %686 = vmatprep.subr.mxu0 0.0
  %687 = vmatpush1.xpose.msra.mxu0 0.0
  %688 = vmatprep.subr.mxu0 0.0
  %689 = vmatpush1.xpose.msra.mxu0 0.0
  %690 = vmatprep.subr.mxu0 0.0
  %691 = vmatpush1.xpose.msra.mxu0 0.0
  %692 = vmatprep.subr.mxu0 0.0
  %693 = vmatpush1.xpose.msra.mxu0 0.0
  %694 = vmatprep.subr.mxu0 0.0
  %695 = vmatpush1.xpose.msra.mxu0 0.0
  %696 = vmatprep.subr.mxu0 0.0
  %697 = vmatpush1.xpose.msra.mxu0 0.0
  %698 = vmatprep.subr.mxu0 0.0
  %699 = vmatpush1.xpose.msra.mxu0 0.0
  %700 = vmatprep.subr.mxu0 0.0
  %701 = vmatpush1.xpose.msra.mxu0 0.0
  %702 = vmatprep.subr.mxu0 0.0
  %703 = vmatpush1.xpose.msra.mxu0 0.0
  %704 = vmatprep.subr.mxu0 0.0
  %705 = vmatpush1.xpose.msra.mxu0 0.0
  %706 = vmatprep.subr.mxu0 0.0
  %707 = vmatpush1.xpose.msra.mxu0 0.0
  %708 = vmatprep.subr.mxu0 0.0
  %709 = vmatpush1.xpose.msra.mxu0 0.0
  %710 = vmatprep.subr.mxu0 0.0
  %711 = vmatpush1.xpose.msra.mxu0 0.0
  %712 = vmatprep.subr.mxu0 0.0
  %713 = vmatpush1.xpose.msra.mxu0 0.0
  %714 = vmatprep.subr.mxu0 0.0
  %715 = vmatpush1.xpose.msra.mxu0 0.0
  %716 = vmatprep.subr.mxu0 0.0
  %717 = vmatpush1.xpose.msra.mxu0 0.0
  %718 = vmatprep.subr.mxu0 0.0
  %719 = vmatpush1.xpose.msra.mxu0 0.0
  %720 = vmatprep.subr.mxu0 0.0
  %721 = vmatpush1.xpose.msra.mxu0 0.0
  %722 = vmatprep.subr.mxu0 0.0
  %723 = vmatpush1.xpose.msra.mxu0 0.0
  %724 = vmatprep.subr.mxu0 0.0
  %725 = vmatpush1.xpose.msra.mxu0 0.0
  %726 = vmatprep.subr.mxu0 0.0
  %727 = vmatpush1.xpose.msra.mxu0 0.0
  %728 = vmatprep.subr.mxu0 0.0
  %729 = vmatpush1.xpose.msra.mxu0 0.0
  %730 = vmatprep.subr.mxu0 0.0
  %731 = vmatpush1.xpose.msra.mxu0 0.0
  %732 = vmatprep.mubr.f32.mxu0 0.0
  %733 = vmatmul.mubr.f32.gmra.mrb[0].mxu0 %v664
  %v734 = vpop.f32.mrb[0].mxu0
  %v735 = vadd.f32 0.0, %v734
  %v736 = vpop.f32.mrb[0].mxu0
  %737 = vdwg.mxu0
  %v738 = vmul.f32 %v658, 0.35355338
  %v739 = vmul.f32 %v735, 0.35355338
  %v740 = vadd.f32 %v738, %v489
  %v741 = vadd.f32 %v739, %v490
  %v742 = vsel %vm586, %v740, -inf
  %743 = vmax.xlane.f32.xlu0 %v742
  %v744 = vpop.xlane.xlu0 %743
  %v745 = vsel %vm586, %v741, -inf
  %746 = vmax.xlane.f32.xlu0 %v745
  %v747 = vpop.xlane.xlu0 %746
  %v748 = vsub.f32 %v740, %v744
  %v749 = vsub.f32 %v741, %v747
  %v750 = vmul.f32 %v748, 1.442695
  %v751 = vpow.pop %v750
  %v752 = vmul.f32 %v749, 1.442695
  %v753 = vpow.pop %v752
  %v754 = vsel %vm586, %v751, 0.0
  %755 = vadd.xlane.f32.xlu0 %v754
  %v756 = vpop.xlane.xlu0 %755
  %v757 = vsel %vm586, %v753, 0.0
  %758 = vadd.xlane.f32.xlu0 %v757
  %v759 = vpop.xlane.xlu0 %758
  %v760 = vrcp.pop %v756
  %v761 = vrcp.pop %v759
  %v762 = vmul.f32 %v751, %v760
  %v763 = vmul.f32 %v753, %v761
  %764 = vrot.lane.b32.xlu0 %v575, 64
  %v765 = vpop.permute.xlu0 %764
  %v768 = vsel %vm586, %v762, 0
  %770 = vmatprep.subr.mxu0 0.0
  %771 = vmatpush1.msra.mxu0 %v765
  %772 = vmatprep.subr.mxu0 0.0
  %773 = vmatpush1.msra.mxu0 0.0
  %774 = vmatprep.subr.mxu0 0.0
  %775 = vmatpush1.msra.mxu0 0.0
  %776 = vmatprep.subr.mxu0 0.0
  %777 = vmatpush1.msra.mxu0 0.0
  %778 = vmatprep.subr.mxu0 0.0
  %779 = vmatpush1.msra.mxu0 0.0
  %780 = vmatprep.subr.mxu0 0.0
  %781 = vmatpush1.msra.mxu0 0.0
  %782 = vmatprep.subr.mxu0 0.0
  %783 = vmatpush1.msra.mxu0 0.0
  %784 = vmatprep.subr.mxu0 0.0
  %785 = vmatpush1.msra.mxu0 0.0
  %786 = vmatprep.subr.mxu0 0.0
  %787 = vmatpush1.msra.mxu0 0.0
  %788 = vmatprep.subr.mxu0 0.0
  %789 = vmatpush1.msra.mxu0 0.0
  %790 = vmatprep.subr.mxu0 0.0
  %791 = vmatpush1.msra.mxu0 0.0
  %792 = vmatprep.subr.mxu0 0.0
  %793 = vmatpush1.msra.mxu0 0.0
  %794 = vmatprep.subr.mxu0 0.0
  %795 = vmatpush1.msra.mxu0 0.0
  %796 = vmatprep.subr.mxu0 0.0
  %797 = vmatpush1.msra.mxu0 0.0
  %798 = vmatprep.subr.mxu0 0.0
  %799 = vmatpush1.msra.mxu0 0.0
  %800 = vmatprep.subr.mxu0 0.0
  %801 = vmatpush1.msra.mxu0 0.0
  %802 = vmatprep.subr.mxu0 0.0
  %803 = vmatpush1.msra.mxu0 0.0
  %804 = vmatprep.subr.mxu0 0.0
  %805 = vmatpush1.msra.mxu0 0.0
  %806 = vmatprep.subr.mxu0 0.0
  %807 = vmatpush1.msra.mxu0 0.0
  %808 = vmatprep.subr.mxu0 0.0
  %809 = vmatpush1.msra.mxu0 0.0
  %810 = vmatprep.subr.mxu0 0.0
  %811 = vmatpush1.msra.mxu0 0.0
  %812 = vmatprep.subr.mxu0 0.0
  %813 = vmatpush1.msra.mxu0 0.0
  %814 = vmatprep.subr.mxu0 0.0
  %815 = vmatpush1.msra.mxu0 0.0
  %816 = vmatprep.subr.mxu0 0.0
  %817 = vmatpush1.msra.mxu0 0.0
  %818 = vmatprep.subr.mxu0 0.0
  %819 = vmatpush1.msra.mxu0 0.0
  %820 = vmatprep.subr.mxu0 0.0
  %821 = vmatpush1.msra.mxu0 0.0
  %822 = vmatprep.subr.mxu0 0.0
  %823 = vmatpush1.msra.mxu0 0.0
  %824 = vmatprep.subr.mxu0 0.0
  %825 = vmatpush1.msra.mxu0 0.0
  %826 = vmatprep.subr.mxu0 0.0
  %827 = vmatpush1.msra.mxu0 0.0
  %828 = vmatprep.subr.mxu0 0.0
  %829 = vmatpush1.msra.mxu0 0.0
  %830 = vmatprep.subr.mxu0 0.0
  %831 = vmatpush1.msra.mxu0 0.0
  %832 = vmatprep.subr.mxu0 0.0
  %833 = vmatpush1.msra.mxu0 0.0
  %834 = vmatprep.mubr.f32.mxu0 0.0
  %835 = vmatmul.mubr.f32.gmra.mrb[0].mxu0 %v768
  %v836 = vpop.f32.mrb[0].mxu0
  %v837 = vadd.f32 0.0, %v836
  %v838 = vpop.f32.mrb[0].mxu0
  %839 = vdwg.mxu0
  %840 = vrot.lane.b32.xlu0 %v580, 64
  %v841 = vpop.permute.xlu0 %840
  %v844 = vsel %vm586, %v763, 0
  %846 = vmatprep.subr.mxu0 0.0
  %847 = vmatpush1.msra.mxu0 %v841
  %848 = vmatprep.subr.mxu0 0.0
  %849 = vmatpush1.msra.mxu0 0.0
  %850 = vmatprep.subr.mxu0 0.0
  %851 = vmatpush1.msra.mxu0 0.0
  %852 = vmatprep.subr.mxu0 0.0
  %853 = vmatpush1.msra.mxu0 0.0
  %854 = vmatprep.subr.mxu0 0.0
  %855 = vmatpush1.msra.mxu0 0.0
  %856 = vmatprep.subr.mxu0 0.0
  %857 = vmatpush1.msra.mxu0 0.0
  %858 = vmatprep.subr.mxu0 0.0
  %859 = vmatpush1.msra.mxu0 0.0
  %860 = vmatprep.subr.mxu0 0.0
  %861 = vmatpush1.msra.mxu0 0.0
  %862 = vmatprep.subr.mxu0 0.0
  %863 = vmatpush1.msra.mxu0 0.0
  %864 = vmatprep.subr.mxu0 0.0
  %865 = vmatpush1.msra.mxu0 0.0
  %866 = vmatprep.subr.mxu0 0.0
  %867 = vmatpush1.msra.mxu0 0.0
  %868 = vmatprep.subr.mxu0 0.0
  %869 = vmatpush1.msra.mxu0 0.0
  %870 = vmatprep.subr.mxu0 0.0
  %871 = vmatpush1.msra.mxu0 0.0
  %872 = vmatprep.subr.mxu0 0.0
  %873 = vmatpush1.msra.mxu0 0.0
  %874 = vmatprep.subr.mxu0 0.0
  %875 = vmatpush1.msra.mxu0 0.0
  %876 = vmatprep.subr.mxu0 0.0
  %877 = vmatpush1.msra.mxu0 0.0
  %878 = vmatprep.subr.mxu0 0.0
  %879 = vmatpush1.msra.mxu0 0.0
  %880 = vmatprep.subr.mxu0 0.0
  %881 = vmatpush1.msra.mxu0 0.0
  %882 = vmatprep.subr.mxu0 0.0
  %883 = vmatpush1.msra.mxu0 0.0
  %884 = vmatprep.subr.mxu0 0.0
  %885 = vmatpush1.msra.mxu0 0.0
  %886 = vmatprep.subr.mxu0 0.0
  %887 = vmatpush1.msra.mxu0 0.0
  %888 = vmatprep.subr.mxu0 0.0
  %889 = vmatpush1.msra.mxu0 0.0
  %890 = vmatprep.subr.mxu0 0.0
  %891 = vmatpush1.msra.mxu0 0.0
  %892 = vmatprep.subr.mxu0 0.0
  %893 = vmatpush1.msra.mxu0 0.0
  %894 = vmatprep.subr.mxu0 0.0
  %895 = vmatpush1.msra.mxu0 0.0
  %896 = vmatprep.subr.mxu0 0.0
  %897 = vmatpush1.msra.mxu0 0.0
  %898 = vmatprep.subr.mxu0 0.0
  %899 = vmatpush1.msra.mxu0 0.0
  %900 = vmatprep.subr.mxu0 0.0
  %901 = vmatpush1.msra.mxu0 0.0
  %902 = vmatprep.subr.mxu0 0.0
  %903 = vmatpush1.msra.mxu0 0.0
  %904 = vmatprep.subr.mxu0 0.0
  %905 = vmatpush1.msra.mxu0 0.0
  %906 = vmatprep.subr.mxu0 0.0
  %907 = vmatpush1.msra.mxu0 0.0
  %908 = vmatprep.subr.mxu0 0.0
  %909 = vmatpush1.msra.mxu0 0.0
  %910 = vmatprep.mubr.f32.mxu0 0.0
  %911 = vmatmul.mubr.f32.gmra.mrb[0].mxu0 %v844
  %v912 = vpop.f32.mrb[0].mxu0
  %v913 = vadd.f32 0.0, %v912
  %v914 = vpop.f32.mrb[0].mxu0
  %915 = vdwg.mxu0
  %916 = vrot.lane.b32.xlu0 %v575, 120
  %v917 = vpop.permute.xlu0 %916
  %918 = vrot.lane.b32.xlu0 %v575, 88
  %v919 = vpop.permute.xlu0 %918
  %v920 = vsel %vm586, %v917, 0
  %v922 = vsel %vm586, %v919, 0
  %924 = vmatprep.subr.mxu0 0.0
  %925 = vmatpush1.xpose.msra.mxu0 %v922
  %926 = vmatprep.subr.mxu0 0.0
  %927 = vmatpush1.xpose.msra.mxu0 0.0
  %928 = vmatprep.subr.mxu0 0.0
  %929 = vmatpush1.xpose.msra.mxu0 0.0
  %930 = vmatprep.subr.mxu0 0.0
  %931 = vmatpush1.xpose.msra.mxu0 0.0
  %932 = vmatprep.subr.mxu0 0.0
  %933 = vmatpush1.xpose.msra.mxu0 0.0
  %934 = vmatprep.subr.mxu0 0.0
  %935 = vmatpush1.xpose.msra.mxu0 0.0
  %936 = vmatprep.subr.mxu0 0.0
  %937 = vmatpush1.xpose.msra.mxu0 0.0
  %938 = vmatprep.subr.mxu0 0.0
  %939 = vmatpush1.xpose.msra.mxu0 0.0
  %940 = vmatprep.subr.mxu0 0.0
  %941 = vmatpush1.xpose.msra.mxu0 0.0
  %942 = vmatprep.subr.mxu0 0.0
  %943 = vmatpush1.xpose.msra.mxu0 0.0
  %944 = vmatprep.subr.mxu0 0.0
  %945 = vmatpush1.xpose.msra.mxu0 0.0
  %946 = vmatprep.subr.mxu0 0.0
  %947 = vmatpush1.xpose.msra.mxu0 0.0
  %948 = vmatprep.subr.mxu0 0.0
  %949 = vmatpush1.xpose.msra.mxu0 0.0
  %950 = vmatprep.subr.mxu0 0.0
  %951 = vmatpush1.xpose.msra.mxu0 0.0
  %952 = vmatprep.subr.mxu0 0.0
  %953 = vmatpush1.xpose.msra.mxu0 0.0
  %954 = vmatprep.subr.mxu0 0.0
  %955 = vmatpush1.xpose.msra.mxu0 0.0
  %956 = vmatprep.subr.mxu0 0.0
  %957 = vmatpush1.xpose.msra.mxu0 0.0
  %958 = vmatprep.subr.mxu0 0.0
  %959 = vmatpush1.xpose.msra.mxu0 0.0
  %960 = vmatprep.subr.mxu0 0.0
  %961 = vmatpush1.xpose.msra.mxu0 0.0
  %962 = vmatprep.subr.mxu0 0.0
  %963 = vmatpush1.xpose.msra.mxu0 0.0
  %964 = vmatprep.subr.mxu0 0.0
  %965 = vmatpush1.xpose.msra.mxu0 0.0
  %966 = vmatprep.subr.mxu0 0.0
  %967 = vmatpush1.xpose.msra.mxu0 0.0
  %968 = vmatprep.subr.mxu0 0.0
  %969 = vmatpush1.xpose.msra.mxu0 0.0
  %970 = vmatprep.subr.mxu0 0.0
  %971 = vmatpush1.xpose.msra.mxu0 0.0
  %972 = vmatprep.subr.mxu0 0.0
  %973 = vmatpush1.xpose.msra.mxu0 0.0
  %974 = vmatprep.subr.mxu0 0.0
  %975 = vmatpush1.xpose.msra.mxu0 0.0
  %976 = vmatprep.subr.mxu0 0.0
  %977 = vmatpush1.xpose.msra.mxu0 0.0
  %978 = vmatprep.subr.mxu0 0.0
  %979 = vmatpush1.xpose.msra.mxu0 0.0
  %980 = vmatprep.subr.mxu0 0.0
  %981 = vmatpush1.xpose.msra.mxu0 0.0
  %982 = vmatprep.subr.mxu0 0.0
  %983 = vmatpush1.xpose.msra.mxu0 0.0
  %984 = vmatprep.subr.mxu0 0.0
  %985 = vmatpush1.xpose.msra.mxu0 0.0
  %986 = vmatprep.subr.mxu0 0.0
  %987 = vmatpush1.xpose.msra.mxu0 0.0
  %988 = vmatprep.mubr.f32.mxu0 0.0
  %989 = vmatmul.mubr.f32.gmra.mrb[0].mxu0 %v920
  %v990 = vpop.f32.mrb[0].mxu0
  %v991 = vadd.f32 0.0, %v990
  %v992 = vpop.f32.mrb[0].mxu0
  %993 = vdwg.mxu0
  %994 = vrot.lane.b32.xlu0 %v580, 120
  %v995 = vpop.permute.xlu0 %994
  %996 = vrot.lane.b32.xlu0 %v580, 88
  %v997 = vpop.permute.xlu0 %996
  %v998 = vsel %vm586, %v995, 0
  %v1000 = vsel %vm586, %v997, 0
  %1002 = vmatprep.subr.mxu0 0.0
  %1003 = vmatpush1.xpose.msra.mxu0 %v1000
  %1004 = vmatprep.subr.mxu0 0.0
  %1005 = vmatpush1.xpose.msra.mxu0 0.0
  %1006 = vmatprep.subr.mxu0 0.0
  %1007 = vmatpush1.xpose.msra.mxu0 0.0
  %1008 = vmatprep.subr.mxu0 0.0
  %1009 = vmatpush1.xpose.msra.mxu0 0.0
  %1010 = vmatprep.subr.mxu0 0.0
  %1011 = vmatpush1.xpose.msra.mxu0 0.0
  %1012 = vmatprep.subr.mxu0 0.0
  %1013 = vmatpush1.xpose.msra.mxu0 0.0
  %1014 = vmatprep.subr.mxu0 0.0
  %1015 = vmatpush1.xpose.msra.mxu0 0.0
  %1016 = vmatprep.subr.mxu0 0.0
  %1017 = vmatpush1.xpose.msra.mxu0 0.0
  %1018 = vmatprep.subr.mxu0 0.0
  %1019 = vmatpush1.xpose.msra.mxu0 0.0
  %1020 = vmatprep.subr.mxu0 0.0
  %1021 = vmatpush1.xpose.msra.mxu0 0.0
  %1022 = vmatprep.subr.mxu0 0.0
  %1023 = vmatpush1.xpose.msra.mxu0 0.0
  %1024 = vmatprep.subr.mxu0 0.0
  %1025 = vmatpush1.xpose.msra.mxu0 0.0
  %1026 = vmatprep.subr.mxu0 0.0
  %1027 = vmatpush1.xpose.msra.mxu0 0.0
  %1028 = vmatprep.subr.mxu0 0.0
  %1029 = vmatpush1.xpose.msra.mxu0 0.0
  %1030 = vmatprep.subr.mxu0 0.0
  %1031 = vmatpush1.xpose.msra.mxu0 0.0
  %1032 = vmatprep.subr.mxu0 0.0
  %1033 = vmatpush1.xpose.msra.mxu0 0.0
  %1034 = vmatprep.subr.mxu0 0.0
  %1035 = vmatpush1.xpose.msra.mxu0 0.0
  %1036 = vmatprep.subr.mxu0 0.0
  %1037 = vmatpush1.xpose.msra.mxu0 0.0
  %1038 = vmatprep.subr.mxu0 0.0
  %1039 = vmatpush1.xpose.msra.mxu0 0.0
  %1040 = vmatprep.subr.mxu0 0.0
  %1041 = vmatpush1.xpose.msra.mxu0 0.0
  %1042 = vmatprep.subr.mxu0 0.0
  %1043 = vmatpush1.xpose.msra.mxu0 0.0
  %1044 = vmatprep.subr.mxu0 0.0
  %1045 = vmatpush1.xpose.msra.mxu0 0.0
  %1046 = vmatprep.subr.mxu0 0.0
  %1047 = vmatpush1.xpose.msra.mxu0 0.0
  %1048 = vmatprep.subr.mxu0 0.0
  %1049 = vmatpush1.xpose.msra.mxu0 0.0
  %1050 = vmatprep.subr.mxu0 0.0
  %1051 = vmatpush1.xpose.msra.mxu0 0.0
  %1052 = vmatprep.subr.mxu0 0.0
  %1053 = vmatpush1.xpose.msra.mxu0 0.0
  %1054 = vmatprep.subr.mxu0 0.0
  %1055 = vmatpush1.xpose.msra.mxu0 0.0
  %1056 = vmatprep.subr.mxu0 0.0
  %1057 = vmatpush1.xpose.msra.mxu0 0.0
  %1058 = vmatprep.subr.mxu0 0.0
  %1059 = vmatpush1.xpose.msra.mxu0 0.0
  %1060 = vmatprep.subr.mxu0 0.0
  %1061 = vmatpush1.xpose.msra.mxu0 0.0
  %1062 = vmatprep.subr.mxu0 0.0
  %1063 = vmatpush1.xpose.msra.mxu0 0.0
  %1064 = vmatprep.subr.mxu0 0.0
  %1065 = vmatpush1.xpose.msra.mxu0 0.0
  %1066 = vmatprep.mubr.f32.mxu0 0.0
  %1067 = vmatmul.mubr.f32.gmra.mrb[0].mxu0 %v998
  %v1068 = vpop.f32.mrb[0].mxu0
  %v1069 = vadd.f32 0.0, %v1068
  %v1070 = vpop.f32.mrb[0].mxu0
  %1071 = vdwg.mxu0
  %v1072 = vmul.f32 %v991, 0.35355338
  %v1073 = vmul.f32 %v1069, 0.35355338
  %v1074 = vadd.f32 %v1072, %v489
  %v1075 = vadd.f32 %v1073, %v490
  %v1076 = vsel %vm586, %v1074, -inf
  %1077 = vmax.xlane.f32.xlu0 %v1076
  %v1078 = vpop.xlane.xlu0 %1077
  %v1079 = vsel %vm586, %v1075, -inf
  %1080 = vmax.xlane.f32.xlu0 %v1079
  %v1081 = vpop.xlane.xlu0 %1080
  %v1082 = vsub.f32 %v1074, %v1078
  %v1083 = vsub.f32 %v1075, %v1081
  %v1084 = vmul.f32 %v1082, 1.442695
  %v1085 = vpow.pop %v1084
  %v1086 = vmul.f32 %v1083, 1.442695
  %v1087 = vpow.pop %v1086
  %v1088 = vsel %vm586, %v1085, 0.0
  %1089 = vadd.xlane.f32.xlu0 %v1088
  %v1090 = vpop.xlane.xlu0 %1089
  %v1091 = vsel %vm586, %v1087, 0.0
  %1092 = vadd.xlane.f32.xlu0 %v1091
  %v1093 = vpop.xlane.xlu0 %1092
  %v1094 = vrcp.pop %v1090
  %v1095 = vrcp.pop %v1093
  %v1096 = vmul.f32 %v1085, %v1094
  %v1097 = vmul.f32 %v1087, %v1095
  %1098 = vrot.lane.b32.xlu0 %v575, 56
  %v1099 = vpop.permute.xlu0 %1098
  %v1102 = vsel %vm586, %v1096, 0
  %1104 = vmatprep.subr.mxu0 0.0
  %1105 = vmatpush1.msra.mxu0 %v1099
  %1106 = vmatprep.subr.mxu0 0.0
  %1107 = vmatpush1.msra.mxu0 0.0
  %1108 = vmatprep.subr.mxu0 0.0
  %1109 = vmatpush1.msra.mxu0 0.0
  %1110 = vmatprep.subr.mxu0 0.0
  %1111 = vmatpush1.msra.mxu0 0.0
  %1112 = vmatprep.subr.mxu0 0.0
  %1113 = vmatpush1.msra.mxu0 0.0
  %1114 = vmatprep.subr.mxu0 0.0
  %1115 = vmatpush1.msra.mxu0 0.0
  %1116 = vmatprep.subr.mxu0 0.0
  %1117 = vmatpush1.msra.mxu0 0.0
  %1118 = vmatprep.subr.mxu0 0.0
  %1119 = vmatpush1.msra.mxu0 0.0
  %1120 = vmatprep.subr.mxu0 0.0
  %1121 = vmatpush1.msra.mxu0 0.0
  %1122 = vmatprep.subr.mxu0 0.0
  %1123 = vmatpush1.msra.mxu0 0.0
  %1124 = vmatprep.subr.mxu0 0.0
  %1125 = vmatpush1.msra.mxu0 0.0
  %1126 = vmatprep.subr.mxu0 0.0
  %1127 = vmatpush1.msra.mxu0 0.0
  %1128 = vmatprep.subr.mxu0 0.0
  %1129 = vmatpush1.msra.mxu0 0.0
  %1130 = vmatprep.subr.mxu0 0.0
  %1131 = vmatpush1.msra.mxu0 0.0
  %1132 = vmatprep.subr.mxu0 0.0
  %1133 = vmatpush1.msra.mxu0 0.0
  %1134 = vmatprep.subr.mxu0 0.0
  %1135 = vmatpush1.msra.mxu0 0.0
  %1136 = vmatprep.subr.mxu0 0.0
  %1137 = vmatpush1.msra.mxu0 0.0
  %1138 = vmatprep.subr.mxu0 0.0
  %1139 = vmatpush1.msra.mxu0 0.0
  %1140 = vmatprep.subr.mxu0 0.0
  %1141 = vmatpush1.msra.mxu0 0.0
  %1142 = vmatprep.subr.mxu0 0.0
  %1143 = vmatpush1.msra.mxu0 0.0
  %1144 = vmatprep.subr.mxu0 0.0
  %1145 = vmatpush1.msra.mxu0 0.0
  %1146 = vmatprep.subr.mxu0 0.0
  %1147 = vmatpush1.msra.mxu0 0.0
  %1148 = vmatprep.subr.mxu0 0.0
  %1149 = vmatpush1.msra.mxu0 0.0
  %1150 = vmatprep.subr.mxu0 0.0
  %1151 = vmatpush1.msra.mxu0 0.0
  %1152 = vmatprep.subr.mxu0 0.0
  %1153 = vmatpush1.msra.mxu0 0.0
  %1154 = vmatprep.subr.mxu0 0.0
  %1155 = vmatpush1.msra.mxu0 0.0
  %1156 = vmatprep.subr.mxu0 0.0
  %1157 = vmatpush1.msra.mxu0 0.0
  %1158 = vmatprep.subr.mxu0 0.0
  %1159 = vmatpush1.msra.mxu0 0.0
  %1160 = vmatprep.subr.mxu0 0.0
  %1161 = vmatpush1.msra.mxu0 0.0
  %1162 = vmatprep.subr.mxu0 0.0
  %1163 = vmatpush1.msra.mxu0 0.0
  %1164 = vmatprep.subr.mxu0 0.0
  %1165 = vmatpush1.msra.mxu0 0.0
  %1166 = vmatprep.subr.mxu0 0.0
  %1167 = vmatpush1.msra.mxu0 0.0
  %1168 = vmatprep.mubr.f32.mxu0 0.0
  %1169 = vmatmul.mubr.f32.gmra.mrb[0].mxu0 %v1102
  %v1170 = vpop.f32.mrb[0].mxu0
  %v1171 = vadd.f32 0.0, %v1170
  %v1172 = vpop.f32.mrb[0].mxu0
  %1173 = vdwg.mxu0
  %1174 = vrot.lane.b32.xlu0 %v580, 56
  %v1175 = vpop.permute.xlu0 %1174
  %v1178 = vsel %vm586, %v1097, 0
  %1180 = vmatprep.subr.mxu0 0.0
  %1181 = vmatpush1.msra.mxu0 %v1175
  %1182 = vmatprep.subr.mxu0 0.0
  %1183 = vmatpush1.msra.mxu0 0.0
  %1184 = vmatprep.subr.mxu0 0.0
  %1185 = vmatpush1.msra.mxu0 0.0
  %1186 = vmatprep.subr.mxu0 0.0
  %1187 = vmatpush1.msra.mxu0 0.0
  %1188 = vmatprep.subr.mxu0 0.0
  %1189 = vmatpush1.msra.mxu0 0.0
  %1190 = vmatprep.subr.mxu0 0.0
  %1191 = vmatpush1.msra.mxu0 0.0
  %1192 = vmatprep.subr.mxu0 0.0
  %1193 = vmatpush1.msra.mxu0 0.0
  %1194 = vmatprep.subr.mxu0 0.0
  %1195 = vmatpush1.msra.mxu0 0.0
  %1196 = vmatprep.subr.mxu0 0.0
  %1197 = vmatpush1.msra.mxu0 0.0
  %1198 = vmatprep.subr.mxu0 0.0
  %1199 = vmatpush1.msra.mxu0 0.0
  %1200 = vmatprep.subr.mxu0 0.0
  %1201 = vmatpush1.msra.mxu0 0.0
  %1202 = vmatprep.subr.mxu0 0.0
  %1203 = vmatpush1.msra.mxu0 0.0
  %1204 = vmatprep.subr.mxu0 0.0
  %1205 = vmatpush1.msra.mxu0 0.0
  %1206 = vmatprep.subr.mxu0 0.0
  %1207 = vmatpush1.msra.mxu0 0.0
  %1208 = vmatprep.subr.mxu0 0.0
  %1209 = vmatpush1.msra.mxu0 0.0
  %1210 = vmatprep.subr.mxu0 0.0
  %1211 = vmatpush1.msra.mxu0 0.0
  %1212 = vmatprep.subr.mxu0 0.0
  %1213 = vmatpush1.msra.mxu0 0.0
  %1214 = vmatprep.subr.mxu0 0.0
  %1215 = vmatpush1.msra.mxu0 0.0
  %1216 = vmatprep.subr.mxu0 0.0
  %1217 = vmatpush1.msra.mxu0 0.0
  %1218 = vmatprep.subr.mxu0 0.0
  %1219 = vmatpush1.msra.mxu0 0.0
  %1220 = vmatprep.subr.mxu0 0.0
  %1221 = vmatpush1.msra.mxu0 0.0
  %1222 = vmatprep.subr.mxu0 0.0
  %1223 = vmatpush1.msra.mxu0 0.0
  %1224 = vmatprep.subr.mxu0 0.0
  %1225 = vmatpush1.msra.mxu0 0.0
  %1226 = vmatprep.subr.mxu0 0.0
  %1227 = vmatpush1.msra.mxu0 0.0
  %1228 = vmatprep.subr.mxu0 0.0
  %1229 = vmatpush1.msra.mxu0 0.0
  %1230 = vmatprep.subr.mxu0 0.0
  %1231 = vmatpush1.msra.mxu0 0.0
  %1232 = vmatprep.subr.mxu0 0.0
  %1233 = vmatpush1.msra.mxu0 0.0
  %1234 = vmatprep.subr.mxu0 0.0
  %1235 = vmatpush1.msra.mxu0 0.0
  %1236 = vmatprep.subr.mxu0 0.0
  %1237 = vmatpush1.msra.mxu0 0.0
  %1238 = vmatprep.subr.mxu0 0.0
  %1239 = vmatpush1.msra.mxu0 0.0
  %1240 = vmatprep.subr.mxu0 0.0
  %1241 = vmatpush1.msra.mxu0 0.0
  %1242 = vmatprep.subr.mxu0 0.0
  %1243 = vmatpush1.msra.mxu0 0.0
  %1244 = vmatprep.mubr.f32.mxu0 0.0
  %1245 = vmatmul.mubr.f32.gmra.mrb[0].mxu0 %v1178
  %v1246 = vpop.f32.mrb[0].mxu0
  %v1247 = vadd.f32 0.0, %v1246
  %v1248 = vpop.f32.mrb[0].mxu0
  %1249 = vdwg.mxu0
  %1250 = vrot.lane.b32.xlu0 %v575, 112
  %v1251 = vpop.permute.xlu0 %1250
  %1252 = vrot.lane.b32.xlu0 %v575, 80
  %v1253 = vpop.permute.xlu0 %1252
  %v1254 = vsel %vm586, %v1251, 0
  %v1256 = vsel %vm586, %v1253, 0
  %1258 = vmatprep.subr.mxu0 0.0
  %1259 = vmatpush1.xpose.msra.mxu0 %v1256
  %1260 = vmatprep.subr.mxu0 0.0
  %1261 = vmatpush1.xpose.msra.mxu0 0.0
  %1262 = vmatprep.subr.mxu0 0.0
  %1263 = vmatpush1.xpose.msra.mxu0 0.0
  %1264 = vmatprep.subr.mxu0 0.0
  %1265 = vmatpush1.xpose.msra.mxu0 0.0
  %1266 = vmatprep.subr.mxu0 0.0
  %1267 = vmatpush1.xpose.msra.mxu0 0.0
  %1268 = vmatprep.subr.mxu0 0.0
  %1269 = vmatpush1.xpose.msra.mxu0 0.0
  %1270 = vmatprep.subr.mxu0 0.0
  %1271 = vmatpush1.xpose.msra.mxu0 0.0
  %1272 = vmatprep.subr.mxu0 0.0
  %1273 = vmatpush1.xpose.msra.mxu0 0.0
  %1274 = vmatprep.subr.mxu0 0.0
  %1275 = vmatpush1.xpose.msra.mxu0 0.0
  %1276 = vmatprep.subr.mxu0 0.0
  %1277 = vmatpush1.xpose.msra.mxu0 0.0
  %1278 = vmatprep.subr.mxu0 0.0
  %1279 = vmatpush1.xpose.msra.mxu0 0.0
  %1280 = vmatprep.subr.mxu0 0.0
  %1281 = vmatpush1.xpose.msra.mxu0 0.0
  %1282 = vmatprep.subr.mxu0 0.0
  %1283 = vmatpush1.xpose.msra.mxu0 0.0
  %1284 = vmatprep.subr.mxu0 0.0
  %1285 = vmatpush1.xpose.msra.mxu0 0.0
  %1286 = vmatprep.subr.mxu0 0.0
  %1287 = vmatpush1.xpose.msra.mxu0 0.0
  %1288 = vmatprep.subr.mxu0 0.0
  %1289 = vmatpush1.xpose.msra.mxu0 0.0
  %1290 = vmatprep.subr.mxu0 0.0
  %1291 = vmatpush1.xpose.msra.mxu0 0.0
  %1292 = vmatprep.subr.mxu0 0.0
  %1293 = vmatpush1.xpose.msra.mxu0 0.0
  %1294 = vmatprep.subr.mxu0 0.0
  %1295 = vmatpush1.xpose.msra.mxu0 0.0
  %1296 = vmatprep.subr.mxu0 0.0
  %1297 = vmatpush1.xpose.msra.mxu0 0.0
  %1298 = vmatprep.subr.mxu0 0.0
  %1299 = vmatpush1.xpose.msra.mxu0 0.0
  %1300 = vmatprep.subr.mxu0 0.0
  %1301 = vmatpush1.xpose.msra.mxu0 0.0
  %1302 = vmatprep.subr.mxu0 0.0
  %1303 = vmatpush1.xpose.msra.mxu0 0.0
  %1304 = vmatprep.subr.mxu0 0.0
  %1305 = vmatpush1.xpose.msra.mxu0 0.0
  %1306 = vmatprep.subr.mxu0 0.0
  %1307 = vmatpush1.xpose.msra.mxu0 0.0
  %1308 = vmatprep.subr.mxu0 0.0
  %1309 = vmatpush1.xpose.msra.mxu0 0.0
  %1310 = vmatprep.subr.mxu0 0.0
  %1311 = vmatpush1.xpose.msra.mxu0 0.0
  %1312 = vmatprep.subr.mxu0 0.0
  %1313 = vmatpush1.xpose.msra.mxu0 0.0
  %1314 = vmatprep.subr.mxu0 0.0
  %1315 = vmatpush1.xpose.msra.mxu0 0.0
  %1316 = vmatprep.subr.mxu0 0.0
  %1317 = vmatpush1.xpose.msra.mxu0 0.0
  %1318 = vmatprep.subr.mxu0 0.0
  %1319 = vmatpush1.xpose.msra.mxu0 0.0
  %1320 = vmatprep.subr.mxu0 0.0
  %1321 = vmatpush1.xpose.msra.mxu0 0.0
  %1322 = vmatprep.mubr.f32.mxu0 0.0
  %1323 = vmatmul.mubr.f32.gmra.mrb[0].mxu0 %v1254
  %v1324 = vpop.f32.mrb[0].mxu0
  %v1325 = vadd.f32 0.0, %v1324
  %v1326 = vpop.f32.mrb[0].mxu0
  %1327 = vdwg.mxu0
  %1328 = vrot.lane.b32.xlu0 %v580, 112
  %v1329 = vpop.permute.xlu0 %1328
  %1330 = vrot.lane.b32.xlu0 %v580, 80
  %v1331 = vpop.permute.xlu0 %1330
  %v1332 = vsel %vm586, %v1329, 0
  %v1334 = vsel %vm586, %v1331, 0
  %1336 = vmatprep.subr.mxu0 0.0
  %1337 = vmatpush1.xpose.msra.mxu0 %v1334
  %1338 = vmatprep.subr.mxu0 0.0
  %1339 = vmatpush1.xpose.msra.mxu0 0.0
  %1340 = vmatprep.subr.mxu0 0.0
  %1341 = vmatpush1.xpose.msra.mxu0 0.0
  %1342 = vmatprep.subr.mxu0 0.0
  %1343 = vmatpush1.xpose.msra.mxu0 0.0
  %1344 = vmatprep.subr.mxu0 0.0
  %1345 = vmatpush1.xpose.msra.mxu0 0.0
  %1346 = vmatprep.subr.mxu0 0.0
  %1347 = vmatpush1.xpose.msra.mxu0 0.0
  %1348 = vmatprep.subr.mxu0 0.0
  %1349 = vmatpush1.xpose.msra.mxu0 0.0
  %1350 = vmatprep.subr.mxu0 0.0
  %1351 = vmatpush1.xpose.msra.mxu0 0.0
  %1352 = vmatprep.subr.mxu0 0.0
  %1353 = vmatpush1.xpose.msra.mxu0 0.0
  %1354 = vmatprep.subr.mxu0 0.0
  %1355 = vmatpush1.xpose.msra.mxu0 0.0
  %1356 = vmatprep.subr.mxu0 0.0
  %1357 = vmatpush1.xpose.msra.mxu0 0.0
  %1358 = vmatprep.subr.mxu0 0.0
  %1359 = vmatpush1.xpose.msra.mxu0 0.0
  %1360 = vmatprep.subr.mxu0 0.0
  %1361 = vmatpush1.xpose.msra.mxu0 0.0
  %1362 = vmatprep.subr.mxu0 0.0
  %1363 = vmatpush1.xpose.msra.mxu0 0.0
  %1364 = vmatprep.subr.mxu0 0.0
  %1365 = vmatpush1.xpose.msra.mxu0 0.0
  %1366 = vmatprep.subr.mxu0 0.0
  %1367 = vmatpush1.xpose.msra.mxu0 0.0
  %1368 = vmatprep.subr.mxu0 0.0
  %1369 = vmatpush1.xpose.msra.mxu0 0.0
  %1370 = vmatprep.subr.mxu0 0.0
  %1371 = vmatpush1.xpose.msra.mxu0 0.0
  %1372 = vmatprep.subr.mxu0 0.0
  %1373 = vmatpush1.xpose.msra.mxu0 0.0
  %1374 = vmatprep.subr.mxu0 0.0
  %1375 = vmatpush1.xpose.msra.mxu0 0.0
  %1376 = vmatprep.subr.mxu0 0.0
  %1377 = vmatpush1.xpose.msra.mxu0 0.0
  %1378 = vmatprep.subr.mxu0 0.0
  %1379 = vmatpush1.xpose.msra.mxu0 0.0
  %1380 = vmatprep.subr.mxu0 0.0
  %1381 = vmatpush1.xpose.msra.mxu0 0.0
  %1382 = vmatprep.subr.mxu0 0.0
  %1383 = vmatpush1.xpose.msra.mxu0 0.0
  %1384 = vmatprep.subr.mxu0 0.0
  %1385 = vmatpush1.xpose.msra.mxu0 0.0
  %1386 = vmatprep.subr.mxu0 0.0
  %1387 = vmatpush1.xpose.msra.mxu0 0.0
  %1388 = vmatprep.subr.mxu0 0.0
  %1389 = vmatpush1.xpose.msra.mxu0 0.0
  %1390 = vmatprep.subr.mxu0 0.0
  %1391 = vmatpush1.xpose.msra.mxu0 0.0
  %1392 = vmatprep.subr.mxu0 0.0
  %1393 = vmatpush1.xpose.msra.mxu0 0.0
  %1394 = vmatprep.subr.mxu0 0.0
  %1395 = vmatpush1.xpose.msra.mxu0 0.0
  %1396 = vmatprep.subr.mxu0 0.0
  %1397 = vmatpush1.xpose.msra.mxu0 0.0
  %1398 = vmatprep.subr.mxu0 0.0
  %1399 = vmatpush1.xpose.msra.mxu0 0.0
  %1400 = vmatprep.mubr.f32.mxu0 0.0
  %1401 = vmatmul.mubr.f32.gmra.mrb[0].mxu0 %v1332
  %v1402 = vpop.f32.mrb[0].mxu0
  %v1403 = vadd.f32 0.0, %v1402
  %v1404 = vpop.f32.mrb[0].mxu0
  %1405 = vdwg.mxu0
  %v1406 = vmul.f32 %v1325, 0.35355338
  %v1407 = vmul.f32 %v1403, 0.35355338
  %v1408 = vadd.f32 %v1406, %v489
  %v1409 = vadd.f32 %v1407, %v490
  %v1410 = vsel %vm586, %v1408, -inf
  %1411 = vmax.xlane.f32.xlu0 %v1410
  %v1412 = vpop.xlane.xlu0 %1411
  %v1413 = vsel %vm586, %v1409, -inf
  %1414 = vmax.xlane.f32.xlu0 %v1413
  %v1415 = vpop.xlane.xlu0 %1414
  %v1416 = vsub.f32 %v1408, %v1412
  %v1417 = vsub.f32 %v1409, %v1415
  %v1418 = vmul.f32 %v1416, 1.442695
  %v1419 = vpow.pop %v1418
  %v1420 = vmul.f32 %v1417, 1.442695
  %v1421 = vpow.pop %v1420
  %v1422 = vsel %vm586, %v1419, 0.0
  %1423 = vadd.xlane.f32.xlu0 %v1422
  %v1424 = vpop.xlane.xlu0 %1423
  %v1425 = vsel %vm586, %v1421, 0.0
  %1426 = vadd.xlane.f32.xlu0 %v1425
  %v1427 = vpop.xlane.xlu0 %1426
  %v1428 = vrcp.pop %v1424
  %v1429 = vrcp.pop %v1427
  %v1430 = vmul.f32 %v1419, %v1428
  %v1431 = vmul.f32 %v1421, %v1429
  %1432 = vrot.lane.b32.xlu0 %v575, 48
  %v1433 = vpop.permute.xlu0 %1432
  %v1436 = vsel %vm586, %v1430, 0
  %1438 = vmatprep.subr.mxu0 0.0
  %1439 = vmatpush1.msra.mxu0 %v1433
  %1440 = vmatprep.subr.mxu0 0.0
  %1441 = vmatpush1.msra.mxu0 0.0
  %1442 = vmatprep.subr.mxu0 0.0
  %1443 = vmatpush1.msra.mxu0 0.0
  %1444 = vmatprep.subr.mxu0 0.0
  %1445 = vmatpush1.msra.mxu0 0.0
  %1446 = vmatprep.subr.mxu0 0.0
  %1447 = vmatpush1.msra.mxu0 0.0
  %1448 = vmatprep.subr.mxu0 0.0
  %1449 = vmatpush1.msra.mxu0 0.0
  %1450 = vmatprep.subr.mxu0 0.0
  %1451 = vmatpush1.msra.mxu0 0.0
  %1452 = vmatprep.subr.mxu0 0.0
  %1453 = vmatpush1.msra.mxu0 0.0
  %1454 = vmatprep.subr.mxu0 0.0
  %1455 = vmatpush1.msra.mxu0 0.0
  %1456 = vmatprep.subr.mxu0 0.0
  %1457 = vmatpush1.msra.mxu0 0.0
  %1458 = vmatprep.subr.mxu0 0.0
  %1459 = vmatpush1.msra.mxu0 0.0
  %1460 = vmatprep.subr.mxu0 0.0
  %1461 = vmatpush1.msra.mxu0 0.0
  %1462 = vmatprep.subr.mxu0 0.0
  %1463 = vmatpush1.msra.mxu0 0.0
  %1464 = vmatprep.subr.mxu0 0.0
  %1465 = vmatpush1.msra.mxu0 0.0
  %1466 = vmatprep.subr.mxu0 0.0
  %1467 = vmatpush1.msra.mxu0 0.0
  %1468 = vmatprep.subr.mxu0 0.0
  %1469 = vmatpush1.msra.mxu0 0.0
  %1470 = vmatprep.subr.mxu0 0.0
  %1471 = vmatpush1.msra.mxu0 0.0
  %1472 = vmatprep.subr.mxu0 0.0
  %1473 = vmatpush1.msra.mxu0 0.0
  %1474 = vmatprep.subr.mxu0 0.0
  %1475 = vmatpush1.msra.mxu0 0.0
  %1476 = vmatprep.subr.mxu0 0.0
  %1477 = vmatpush1.msra.mxu0 0.0
  %1478 = vmatprep.subr.mxu0 0.0
  %1479 = vmatpush1.msra.mxu0 0.0
  %1480 = vmatprep.subr.mxu0 0.0
  %1481 = vmatpush1.msra.mxu0 0.0
  %1482 = vmatprep.subr.mxu0 0.0
  %1483 = vmatpush1.msra.mxu0 0.0
  %1484 = vmatprep.subr.mxu0 0.0
  %1485 = vmatpush1.msra.mxu0 0.0
  %1486 = vmatprep.subr.mxu0 0.0
  %1487 = vmatpush1.msra.mxu0 0.0
  %1488 = vmatprep.subr.mxu0 0.0
  %1489 = vmatpush1.msra.mxu0 0.0
  %1490 = vmatprep.subr.mxu0 0.0
  %1491 = vmatpush1.msra.mxu0 0.0
  %1492 = vmatprep.subr.mxu0 0.0
  %1493 = vmatpush1.msra.mxu0 0.0
  %1494 = vmatprep.subr.mxu0 0.0
  %1495 = vmatpush1.msra.mxu0 0.0
  %1496 = vmatprep.subr.mxu0 0.0
  %1497 = vmatpush1.msra.mxu0 0.0
  %1498 = vmatprep.subr.mxu0 0.0
  %1499 = vmatpush1.msra.mxu0 0.0
  %1500 = vmatprep.subr.mxu0 0.0
  %1501 = vmatpush1.msra.mxu0 0.0
  %1502 = vmatprep.mubr.f32.mxu0 0.0
  %1503 = vmatmul.mubr.f32.gmra.mrb[0].mxu0 %v1436
  %v1504 = vpop.f32.mrb[0].mxu0
  %v1505 = vadd.f32 0.0, %v1504
  %v1506 = vpop.f32.mrb[0].mxu0
  %1507 = vdwg.mxu0
  %1508 = vrot.lane.b32.xlu0 %v580, 48
  %v1509 = vpop.permute.xlu0 %1508
  %v1512 = vsel %vm586, %v1431, 0
  %1514 = vmatprep.subr.mxu0 0.0
  %1515 = vmatpush1.msra.mxu0 %v1509
  %1516 = vmatprep.subr.mxu0 0.0
  %1517 = vmatpush1.msra.mxu0 0.0
  %1518 = vmatprep.subr.mxu0 0.0
  %1519 = vmatpush1.msra.mxu0 0.0
  %1520 = vmatprep.subr.mxu0 0.0
  %1521 = vmatpush1.msra.mxu0 0.0
  %1522 = vmatprep.subr.mxu0 0.0
  %1523 = vmatpush1.msra.mxu0 0.0
  %1524 = vmatprep.subr.mxu0 0.0
  %1525 = vmatpush1.msra.mxu0 0.0
  %1526 = vmatprep.subr.mxu0 0.0
  %1527 = vmatpush1.msra.mxu0 0.0
  %1528 = vmatprep.subr.mxu0 0.0
  %1529 = vmatpush1.msra.mxu0 0.0
  %1530 = vmatprep.subr.mxu0 0.0
  %1531 = vmatpush1.msra.mxu0 0.0
  %1532 = vmatprep.subr.mxu0 0.0
  %1533 = vmatpush1.msra.mxu0 0.0
  %1534 = vmatprep.subr.mxu0 0.0
  %1535 = vmatpush1.msra.mxu0 0.0
  %1536 = vmatprep.subr.mxu0 0.0
  %1537 = vmatpush1.msra.mxu0 0.0
  %1538 = vmatprep.subr.mxu0 0.0
  %1539 = vmatpush1.msra.mxu0 0.0
  %1540 = vmatprep.subr.mxu0 0.0
  %1541 = vmatpush1.msra.mxu0 0.0
  %1542 = vmatprep.subr.mxu0 0.0
  %1543 = vmatpush1.msra.mxu0 0.0
  %1544 = vmatprep.subr.mxu0 0.0
  %1545 = vmatpush1.msra.mxu0 0.0
  %1546 = vmatprep.subr.mxu0 0.0
  %1547 = vmatpush1.msra.mxu0 0.0
  %1548 = vmatprep.subr.mxu0 0.0
  %1549 = vmatpush1.msra.mxu0 0.0
  %1550 = vmatprep.subr.mxu0 0.0
  %1551 = vmatpush1.msra.mxu0 0.0
  %1552 = vmatprep.subr.mxu0 0.0
  %1553 = vmatpush1.msra.mxu0 0.0
  %1554 = vmatprep.subr.mxu0 0.0
  %1555 = vmatpush1.msra.mxu0 0.0
  %1556 = vmatprep.subr.mxu0 0.0
  %1557 = vmatpush1.msra.mxu0 0.0
  %1558 = vmatprep.subr.mxu0 0.0
  %1559 = vmatpush1.msra.mxu0 0.0
  %1560 = vmatprep.subr.mxu0 0.0
  %1561 = vmatpush1.msra.mxu0 0.0
  %1562 = vmatprep.subr.mxu0 0.0
  %1563 = vmatpush1.msra.mxu0 0.0
  %1564 = vmatprep.subr.mxu0 0.0
  %1565 = vmatpush1.msra.mxu0 0.0
  %1566 = vmatprep.subr.mxu0 0.0
  %1567 = vmatpush1.msra.mxu0 0.0
  %1568 = vmatprep.subr.mxu0 0.0
  %1569 = vmatpush1.msra.mxu0 0.0
  %1570 = vmatprep.subr.mxu0 0.0
  %1571 = vmatpush1.msra.mxu0 0.0
  %1572 = vmatprep.subr.mxu0 0.0
  %1573 = vmatpush1.msra.mxu0 0.0
  %1574 = vmatprep.subr.mxu0 0.0
  %1575 = vmatpush1.msra.mxu0 0.0
  %1576 = vmatprep.subr.mxu0 0.0
  %1577 = vmatpush1.msra.mxu0 0.0
  %1578 = vmatprep.mubr.f32.mxu0 0.0
  %1579 = vmatmul.mubr.f32.gmra.mrb[0].mxu0 %v1512
  %v1580 = vpop.f32.mrb[0].mxu0
  %v1581 = vadd.f32 0.0, %v1580
  %v1582 = vpop.f32.mrb[0].mxu0
  %1583 = vdwg.mxu0
  %1584 = vrot.lane.b32.xlu0 %v575, 104
  %v1585 = vpop.permute.xlu0 %1584
  %1586 = vrot.lane.b32.xlu0 %v575, 72
  %v1587 = vpop.permute.xlu0 %1586
  %v1588 = vsel %vm586, %v1585, 0
  %v1590 = vsel %vm586, %v1587, 0
  %1592 = vmatprep.subr.mxu0 0.0
  %1593 = vmatpush1.xpose.msra.mxu0 %v1590
  %1594 = vmatprep.subr.mxu0 0.0
  %1595 = vmatpush1.xpose.msra.mxu0 0.0
  %1596 = vmatprep.subr.mxu0 0.0
  %1597 = vmatpush1.xpose.msra.mxu0 0.0
  %1598 = vmatprep.subr.mxu0 0.0
  %1599 = vmatpush1.xpose.msra.mxu0 0.0
  %1600 = vmatprep.subr.mxu0 0.0
  %1601 = vmatpush1.xpose.msra.mxu0 0.0
  %1602 = vmatprep.subr.mxu0 0.0
  %1603 = vmatpush1.xpose.msra.mxu0 0.0
  %1604 = vmatprep.subr.mxu0 0.0
  %1605 = vmatpush1.xpose.msra.mxu0 0.0
  %1606 = vmatprep.subr.mxu0 0.0
  %1607 = vmatpush1.xpose.msra.mxu0 0.0
  %1608 = vmatprep.subr.mxu0 0.0
  %1609 = vmatpush1.xpose.msra.mxu0 0.0
  %1610 = vmatprep.subr.mxu0 0.0
  %1611 = vmatpush1.xpose.msra.mxu0 0.0
  %1612 = vmatprep.subr.mxu0 0.0
  %1613 = vmatpush1.xpose.msra.mxu0 0.0
  %1614 = vmatprep.subr.mxu0 0.0
  %1615 = vmatpush1.xpose.msra.mxu0 0.0
  %1616 = vmatprep.subr.mxu0 0.0
  %1617 = vmatpush1.xpose.msra.mxu0 0.0
  %1618 = vmatprep.subr.mxu0 0.0
  %1619 = vmatpush1.xpose.msra.mxu0 0.0
  %1620 = vmatprep.subr.mxu0 0.0
  %1621 = vmatpush1.xpose.msra.mxu0 0.0
  %1622 = vmatprep.subr.mxu0 0.0
  %1623 = vmatpush1.xpose.msra.mxu0 0.0
  %1624 = vmatprep.subr.mxu0 0.0
  %1625 = vmatpush1.xpose.msra.mxu0 0.0
  %1626 = vmatprep.subr.mxu0 0.0
  %1627 = vmatpush1.xpose.msra.mxu0 0.0
  %1628 = vmatprep.subr.mxu0 0.0
  %1629 = vmatpush1.xpose.msra.mxu0 0.0
  %1630 = vmatprep.subr.mxu0 0.0
  %1631 = vmatpush1.xpose.msra.mxu0 0.0
  %1632 = vmatprep.subr.mxu0 0.0
  %1633 = vmatpush1.xpose.msra.mxu0 0.0
  %1634 = vmatprep.subr.mxu0 0.0
  %1635 = vmatpush1.xpose.msra.mxu0 0.0
  %1636 = vmatprep.subr.mxu0 0.0
  %1637 = vmatpush1.xpose.msra.mxu0 0.0
  %1638 = vmatprep.subr.mxu0 0.0
  %1639 = vmatpush1.xpose.msra.mxu0 0.0
  %1640 = vmatprep.subr.mxu0 0.0
  %1641 = vmatpush1.xpose.msra.mxu0 0.0
  %1642 = vmatprep.subr.mxu0 0.0
  %1643 = vmatpush1.xpose.msra.mxu0 0.0
  %1644 = vmatprep.subr.mxu0 0.0
  %1645 = vmatpush1.xpose.msra.mxu0 0.0
  %1646 = vmatprep.subr.mxu0 0.0
  %1647 = vmatpush1.xpose.msra.mxu0 0.0
  %1648 = vmatprep.subr.mxu0 0.0
  %1649 = vmatpush1.xpose.msra.mxu0 0.0
  %1650 = vmatprep.subr.mxu0 0.0
  %1651 = vmatpush1.xpose.msra.mxu0 0.0
  %1652 = vmatprep.subr.mxu0 0.0
  %1653 = vmatpush1.xpose.msra.mxu0 0.0
  %1654 = vmatprep.subr.mxu0 0.0
  %1655 = vmatpush1.xpose.msra.mxu0 0.0
  %1656 = vmatprep.mubr.f32.mxu0 0.0
  %1657 = vmatmul.mubr.f32.gmra.mrb[0].mxu0 %v1588
  %v1658 = vpop.f32.mrb[0].mxu0
  %v1659 = vadd.f32 0.0, %v1658
  %v1660 = vpop.f32.mrb[0].mxu0
  %1661 = vdwg.mxu0
  %1662 = vrot.lane.b32.xlu0 %v580, 104
  %v1663 = vpop.permute.xlu0 %1662
  %1664 = vrot.lane.b32.xlu0 %v580, 72
  %v1665 = vpop.permute.xlu0 %1664
  %v1666 = vsel %vm586, %v1663, 0
  %v1668 = vsel %vm586, %v1665, 0
  %1670 = vmatprep.subr.mxu0 0.0
  %1671 = vmatpush1.xpose.msra.mxu0 %v1668
  %1672 = vmatprep.subr.mxu0 0.0
  %1673 = vmatpush1.xpose.msra.mxu0 0.0
  %1674 = vmatprep.subr.mxu0 0.0
  %1675 = vmatpush1.xpose.msra.mxu0 0.0
  %1676 = vmatprep.subr.mxu0 0.0
  %1677 = vmatpush1.xpose.msra.mxu0 0.0
  %1678 = vmatprep.subr.mxu0 0.0
  %1679 = vmatpush1.xpose.msra.mxu0 0.0
  %1680 = vmatprep.subr.mxu0 0.0
  %1681 = vmatpush1.xpose.msra.mxu0 0.0
  %1682 = vmatprep.subr.mxu0 0.0
  %1683 = vmatpush1.xpose.msra.mxu0 0.0
  %1684 = vmatprep.subr.mxu0 0.0
  %1685 = vmatpush1.xpose.msra.mxu0 0.0
  %1686 = vmatprep.subr.mxu0 0.0
  %1687 = vmatpush1.xpose.msra.mxu0 0.0
  %1688 = vmatprep.subr.mxu0 0.0
  %1689 = vmatpush1.xpose.msra.mxu0 0.0
  %1690 = vmatprep.subr.mxu0 0.0
  %1691 = vmatpush1.xpose.msra.mxu0 0.0
  %1692 = vmatprep.subr.mxu0 0.0
  %1693 = vmatpush1.xpose.msra.mxu0 0.0
  %1694 = vmatprep.subr.mxu0 0.0
  %1695 = vmatpush1.xpose.msra.mxu0 0.0
  %1696 = vmatprep.subr.mxu0 0.0
  %1697 = vmatpush1.xpose.msra.mxu0 0.0
  %1698 = vmatprep.subr.mxu0 0.0
  %1699 = vmatpush1.xpose.msra.mxu0 0.0
  %1700 = vmatprep.subr.mxu0 0.0
  %1701 = vmatpush1.xpose.msra.mxu0 0.0
  %1702 = vmatprep.subr.mxu0 0.0
  %1703 = vmatpush1.xpose.msra.mxu0 0.0
  %1704 = vmatprep.subr.mxu0 0.0
  %1705 = vmatpush1.xpose.msra.mxu0 0.0
  %1706 = vmatprep.subr.mxu0 0.0
  %1707 = vmatpush1.xpose.msra.mxu0 0.0
  %1708 = vmatprep.subr.mxu0 0.0
  %1709 = vmatpush1.xpose.msra.mxu0 0.0
  %1710 = vmatprep.subr.mxu0 0.0
  %1711 = vmatpush1.xpose.msra.mxu0 0.0
  %1712 = vmatprep.subr.mxu0 0.0
  %1713 = vmatpush1.xpose.msra.mxu0 0.0
  %1714 = vmatprep.subr.mxu0 0.0
  %1715 = vmatpush1.xpose.msra.mxu0 0.0
  %1716 = vmatprep.subr.mxu0 0.0
  %1717 = vmatpush1.xpose.msra.mxu0 0.0
  %1718 = vmatprep.subr.mxu0 0.0
  %1719 = vmatpush1.xpose.msra.mxu0 0.0
  %1720 = vmatprep.subr.mxu0 0.0
  %1721 = vmatpush1.xpose.msra.mxu0 0.0
  %1722 = vmatprep.subr.mxu0 0.0
  %1723 = vmatpush1.xpose.msra.mxu0 0.0
  %1724 = vmatprep.subr.mxu0 0.0
  %1725 = vmatpush1.xpose.msra.mxu0 0.0
  %1726 = vmatprep.subr.mxu0 0.0
  %1727 = vmatpush1.xpose.msra.mxu0 0.0
  %1728 = vmatprep.subr.mxu0 0.0
  %1729 = vmatpush1.xpose.msra.mxu0 0.0
  %1730 = vmatprep.subr.mxu0 0.0
  %1731 = vmatpush1.xpose.msra.mxu0 0.0
  %1732 = vmatprep.subr.mxu0 0.0
  %1733 = vmatpush1.xpose.msra.mxu0 0.0
  %1734 = vmatprep.mubr.f32.mxu0 0.0
  %1735 = vmatmul.mubr.f32.gmra.mrb[0].mxu0 %v1666
  %v1736 = vpop.f32.mrb[0].mxu0
  %v1737 = vadd.f32 0.0, %v1736
  %v1738 = vpop.f32.mrb[0].mxu0
  %1739 = vdwg.mxu0
  %v1740 = vmul.f32 %v1659, 0.35355338
  %v1741 = vmul.f32 %v1737, 0.35355338
  %v1742 = vadd.f32 %v1740, %v489
  %v1743 = vadd.f32 %v1741, %v490
  %v1744 = vsel %vm586, %v1742, -inf
  %1745 = vmax.xlane.f32.xlu0 %v1744
  %v1746 = vpop.xlane.xlu0 %1745
  %v1747 = vsel %vm586, %v1743, -inf
  %1748 = vmax.xlane.f32.xlu0 %v1747
  %v1749 = vpop.xlane.xlu0 %1748
  %v1750 = vsub.f32 %v1742, %v1746
  %v1751 = vsub.f32 %v1743, %v1749
  %v1752 = vmul.f32 %v1750, 1.442695
  %v1753 = vpow.pop %v1752
  %v1754 = vmul.f32 %v1751, 1.442695
  %v1755 = vpow.pop %v1754
  %v1756 = vsel %vm586, %v1753, 0.0
  %1757 = vadd.xlane.f32.xlu0 %v1756
  %v1758 = vpop.xlane.xlu0 %1757
  %v1759 = vsel %vm586, %v1755, 0.0
  %1760 = vadd.xlane.f32.xlu0 %v1759
  %v1761 = vpop.xlane.xlu0 %1760
  %v1762 = vrcp.pop %v1758
  %v1763 = vrcp.pop %v1761
  %v1764 = vmul.f32 %v1753, %v1762
  %v1765 = vmul.f32 %v1755, %v1763
  %1766 = vrot.lane.b32.xlu0 %v575, 40
  %v1767 = vpop.permute.xlu0 %1766
  %v1770 = vsel %vm586, %v1764, 0
  %1772 = vmatprep.subr.mxu0 0.0
  %1773 = vmatpush1.msra.mxu0 %v1767
  %1774 = vmatprep.subr.mxu0 0.0
  %1775 = vmatpush1.msra.mxu0 0.0
  %1776 = vmatprep.subr.mxu0 0.0
  %1777 = vmatpush1.msra.mxu0 0.0
  %1778 = vmatprep.subr.mxu0 0.0
  %1779 = vmatpush1.msra.mxu0 0.0
  %1780 = vmatprep.subr.mxu0 0.0
  %1781 = vmatpush1.msra.mxu0 0.0
  %1782 = vmatprep.subr.mxu0 0.0
  %1783 = vmatpush1.msra.mxu0 0.0
  %1784 = vmatprep.subr.mxu0 0.0
  %1785 = vmatpush1.msra.mxu0 0.0
  %1786 = vmatprep.subr.mxu0 0.0
  %1787 = vmatpush1.msra.mxu0 0.0
  %1788 = vmatprep.subr.mxu0 0.0
  %1789 = vmatpush1.msra.mxu0 0.0
  %1790 = vmatprep.subr.mxu0 0.0
  %1791 = vmatpush1.msra.mxu0 0.0
  %1792 = vmatprep.subr.mxu0 0.0
  %1793 = vmatpush1.msra.mxu0 0.0
  %1794 = vmatprep.subr.mxu0 0.0
  %1795 = vmatpush1.msra.mxu0 0.0
  %1796 = vmatprep.subr.mxu0 0.0
  %1797 = vmatpush1.msra.mxu0 0.0
  %1798 = vmatprep.subr.mxu0 0.0
  %1799 = vmatpush1.msra.mxu0 0.0
  %1800 = vmatprep.subr.mxu0 0.0
  %1801 = vmatpush1.msra.mxu0 0.0
  %1802 = vmatprep.subr.mxu0 0.0
  %1803 = vmatpush1.msra.mxu0 0.0
  %1804 = vmatprep.subr.mxu0 0.0
  %1805 = vmatpush1.msra.mxu0 0.0
  %1806 = vmatprep.subr.mxu0 0.0
  %1807 = vmatpush1.msra.mxu0 0.0
  %1808 = vmatprep.subr.mxu0 0.0
  %1809 = vmatpush1.msra.mxu0 0.0
  %1810 = vmatprep.subr.mxu0 0.0
  %1811 = vmatpush1.msra.mxu0 0.0
  %1812 = vmatprep.subr.mxu0 0.0
  %1813 = vmatpush1.msra.mxu0 0.0
  %1814 = vmatprep.subr.mxu0 0.0
  %1815 = vmatpush1.msra.mxu0 0.0
  %1816 = vmatprep.subr.mxu0 0.0
  %1817 = vmatpush1.msra.mxu0 0.0
  %1818 = vmatprep.subr.mxu0 0.0
  %1819 = vmatpush1.msra.mxu0 0.0
  %1820 = vmatprep.subr.mxu0 0.0
  %1821 = vmatpush1.msra.mxu0 0.0
  %1822 = vmatprep.subr.mxu0 0.0
  %1823 = vmatpush1.msra.mxu0 0.0
  %1824 = vmatprep.subr.mxu0 0.0
  %1825 = vmatpush1.msra.mxu0 0.0
  %1826 = vmatprep.subr.mxu0 0.0
  %1827 = vmatpush1.msra.mxu0 0.0
  %1828 = vmatprep.subr.mxu0 0.0
  %1829 = vmatpush1.msra.mxu0 0.0
  %1830 = vmatprep.subr.mxu0 0.0
  %1831 = vmatpush1.msra.mxu0 0.0
  %1832 = vmatprep.subr.mxu0 0.0
  %1833 = vmatpush1.msra.mxu0 0.0
  %1834 = vmatprep.subr.mxu0 0.0
  %1835 = vmatpush1.msra.mxu0 0.0
  %1836 = vmatprep.mubr.f32.mxu0 0.0
  %1837 = vmatmul.mubr.f32.gmra.mrb[0].mxu0 %v1770
  %v1838 = vpop.f32.mrb[0].mxu0
  %v1839 = vadd.f32 0.0, %v1838
  %v1840 = vpop.f32.mrb[0].mxu0
  %1841 = vdwg.mxu0
  %1842 = vrot.lane.b32.xlu0 %v580, 40
  %v1843 = vpop.permute.xlu0 %1842
  %v1846 = vsel %vm586, %v1765, 0
  %1848 = vmatprep.subr.mxu0 0.0
  %1849 = vmatpush1.msra.mxu0 %v1843
  %1850 = vmatprep.subr.mxu0 0.0
  %1851 = vmatpush1.msra.mxu0 0.0
  %1852 = vmatprep.subr.mxu0 0.0
  %1853 = vmatpush1.msra.mxu0 0.0
  %1854 = vmatprep.subr.mxu0 0.0
  %1855 = vmatpush1.msra.mxu0 0.0
  %1856 = vmatprep.subr.mxu0 0.0
  %1857 = vmatpush1.msra.mxu0 0.0
  %1858 = vmatprep.subr.mxu0 0.0
  %1859 = vmatpush1.msra.mxu0 0.0
  %1860 = vmatprep.subr.mxu0 0.0
  %1861 = vmatpush1.msra.mxu0 0.0
  %1862 = vmatprep.subr.mxu0 0.0
  %1863 = vmatpush1.msra.mxu0 0.0
  %1864 = vmatprep.subr.mxu0 0.0
  %1865 = vmatpush1.msra.mxu0 0.0
  %1866 = vmatprep.subr.mxu0 0.0
  %1867 = vmatpush1.msra.mxu0 0.0
  %1868 = vmatprep.subr.mxu0 0.0
  %1869 = vmatpush1.msra.mxu0 0.0
  %1870 = vmatprep.subr.mxu0 0.0
  %1871 = vmatpush1.msra.mxu0 0.0
  %1872 = vmatprep.subr.mxu0 0.0
  %1873 = vmatpush1.msra.mxu0 0.0
  %1874 = vmatprep.subr.mxu0 0.0
  %1875 = vmatpush1.msra.mxu0 0.0
  %1876 = vmatprep.subr.mxu0 0.0
  %1877 = vmatpush1.msra.mxu0 0.0
  %1878 = vmatprep.subr.mxu0 0.0
  %1879 = vmatpush1.msra.mxu0 0.0
  %1880 = vmatprep.subr.mxu0 0.0
  %1881 = vmatpush1.msra.mxu0 0.0
  %1882 = vmatprep.subr.mxu0 0.0
  %1883 = vmatpush1.msra.mxu0 0.0
  %1884 = vmatprep.subr.mxu0 0.0
  %1885 = vmatpush1.msra.mxu0 0.0
  %1886 = vmatprep.subr.mxu0 0.0
  %1887 = vmatpush1.msra.mxu0 0.0
  %1888 = vmatprep.subr.mxu0 0.0
  %1889 = vmatpush1.msra.mxu0 0.0
  %1890 = vmatprep.subr.mxu0 0.0
  %1891 = vmatpush1.msra.mxu0 0.0
  %1892 = vmatprep.subr.mxu0 0.0
  %1893 = vmatpush1.msra.mxu0 0.0
  %1894 = vmatprep.subr.mxu0 0.0
  %1895 = vmatpush1.msra.mxu0 0.0
  %1896 = vmatprep.subr.mxu0 0.0
  %1897 = vmatpush1.msra.mxu0 0.0
  %1898 = vmatprep.subr.mxu0 0.0
  %1899 = vmatpush1.msra.mxu0 0.0
  %1900 = vmatprep.subr.mxu0 0.0
  %1901 = vmatpush1.msra.mxu0 0.0
  %1902 = vmatprep.subr.mxu0 0.0
  %1903 = vmatpush1.msra.mxu0 0.0
  %1904 = vmatprep.subr.mxu0 0.0
  %1905 = vmatpush1.msra.mxu0 0.0
  %1906 = vmatprep.subr.mxu0 0.0
  %1907 = vmatpush1.msra.mxu0 0.0
  %1908 = vmatprep.subr.mxu0 0.0
  %1909 = vmatpush1.msra.mxu0 0.0
  %1910 = vmatprep.subr.mxu0 0.0
  %1911 = vmatpush1.msra.mxu0 0.0
  %1912 = vmatprep.mubr.f32.mxu0 0.0
  %1913 = vmatmul.mubr.f32.gmra.mrb[0].mxu0 %v1846
  %v1914 = vpop.f32.mrb[0].mxu0
  %v1915 = vadd.f32 0.0, %v1914
  %v1916 = vpop.f32.mrb[0].mxu0
  %1917 = vdwg.mxu0
  %1920 = vrot.lane.b32.xlu0 %v1171, 8
  %v1921 = vpop.permute.xlu0 %1920
  %1922 = vrot.lane.b32.xlu0 %v1247, 8
  %v1923 = vpop.permute.xlu0 %1922
  %1928 = vrot.lane.b32.xlu0 %v1505, 16
  %v1929 = vpop.permute.xlu0 %1928
  %1930 = vrot.lane.b32.xlu0 %v1581, 16
  %v1931 = vpop.permute.xlu0 %1930
  %1936 = vrot.lane.b32.xlu0 %v1839, 24
  %v1937 = vpop.permute.xlu0 %1936
  %1938 = vrot.lane.b32.xlu0 %v1915, 24
  %v1939 = vpop.permute.xlu0 %1938
  %v1942 = vsel %vm586, %v837, %v1921
  %v1943 = vsel %vm586, %v913, %v1923
  %vm1944 = vcmask 130048
  %v1945 = vsel %vm1944, %v1942, %v1929
  %v1946 = vsel %vm1944, %v1943, %v1931
  %vm1947 = vcmask 195584
  %v1948 = vsel %vm1947, %v1945, %v1937
  %v1949 = vsel %vm1947, %v1946, %v1939
  %v1950 = vld [vmem:[%s29] sm:$0xff]
  %v1951 = vld [vmem:[%s29 + $0x8] sm:$0xff]
  %v1952 = vld [vmem:[%s29 + $0x10] sm:$0xff]
  %v1953 = vld [vmem:[%s29 + $0x18] sm:$0xff]
  %v1954 = vld [vmem:[%s31] sm:$0x1]
  %v1956 = vlaneseq
  %v1957 = vshrl.u32 %v1956, 7
  %v1958 = vsub.s32 0, %v1957
  %v1959 = vrot.slane %v1954, %v1958
  %v1962 = vsel %vm349, %v1948, 0
  %v1965 = vsel %vm349, %v1949, 0
  %1967 = vmatprep.subr.mxu0 0.0
  %1968 = vmatpush1.msra.mxu0 %v1950
  %1969 = vmatprep.subr.mxu0 0.0
  %1970 = vmatpush1.msra.mxu0 %v1951
  %1971 = vmatprep.subr.mxu0 0.0
  %1972 = vmatpush1.msra.mxu0 %v1952
  %1973 = vmatprep.subr.mxu0 0.0
  %1974 = vmatpush1.msra.mxu0 %v1953
  %1975 = vmatprep.subr.mxu0 0.0
  %1976 = vmatpush1.msra.mxu0 0.0
  %1977 = vmatprep.subr.mxu0 0.0
  %1978 = vmatpush1.msra.mxu0 0.0
  %1979 = vmatprep.subr.mxu0 0.0
  %1980 = vmatpush1.msra.mxu0 0.0
  %1981 = vmatprep.subr.mxu0 0.0
  %1982 = vmatpush1.msra.mxu0 0.0
  %1983 = vmatprep.subr.mxu0 0.0
  %1984 = vmatpush1.msra.mxu0 0.0
  %1985 = vmatprep.subr.mxu0 0.0
  %1986 = vmatpush1.msra.mxu0 0.0
  %1987 = vmatprep.subr.mxu0 0.0
  %1988 = vmatpush1.msra.mxu0 0.0
  %1989 = vmatprep.subr.mxu0 0.0
  %1990 = vmatpush1.msra.mxu0 0.0
  %1991 = vmatprep.subr.mxu0 0.0
  %1992 = vmatpush1.msra.mxu0 0.0
  %1993 = vmatprep.subr.mxu0 0.0
  %1994 = vmatpush1.msra.mxu0 0.0
  %1995 = vmatprep.subr.mxu0 0.0
  %1996 = vmatpush1.msra.mxu0 0.0
  %1997 = vmatprep.subr.mxu0 0.0
  %1998 = vmatpush1.msra.mxu0 0.0
  %1999 = vmatprep.subr.mxu0 0.0
  %2000 = vmatpush1.msra.mxu0 0.0
  %2001 = vmatprep.subr.mxu0 0.0
  %2002 = vmatpush1.msra.mxu0 0.0
  %2003 = vmatprep.subr.mxu0 0.0
  %2004 = vmatpush1.msra.mxu0 0.0
  %2005 = vmatprep.subr.mxu0 0.0
  %2006 = vmatpush1.msra.mxu0 0.0
  %2007 = vmatprep.subr.mxu0 0.0
  %2008 = vmatpush1.msra.mxu0 0.0
  %2009 = vmatprep.subr.mxu0 0.0
  %2010 = vmatpush1.msra.mxu0 0.0
  %2011 = vmatprep.subr.mxu0 0.0
  %2012 = vmatpush1.msra.mxu0 0.0
  %2013 = vmatprep.subr.mxu0 0.0
  %2014 = vmatpush1.msra.mxu0 0.0
  %2015 = vmatprep.subr.mxu0 0.0
  %2016 = vmatpush1.msra.mxu0 0.0
  %2017 = vmatprep.subr.mxu0 0.0
  %2018 = vmatpush1.msra.mxu0 0.0
  %2019 = vmatprep.subr.mxu0 0.0
  %2020 = vmatpush1.msra.mxu0 0.0
  %2021 = vmatprep.subr.mxu0 0.0
  %2022 = vmatpush1.msra.mxu0 0.0
  %2023 = vmatprep.subr.mxu0 0.0
  %2024 = vmatpush1.msra.mxu0 0.0
  %2025 = vmatprep.subr.mxu0 0.0
  %2026 = vmatpush1.msra.mxu0 0.0
  %2027 = vmatprep.subr.mxu0 0.0
  %2028 = vmatpush1.msra.mxu0 0.0
  %2029 = vmatprep.subr.mxu0 0.0
  %2030 = vmatpush1.msra.mxu0 0.0
  %2031 = vmatprep.mubr.f32.mxu0 0.0
  %2032 = vmatmul.mubr.f32.gmra.mrb[0].mxu0 %v1962
  %v2033 = vpop.f32.mrb[0].mxu0
  %v2034 = vadd.f32 %v1959, %v2033
  %v2035 = vpop.f32.mrb[0].mxu0
  %2036 = vmatprep.mubr.f32.mxu0 0.0
  %2037 = vmatmul.mubr.f32.gmra.mrb[0].mxu0 %v1965
  %v2038 = vpop.f32.mrb[0].mxu0
  %v2039 = vadd.f32 %v1959, %v2038
  %v2040 = vpop.f32.mrb[0].mxu0
  %2041 = vdwg.mxu0
  %v2042 = vadd.f32 %v487, %v2034
  %v2043 = vadd.f32 %v488, %v2039
  %v2044 = vld [vmem:[%s33] sm:$0x1]
  %v2045 = vld [vmem:[%s35] sm:$0x1]
  %v2046 = vsel %vm349, %v2042, 0.0
  %2047 = vadd.xlane.f32.xlu0 %v2046
  %v2048 = vpop.xlane.xlu0 %2047
  %v2049 = vsel %vm349, %v2043, 0.0
  %2050 = vadd.xlane.f32.xlu0 %v2049
  %v2051 = vpop.xlane.xlu0 %2050
  %v2052 = vmul.f32 %v2048, %v356
  %v2053 = vmul.f32 %v2051, %v356
  %v2054 = vsub.f32 %v2042, %v2052
  %v2055 = vsub.f32 %v2043, %v2053
  %v2056 = vmul.f32 %v2054, %v2054
  %v2057 = vmul.f32 %v2055, %v2055
  %v2058 = vsel %vm349, %v2056, 0.0
  %2059 = vadd.xlane.f32.xlu0 %v2058
  %v2060 = vpop.xlane.xlu0 %2059
  %v2061 = vsel %vm349, %v2057, 0.0
  %2062 = vadd.xlane.f32.xlu0 %v2061
  %v2063 = vpop.xlane.xlu0 %2062
  %v2064 = vmul.f32 %v2060, %v356
  %v2065 = vmul.f32 %v2063, %v356
  %v2066 = vadd.f32 %v2064, 1e-05
  %v2067 = vadd.f32 %v2065, 1e-05
  %v2068 = vrsqrt.pop %v2066
  %v2069 = vrsqrt.pop %v2067
  %v2070 = vmul.f32 %v2054, %v2068
  %v2071 = vmul.f32 %v2055, %v2069
  %v2073 = vlaneseq
  %v2074 = vshrl.u32 %v2073, 7
  %v2075 = vsub.s32 0, %v2074
  %v2076 = vrot.slane %v2044, %v2075
  %v2078 = vmul.f32 %v2070, %v2076
  %v2079 = vmul.f32 %v2071, %v2076
  %v2081 = vlaneseq
  %v2082 = vshrl.u32 %v2081, 7
  %v2083 = vsub.s32 0, %v2082
  %v2084 = vrot.slane %v2045, %v2083
  %v2086 = vadd.f32 %v2078, %v2084
  %v2087 = vadd.f32 %v2079, %v2084
  %v2088 = vld [vmem:[%s41] sm:$0xff]
  %v2089 = vld [vmem:[%s41 + $0x8] sm:$0xff]
  %v2090 = vld [vmem:[%s41 + $0x10] sm:$0xff]
  %v2091 = vld [vmem:[%s41 + $0x18] sm:$0xff]
  %v2092 = vld [vmem:[%s43] sm:$0x1]
  %v2094 = vlaneseq
  %v2095 = vshrl.u32 %v2094, 7
  %v2096 = vsub.s32 0, %v2095
  %v2097 = vrot.slane %v2092, %v2096
  %v2100 = vsel %vm349, %v2086, 0
  %v2103 = vsel %vm349, %v2087, 0
  %2105 = vmatprep.subr.mxu0 0.0
  %2106 = vmatpush1.msra.mxu0 %v2088
  %2107 = vmatprep.subr.mxu0 0.0
  %2108 = vmatpush1.msra.mxu0 %v2089
  %2109 = vmatprep.subr.mxu0 0.0
  %2110 = vmatpush1.msra.mxu0 %v2090
  %2111 = vmatprep.subr.mxu0 0.0
  %2112 = vmatpush1.msra.mxu0 %v2091
  %2113 = vmatprep.subr.mxu0 0.0
  %2114 = vmatpush1.msra.mxu0 0.0
  %2115 = vmatprep.subr.mxu0 0.0
  %2116 = vmatpush1.msra.mxu0 0.0
  %2117 = vmatprep.subr.mxu0 0.0
  %2118 = vmatpush1.msra.mxu0 0.0
  %2119 = vmatprep.subr.mxu0 0.0
  %2120 = vmatpush1.msra.mxu0 0.0
  %2121 = vmatprep.subr.mxu0 0.0
  %2122 = vmatpush1.msra.mxu0 0.0
  %2123 = vmatprep.subr.mxu0 0.0
  %2124 = vmatpush1.msra.mxu0 0.0
  %2125 = vmatprep.subr.mxu0 0.0
  %2126 = vmatpush1.msra.mxu0 0.0
  %2127 = vmatprep.subr.mxu0 0.0
  %2128 = vmatpush1.msra.mxu0 0.0
  %2129 = vmatprep.subr.mxu0 0.0
  %2130 = vmatpush1.msra.mxu0 0.0
  %2131 = vmatprep.subr.mxu0 0.0
  %2132 = vmatpush1.msra.mxu0 0.0
  %2133 = vmatprep.subr.mxu0 0.0
  %2134 = vmatpush1.msra.mxu0 0.0
  %2135 = vmatprep.subr.mxu0 0.0
  %2136 = vmatpush1.msra.mxu0 0.0
  %2137 = vmatprep.subr.mxu0 0.0
  %2138 = vmatpush1.msra.mxu0 0.0
  %2139 = vmatprep.subr.mxu0 0.0
  %2140 = vmatpush1.msra.mxu0 0.0
  %2141 = vmatprep.subr.mxu0 0.0
  %2142 = vmatpush1.msra.mxu0 0.0
  %2143 = vmatprep.subr.mxu0 0.0
  %2144 = vmatpush1.msra.mxu0 0.0
  %2145 = vmatprep.subr.mxu0 0.0
  %2146 = vmatpush1.msra.mxu0 0.0
  %2147 = vmatprep.subr.mxu0 0.0
  %2148 = vmatpush1.msra.mxu0 0.0
  %2149 = vmatprep.subr.mxu0 0.0
  %2150 = vmatpush1.msra.mxu0 0.0
  %2151 = vmatprep.subr.mxu0 0.0
  %2152 = vmatpush1.msra.mxu0 0.0
  %2153 = vmatprep.subr.mxu0 0.0
  %2154 = vmatpush1.msra.mxu0 0.0
  %2155 = vmatprep.subr.mxu0 0.0
  %2156 = vmatpush1.msra.mxu0 0.0
  %2157 = vmatprep.subr.mxu0 0.0
  %2158 = vmatpush1.msra.mxu0 0.0
  %2159 = vmatprep.subr.mxu0 0.0
  %2160 = vmatpush1.msra.mxu0 0.0
  %2161 = vmatprep.subr.mxu0 0.0
  %2162 = vmatpush1.msra.mxu0 0.0
  %2163 = vmatprep.subr.mxu0 0.0
  %2164 = vmatpush1.msra.mxu0 0.0
  %2165 = vmatprep.subr.mxu0 0.0
  %2166 = vmatpush1.msra.mxu0 0.0
  %2167 = vmatprep.subr.mxu0 0.0
  %2168 = vmatpush1.msra.mxu0 0.0
  %2169 = vmatprep.mubr.f32.mxu0 0.0
  %2170 = vmatmul.mubr.f32.gmra.mrb[0].mxu0 %v2100
  %v2171 = vpop.f32.mrb[0].mxu0
  %v2172 = vadd.f32 %v2097, %v2171
  %v2173 = vpop.f32.mrb[0].mxu0
  %2174 = vmatprep.mubr.f32.mxu0 0.0
  %2175 = vmatmul.mubr.f32.gmra.mrb[0].mxu0 %v2103
  %v2176 = vpop.f32.mrb[0].mxu0
  %v2177 = vadd.f32 %v2097, %v2176
  %v2178 = vpop.f32.mrb[0].mxu0
  %2179 = vdwg.mxu0
  %v2180 = vmax.f32 %v2172, 0.0
  %v2181 = vmax.f32 %v2177, 0.0
  %v2182 = vld [vmem:[%s45] sm:$0xff]
  %v2183 = vld [vmem:[%s45 + $0x8] sm:$0xff]
  %v2184 = vld [vmem:[%s45 + $0x10] sm:$0xff]
  %v2185 = vld [vmem:[%s45 + $0x18] sm:$0xff]
  %v2186 = vld [vmem:[%s45 + $0x20] sm:$0xff]
  %v2187 = vld [vmem:[%s45 + $0x28] sm:$0xff]
  %v2188 = vld [vmem:[%s45 + $0x30] sm:$0xff]
  %v2189 = vld [vmem:[%s45 + $0x38] sm:$0xff]
  %v2190 = vld [vmem:[%s47] sm:$0x1]
  %v2192 = vlaneseq
  %v2193 = vshrl.u32 %v2192, 7
  %v2194 = vsub.s32 0, %v2193
  %v2195 = vrot.slane %v2190, %v2194
  %vm2197 = vcmask 523264
  %v2199 = vsel %vm2197, %v2180, 0
  %v2202 = vsel %vm2197, %v2181, 0
  %2204 = vmatprep.subr.mxu0 0.0
  %2205 = vmatpush1.msra.mxu0 %v2182
  %2206 = vmatprep.subr.mxu0 0.0
  %2207 = vmatpush1.msra.mxu0 %v2183
  %2208 = vmatprep.subr.mxu0 0.0
  %2209 = vmatpush1.msra.mxu0 %v2184
  %2210 = vmatprep.subr.mxu0 0.0
  %2211 = vmatpush1.msra.mxu0 %v2185
  %2212 = vmatprep.subr.mxu0 0.0
  %2213 = vmatpush1.msra.mxu0 %v2186
  %2214 = vmatprep.subr.mxu0 0.0
  %2215 = vmatpush1.msra.mxu0 %v2187
  %2216 = vmatprep.subr.mxu0 0.0
  %2217 = vmatpush1.msra.mxu0 %v2188
  %2218 = vmatprep.subr.mxu0 0.0
  %2219 = vmatpush1.msra.mxu0 %v2189
  %2220 = vmatprep.subr.mxu0 0.0
  %2221 = vmatpush1.msra.mxu0 0.0
  %2222 = vmatprep.subr.mxu0 0.0
  %2223 = vmatpush1.msra.mxu0 0.0
  %2224 = vmatprep.subr.mxu0 0.0
  %2225 = vmatpush1.msra.mxu0 0.0
  %2226 = vmatprep.subr.mxu0 0.0
  %2227 = vmatpush1.msra.mxu0 0.0
  %2228 = vmatprep.subr.mxu0 0.0
  %2229 = vmatpush1.msra.mxu0 0.0
  %2230 = vmatprep.subr.mxu0 0.0
  %2231 = vmatpush1.msra.mxu0 0.0
  %2232 = vmatprep.subr.mxu0 0.0
  %2233 = vmatpush1.msra.mxu0 0.0
  %2234 = vmatprep.subr.mxu0 0.0
  %2235 = vmatpush1.msra.mxu0 0.0
  %2236 = vmatprep.subr.mxu0 0.0
  %2237 = vmatpush1.msra.mxu0 0.0
  %2238 = vmatprep.subr.mxu0 0.0
  %2239 = vmatpush1.msra.mxu0 0.0
  %2240 = vmatprep.subr.mxu0 0.0
  %2241 = vmatpush1.msra.mxu0 0.0
  %2242 = vmatprep.subr.mxu0 0.0
  %2243 = vmatpush1.msra.mxu0 0.0
  %2244 = vmatprep.subr.mxu0 0.0
  %2245 = vmatpush1.msra.mxu0 0.0
  %2246 = vmatprep.subr.mxu0 0.0
  %2247 = vmatpush1.msra.mxu0 0.0
  %2248 = vmatprep.subr.mxu0 0.0
  %2249 = vmatpush1.msra.mxu0 0.0
  %2250 = vmatprep.subr.mxu0 0.0
  %2251 = vmatpush1.msra.mxu0 0.0
  %2252 = vmatprep.subr.mxu0 0.0
  %2253 = vmatpush1.msra.mxu0 0.0
  %2254 = vmatprep.subr.mxu0 0.0
  %2255 = vmatpush1.msra.mxu0 0.0
  %2256 = vmatprep.subr.mxu0 0.0
  %2257 = vmatpush1.msra.mxu0 0.0
  %2258 = vmatprep.subr.mxu0 0.0
  %2259 = vmatpush1.msra.mxu0 0.0
  %2260 = vmatprep.subr.mxu0 0.0
  %2261 = vmatpush1.msra.mxu0 0.0
  %2262 = vmatprep.subr.mxu0 0.0
  %2263 = vmatpush1.msra.mxu0 0.0
  %2264 = vmatprep.subr.mxu0 0.0
  %2265 = vmatpush1.msra.mxu0 0.0
  %2266 = vmatprep.subr.mxu0 0.0
  %2267 = vmatpush1.msra.mxu0 0.0
  %2268 = vmatprep.mubr.f32.mxu0 0.0
  %2269 = vmatmul.mubr.f32.gmra.mrb[0].mxu0 %v2199
  %v2270 = vpop.f32.mrb[0].mxu0
  %v2271 = vadd.f32 %v2195, %v2270
  %v2272 = vpop.f32.mrb[0].mxu0
  %2273 = vmatprep.mubr.f32.mxu0 0.0
  %2274 = vmatmul.mubr.f32.gmra.mrb[0].mxu0 %v2202
  %v2275 = vpop.f32.mrb[0].mxu0
  %v2276 = vadd.f32 %v2195, %v2275
  %v2277 = vpop.f32.mrb[0].mxu0
  %2278 = vdwg.mxu0
  %v2279 = vadd.f32 %v2086, %v2271
  %v2280 = vadd.f32 %v2087, %v2276
  %v2281 = vld [vmem:[%s37] sm:$0x1]
  %v2282 = vld [vmem:[%s39] sm:$0x1]
  %v2283 = vsel %vm349, %v2279, 0.0
  %2284 = vadd.xlane.f32.xlu0 %v2283
  %v2285 = vpop.xlane.xlu0 %2284
  %v2286 = vsel %vm349, %v2280, 0.0
  %2287 = vadd.xlane.f32.xlu0 %v2286
  %v2288 = vpop.xlane.xlu0 %2287
  %v2289 = vmul.f32 %v2285, %v356
  %v2290 = vmul.f32 %v2288, %v356
  %v2291 = vsub.f32 %v2279, %v2289
  %v2292 = vsub.f32 %v2280, %v2290
  %v2293 = vmul.f32 %v2291, %v2291
  %v2294 = vmul.f32 %v2292, %v2292
  %v2295 = vsel %vm349, %v2293, 0.0
  %2296 = vadd.xlane.f32.xlu0 %v2295
  %v2297 = vpop.xlane.xlu0 %2296
  %v2298 = vsel %vm349, %v2294, 0.0
  %2299 = vadd.xlane.f32.xlu0 %v2298
  %v2300 = vpop.xlane.xlu0 %2299
  %v2301 = vmul.f32 %v2297, %v356
  %v2302 = vmul.f32 %v2300, %v356
  %v2303 = vadd.f32 %v2301, 1e-05
  %v2304 = vadd.f32 %v2302, 1e-05
  %v2305 = vrsqrt.pop %v2303
  %v2306 = vrsqrt.pop %v2304
  %v2307 = vmul.f32 %v2291, %v2305
  %v2308 = vmul.f32 %v2292, %v2306
  %v2310 = vlaneseq
  %v2311 = vshrl.u32 %v2310, 7
  %v2312 = vsub.s32 0, %v2311
  %v2313 = vrot.slane %v2281, %v2312
  %v2315 = vmul.f32 %v2307, %v2313
  %v2316 = vmul.f32 %v2308, %v2313
  %v2318 = vlaneseq
  %v2319 = vshrl.u32 %v2318, 7
  %v2320 = vsub.s32 0, %v2319
  %v2321 = vrot.slane %v2282, %v2320
  %v2323 = vadd.f32 %v2315, %v2321
  %v2324 = vadd.f32 %v2316, %v2321
  %v2325 = vld [vmem:[%s9] sm:$0xff]
  %v2326 = vld [vmem:[%s9 + $0x8] sm:$0xff]
  %v2327 = vadd.f32 %v2323, %v2325
  %v2328 = vadd.f32 %v2324, %v2326
  %v2329 = vld [vmem:[%s49] sm:$0xff]
  %v2330 = vld [vmem:[%s49 + $0x8] sm:$0xff]
  %v2331 = vld [vmem:[%s49 + $0x10] sm:$0xff]
  %v2332 = vld [vmem:[%s49 + $0x18] sm:$0xff]
  %v2333 = vld [vmem:[%s51] sm:$0x1]
  %v2335 = vlaneseq
  %v2336 = vshrl.u32 %v2335, 7
  %v2337 = vsub.s32 0, %v2336
  %v2338 = vrot.slane %v2333, %v2337
  %v2341 = vsel %vm349, %v2327, 0
  %v2344 = vsel %vm349, %v2328, 0
  %2346 = vmatprep.subr.mxu0 0.0
  %2347 = vmatpush1.msra.mxu0 %v2329
  %2348 = vmatprep.subr.mxu0 0.0
  %2349 = vmatpush1.msra.mxu0 %v2330
  %2350 = vmatprep.subr.mxu0 0.0
  %2351 = vmatpush1.msra.mxu0 %v2331
  %2352 = vmatprep.subr.mxu0 0.0
  %2353 = vmatpush1.msra.mxu0 %v2332
  %2354 = vmatprep.subr.mxu0 0.0
  %2355 = vmatpush1.msra.mxu0 0.0
  %2356 = vmatprep.subr.mxu0 0.0
  %2357 = vmatpush1.msra.mxu0 0.0
  %2358 = vmatprep.subr.mxu0 0.0
  %2359 = vmatpush1.msra.mxu0 0.0
  %2360 = vmatprep.subr.mxu0 0.0
  %2361 = vmatpush1.msra.mxu0 0.0
  %2362 = vmatprep.subr.mxu0 0.0
  %2363 = vmatpush1.msra.mxu0 0.0
  %2364 = vmatprep.subr.mxu0 0.0
  %2365 = vmatpush1.msra.mxu0 0.0
  %2366 = vmatprep.subr.mxu0 0.0
  %2367 = vmatpush1.msra.mxu0 0.0
  %2368 = vmatprep.subr.mxu0 0.0
  %2369 = vmatpush1.msra.mxu0 0.0
  %2370 = vmatprep.subr.mxu0 0.0
  %2371 = vmatpush1.msra.mxu0 0.0
  %2372 = vmatprep.subr.mxu0 0.0
  %2373 = vmatpush1.msra.mxu0 0.0
  %2374 = vmatprep.subr.mxu0 0.0
  %2375 = vmatpush1.msra.mxu0 0.0
  %2376 = vmatprep.subr.mxu0 0.0
  %2377 = vmatpush1.msra.mxu0 0.0
  %2378 = vmatprep.subr.mxu0 0.0
  %2379 = vmatpush1.msra.mxu0 0.0
  %2380 = vmatprep.subr.mxu0 0.0
  %2381 = vmatpush1.msra.mxu0 0.0
  %2382 = vmatprep.subr.mxu0 0.0
  %2383 = vmatpush1.msra.mxu0 0.0
  %2384 = vmatprep.subr.mxu0 0.0
  %2385 = vmatpush1.msra.mxu0 0.0
  %2386 = vmatprep.subr.mxu0 0.0
  %2387 = vmatpush1.msra.mxu0 0.0
  %2388 = vmatprep.subr.mxu0 0.0
  %2389 = vmatpush1.msra.mxu0 0.0
  %2390 = vmatprep.subr.mxu0 0.0
  %2391 = vmatpush1.msra.mxu0 0.0
  %2392 = vmatprep.subr.mxu0 0.0
  %2393 = vmatpush1.msra.mxu0 0.0
  %2394 = vmatprep.subr.mxu0 0.0
  %2395 = vmatpush1.msra.mxu0 0.0
  %2396 = vmatprep.subr.mxu0 0.0
  %2397 = vmatpush1.msra.mxu0 0.0
  %2398 = vmatprep.subr.mxu0 0.0
  %2399 = vmatpush1.msra.mxu0 0.0
  %2400 = vmatprep.subr.mxu0 0.0
  %2401 = vmatpush1.msra.mxu0 0.0
  %2402 = vmatprep.subr.mxu0 0.0
  %2403 = vmatpush1.msra.mxu0 0.0
  %2404 = vmatprep.subr.mxu0 0.0
  %2405 = vmatpush1.msra.mxu0 0.0
  %2406 = vmatprep.subr.mxu0 0.0
  %2407 = vmatpush1.msra.mxu0 0.0
  %2408 = vmatprep.subr.mxu0 0.0
  %2409 = vmatpush1.msra.mxu0 0.0
  %2410 = vmatprep.mubr.f32.mxu0 0.0
  %2411 = vmatmul.mubr.f32.gmra.mrb[0].mxu0 %v2341
  %v2412 = vpop.f32.mrb[0].mxu0
  %v2413 = vadd.f32 %v2338, %v2412
  %v2414 = vpop.f32.mrb[0].mxu0
  %2415 = vmatprep.mubr.f32.mxu0 0.0
  %2416 = vmatmul.mubr.f32.gmra.mrb[0].mxu0 %v2344
  %v2417 = vpop.f32.mrb[0].mxu0
  %v2418 = vadd.f32 %v2338, %v2417
  %v2419 = vpop.f32.mrb[0].mxu0
  %2420 = vdwg.mxu0
  %2425 = vrot.lane.b32.xlu0 %v2329, 96
  %v2426 = vpop.permute.xlu0 %2425
  %2427 = vrot.lane.b32.xlu0 %v2330, 96
  %v2428 = vpop.permute.xlu0 %2427
  %2429 = vrot.lane.b32.xlu0 %v2331, 96
  %v2430 = vpop.permute.xlu0 %2429
  %2431 = vrot.lane.b32.xlu0 %v2332, 96
  %v2432 = vpop.permute.xlu0 %2431
  %2437 = vrot.lane.b32.xlu0 %v2338, 96
  %v2438 = vpop.permute.xlu0 %2437
  %v2441 = vsel %vm349, %v2323, 0
  %v2444 = vsel %vm349, %v2324, 0
  %2446 = vmatprep.subr.mxu0 0.0
  %2447 = vmatpush1.msra.mxu0 %v2426
  %2448 = vmatprep.subr.mxu0 0.0
  %2449 = vmatpush1.msra.mxu0 %v2428
  %2450 = vmatprep.subr.mxu0 0.0
  %2451 = vmatpush1.msra.mxu0 %v2430
  %2452 = vmatprep.subr.mxu0 0.0
  %2453 = vmatpush1.msra.mxu0 %v2432
  %2454 = vmatprep.subr.mxu0 0.0
  %2455 = vmatpush1.msra.mxu0 0.0
  %2456 = vmatprep.subr.mxu0 0.0
  %2457 = vmatpush1.msra.mxu0 0.0
  %2458 = vmatprep.subr.mxu0 0.0
  %2459 = vmatpush1.msra.mxu0 0.0
  %2460 = vmatprep.subr.mxu0 0.0
  %2461 = vmatpush1.msra.mxu0 0.0
  %2462 = vmatprep.subr.mxu0 0.0
  %2463 = vmatpush1.msra.mxu0 0.0
  %2464 = vmatprep.subr.mxu0 0.0
  %2465 = vmatpush1.msra.mxu0 0.0
  %2466 = vmatprep.subr.mxu0 0.0
  %2467 = vmatpush1.msra.mxu0 0.0
  %2468 = vmatprep.subr.mxu0 0.0
  %2469 = vmatpush1.msra.mxu0 0.0
  %2470 = vmatprep.subr.mxu0 0.0
  %2471 = vmatpush1.msra.mxu0 0.0
  %2472 = vmatprep.subr.mxu0 0.0
  %2473 = vmatpush1.msra.mxu0 0.0
  %2474 = vmatprep.subr.mxu0 0.0
  %2475 = vmatpush1.msra.mxu0 0.0
  %2476 = vmatprep.subr.mxu0 0.0
  %2477 = vmatpush1.msra.mxu0 0.0
  %2478 = vmatprep.subr.mxu0 0.0
  %2479 = vmatpush1.msra.mxu0 0.0
  %2480 = vmatprep.subr.mxu0 0.0
  %2481 = vmatpush1.msra.mxu0 0.0
  %2482 = vmatprep.subr.mxu0 0.0
  %2483 = vmatpush1.msra.mxu0 0.0
  %2484 = vmatprep.subr.mxu0 0.0
  %2485 = vmatpush1.msra.mxu0 0.0
  %2486 = vmatprep.subr.mxu0 0.0
  %2487 = vmatpush1.msra.mxu0 0.0
  %2488 = vmatprep.subr.mxu0 0.0
  %2489 = vmatpush1.msra.mxu0 0.0
  %2490 = vmatprep.subr.mxu0 0.0
  %2491 = vmatpush1.msra.mxu0 0.0
  %2492 = vmatprep.subr.mxu0 0.0
  %2493 = vmatpush1.msra.mxu0 0.0
  %2494 = vmatprep.subr.mxu0 0.0
  %2495 = vmatpush1.msra.mxu0 0.0
  %2496 = vmatprep.subr.mxu0 0.0
  %2497 = vmatpush1.msra.mxu0 0.0
  %2498 = vmatprep.subr.mxu0 0.0
  %2499 = vmatpush1.msra.mxu0 0.0
  %2500 = vmatprep.subr.mxu0 0.0
  %2501 = vmatpush1.msra.mxu0 0.0
  %2502 = vmatprep.subr.mxu0 0.0
  %2503 = vmatpush1.msra.mxu0 0.0
  %2504 = vmatprep.subr.mxu0 0.0
  %2505 = vmatpush1.msra.mxu0 0.0
  %2506 = vmatprep.subr.mxu0 0.0
  %2507 = vmatpush1.msra.mxu0 0.0
  %2508 = vmatprep.subr.mxu0 0.0
  %2509 = vmatpush1.msra.mxu0 0.0
  %2510 = vmatprep.mubr.f32.mxu0 0.0
  %2511 = vmatmul.mubr.f32.gmra.mrb[0].mxu0 %v2441
  %v2512 = vpop.f32.mrb[0].mxu0
  %v2513 = vadd.f32 %v2438, %v2512
  %v2514 = vpop.f32.mrb[0].mxu0
  %2515 = vmatprep.mubr.f32.mxu0 0.0
  %2516 = vmatmul.mubr.f32.gmra.mrb[0].mxu0 %v2444
  %v2517 = vpop.f32.mrb[0].mxu0
  %v2518 = vadd.f32 %v2438, %v2517
  %v2519 = vpop.f32.mrb[0].mxu0
  %2520 = vdwg.mxu0
  %v2522 = vsel %vm586, %v2413, 0
  %v2525 = vsel %vm586, %v2513, 0
  %2527 = vmatprep.subr.mxu0 0.0
  %2528 = vmatpush1.xpose.msra.mxu0 %v2525
  %2529 = vmatprep.subr.mxu0 0.0
  %2530 = vmatpush1.xpose.msra.mxu0 0.0
  %2531 = vmatprep.subr.mxu0 0.0
  %2532 = vmatpush1.xpose.msra.mxu0 0.0
  %2533 = vmatprep.subr.mxu0 0.0
  %2534 = vmatpush1.xpose.msra.mxu0 0.0
  %2535 = vmatprep.subr.mxu0 0.0
  %2536 = vmatpush1.xpose.msra.mxu0 0.0
  %2537 = vmatprep.subr.mxu0 0.0
  %2538 = vmatpush1.xpose.msra.mxu0 0.0
  %2539 = vmatprep.subr.mxu0 0.0
  %2540 = vmatpush1.xpose.msra.mxu0 0.0
  %2541 = vmatprep.subr.mxu0 0.0
  %2542 = vmatpush1.xpose.msra.mxu0 0.0
  %2543 = vmatprep.subr.mxu0 0.0
  %2544 = vmatpush1.xpose.msra.mxu0 0.0
  %2545 = vmatprep.subr.mxu0 0.0
  %2546 = vmatpush1.xpose.msra.mxu0 0.0
  %2547 = vmatprep.subr.mxu0 0.0
  %2548 = vmatpush1.xpose.msra.mxu0 0.0
  %2549 = vmatprep.subr.mxu0 0.0
  %2550 = vmatpush1.xpose.msra.mxu0 0.0
  %2551 = vmatprep.subr.mxu0 0.0
  %2552 = vmatpush1.xpose.msra.mxu0 0.0
  %2553 = vmatprep.subr.mxu0 0.0
  %2554 = vmatpush1.xpose.msra.mxu0 0.0
  %2555 = vmatprep.subr.mxu0 0.0
  %2556 = vmatpush1.xpose.msra.mxu0 0.0
  %2557 = vmatprep.subr.mxu0 0.0
  %2558 = vmatpush1.xpose.msra.mxu0 0.0
  %2559 = vmatprep.subr.mxu0 0.0
  %2560 = vmatpush1.xpose.msra.mxu0 0.0
  %2561 = vmatprep.subr.mxu0 0.0
  %2562 = vmatpush1.xpose.msra.mxu0 0.0
  %2563 = vmatprep.subr.mxu0 0.0
  %2564 = vmatpush1.xpose.msra.mxu0 0.0
  %2565 = vmatprep.subr.mxu0 0.0
  %2566 = vmatpush1.xpose.msra.mxu0 0.0
  %2567 = vmatprep.subr.mxu0 0.0
  %2568 = vmatpush1.xpose.msra.mxu0 0.0
  %2569 = vmatprep.subr.mxu0 0.0
  %2570 = vmatpush1.xpose.msra.mxu0 0.0
  %2571 = vmatprep.subr.mxu0 0.0
  %2572 = vmatpush1.xpose.msra.mxu0 0.0
  %2573 = vmatprep.subr.mxu0 0.0
  %2574 = vmatpush1.xpose.msra.mxu0 0.0
  %2575 = vmatprep.subr.mxu0 0.0
  %2576 = vmatpush1.xpose.msra.mxu0 0.0
  %2577 = vmatprep.subr.mxu0 0.0
  %2578 = vmatpush1.xpose.msra.mxu0 0.0
  %2579 = vmatprep.subr.mxu0 0.0
  %2580 = vmatpush1.xpose.msra.mxu0 0.0
  %2581 = vmatprep.subr.mxu0 0.0
  %2582 = vmatpush1.xpose.msra.mxu0 0.0
  %2583 = vmatprep.subr.mxu0 0.0
  %2584 = vmatpush1.xpose.msra.mxu0 0.0
  %2585 = vmatprep.subr.mxu0 0.0
  %2586 = vmatpush1.xpose.msra.mxu0 0.0
  %2587 = vmatprep.subr.mxu0 0.0
  %2588 = vmatpush1.xpose.msra.mxu0 0.0
  %2589 = vmatprep.subr.mxu0 0.0
  %2590 = vmatpush1.xpose.msra.mxu0 0.0
  %2591 = vmatprep.mubr.f32.mxu0 0.0
  %2592 = vmatmul.mubr.f32.gmra.mrb[0].mxu0 %v2522
  %v2593 = vpop.f32.mrb[0].mxu0
  %v2594 = vadd.f32 0.0, %v2593
  %v2595 = vpop.f32.mrb[0].mxu0
  %2596 = vdwg.mxu0
  %v2598 = vsel %vm586, %v2418, 0
  %v2601 = vsel %vm586, %v2518, 0
  %2603 = vmatprep.subr.mxu0 0.0
  %2604 = vmatpush1.xpose.msra.mxu0 %v2601
  %2605 = vmatprep.subr.mxu0 0.0
  %2606 = vmatpush1.xpose.msra.mxu0 0.0
  %2607 = vmatprep.subr.mxu0 0.0
  %2608 = vmatpush1.xpose.msra.mxu0 0.0
  %2609 = vmatprep.subr.mxu0 0.0
  %2610 = vmatpush1.xpose.msra.mxu0 0.0
  %2611 = vmatprep.subr.mxu0 0.0
  %2612 = vmatpush1.xpose.msra.mxu0 0.0
  %2613 = vmatprep.subr.mxu0 0.0
  %2614 = vmatpush1.xpose.msra.mxu0 0.0
  %2615 = vmatprep.subr.mxu0 0.0
  %2616 = vmatpush1.xpose.msra.mxu0 0.0
  %2617 = vmatprep.subr.mxu0 0.0
  %2618 = vmatpush1.xpose.msra.mxu0 0.0
  %2619 = vmatprep.subr.mxu0 0.0
  %2620 = vmatpush1.xpose.msra.mxu0 0.0
  %2621 = vmatprep.subr.mxu0 0.0
  %2622 = vmatpush1.xpose.msra.mxu0 0.0
  %2623 = vmatprep.subr.mxu0 0.0
  %2624 = vmatpush1.xpose.msra.mxu0 0.0
  %2625 = vmatprep.subr.mxu0 0.0
  %2626 = vmatpush1.xpose.msra.mxu0 0.0
  %2627 = vmatprep.subr.mxu0 0.0
  %2628 = vmatpush1.xpose.msra.mxu0 0.0
  %2629 = vmatprep.subr.mxu0 0.0
  %2630 = vmatpush1.xpose.msra.mxu0 0.0
  %2631 = vmatprep.subr.mxu0 0.0
  %2632 = vmatpush1.xpose.msra.mxu0 0.0
  %2633 = vmatprep.subr.mxu0 0.0
  %2634 = vmatpush1.xpose.msra.mxu0 0.0
  %2635 = vmatprep.subr.mxu0 0.0
  %2636 = vmatpush1.xpose.msra.mxu0 0.0
  %2637 = vmatprep.subr.mxu0 0.0
  %2638 = vmatpush1.xpose.msra.mxu0 0.0
  %2639 = vmatprep.subr.mxu0 0.0
  %2640 = vmatpush1.xpose.msra.mxu0 0.0
  %2641 = vmatprep.subr.mxu0 0.0
  %2642 = vmatpush1.xpose.msra.mxu0 0.0
  %2643 = vmatprep.subr.mxu0 0.0
  %2644 = vmatpush1.xpose.msra.mxu0 0.0
  %2645 = vmatprep.subr.mxu0 0.0
  %2646 = vmatpush1.xpose.msra.mxu0 0.0
  %2647 = vmatprep.subr.mxu0 0.0
  %2648 = vmatpush1.xpose.msra.mxu0 0.0
  %2649 = vmatprep.subr.mxu0 0.0
  %2650 = vmatpush1.xpose.msra.mxu0 0.0
  %2651 = vmatprep.subr.mxu0 0.0
  %2652 = vmatpush1.xpose.msra.mxu0 0.0
  %2653 = vmatprep.subr.mxu0 0.0
  %2654 = vmatpush1.xpose.msra.mxu0 0.0
  %2655 = vmatprep.subr.mxu0 0.0
  %2656 = vmatpush1.xpose.msra.mxu0 0.0
  %2657 = vmatprep.subr.mxu0 0.0
  %2658 = vmatpush1.xpose.msra.mxu0 0.0
  %2659 = vmatprep.subr.mxu0 0.0
  %2660 = vmatpush1.xpose.msra.mxu0 0.0
  %2661 = vmatprep.subr.mxu0 0.0
  %2662 = vmatpush1.xpose.msra.mxu0 0.0
  %2663 = vmatprep.subr.mxu0 0.0
  %2664 = vmatpush1.xpose.msra.mxu0 0.0
  %2665 = vmatprep.subr.mxu0 0.0
  %2666 = vmatpush1.xpose.msra.mxu0 0.0
  %2667 = vmatprep.mubr.f32.mxu0 0.0
  %2668 = vmatmul.mubr.f32.gmra.mrb[0].mxu0 %v2598
  %v2669 = vpop.f32.mrb[0].mxu0
  %v2670 = vadd.f32 0.0, %v2669
  %v2671 = vpop.f32.mrb[0].mxu0
  %2672 = vdwg.mxu0
  %v2673 = vmul.f32 %v2594, 0.35355338
  %v2674 = vmul.f32 %v2670, 0.35355338
  %v2675 = vadd.f32 %v2673, %v489
  %v2676 = vadd.f32 %v2674, %v490
  %v2677 = vsel %vm586, %v2675, -inf
  %2678 = vmax.xlane.f32.xlu0 %v2677
  %v2679 = vpop.xlane.xlu0 %2678
  %v2680 = vsel %vm586, %v2676, -inf
  %2681 = vmax.xlane.f32.xlu0 %v2680
  %v2682 = vpop.xlane.xlu0 %2681
  %v2683 = vsub.f32 %v2675, %v2679
  %v2684 = vsub.f32 %v2676, %v2682
  %v2685 = vmul.f32 %v2683, 1.442695
  %v2686 = vpow.pop %v2685
  %v2687 = vmul.f32 %v2684, 1.442695
  %v2688 = vpow.pop %v2687
  %v2689 = vsel %vm586, %v2686, 0.0
  %2690 = vadd.xlane.f32.xlu0 %v2689
  %v2691 = vpop.xlane.xlu0 %2690
  %v2692 = vsel %vm586, %v2688, 0.0
  %2693 = vadd.xlane.f32.xlu0 %v2692
  %v2694 = vpop.xlane.xlu0 %2693
  %v2695 = vrcp.pop %v2691
  %v2696 = vrcp.pop %v2694
  %v2697 = vmul.f32 %v2686, %v2695
  %v2698 = vmul.f32 %v2688, %v2696
  %2699 = vrot.lane.b32.xlu0 %v2513, 96
  %v2700 = vpop.permute.xlu0 %2699
  %v2703 = vsel %vm586, %v2697, 0
  %2705 = vmatprep.subr.mxu0 0.0
  %2706 = vmatpush1.msra.mxu0 %v2700
  %2707 = vmatprep.subr.mxu0 0.0
  %2708 = vmatpush1.msra.mxu0 0.0
  %2709 = vmatprep.subr.mxu0 0.0
  %2710 = vmatpush1.msra.mxu0 0.0
  %2711 = vmatprep.subr.mxu0 0.0
  %2712 = vmatpush1.msra.mxu0 0.0
  %2713 = vmatprep.subr.mxu0 0.0
  %2714 = vmatpush1.msra.mxu0 0.0
  %2715 = vmatprep.subr.mxu0 0.0
  %2716 = vmatpush1.msra.mxu0 0.0
  %2717 = vmatprep.subr.mxu0 0.0
  %2718 = vmatpush1.msra.mxu0 0.0
  %2719 = vmatprep.subr.mxu0 0.0
  %2720 = vmatpush1.msra.mxu0 0.0
  %2721 = vmatprep.subr.mxu0 0.0
  %2722 = vmatpush1.msra.mxu0 0.0
  %2723 = vmatprep.subr.mxu0 0.0
  %2724 = vmatpush1.msra.mxu0 0.0
  %2725 = vmatprep.subr.mxu0 0.0
  %2726 = vmatpush1.msra.mxu0 0.0
  %2727 = vmatprep.subr.mxu0 0.0
  %2728 = vmatpush1.msra.mxu0 0.0
  %2729 = vmatprep.subr.mxu0 0.0
  %2730 = vmatpush1.msra.mxu0 0.0
  %2731 = vmatprep.subr.mxu0 0.0
  %2732 = vmatpush1.msra.mxu0 0.0
  %2733 = vmatprep.subr.mxu0 0.0
  %2734 = vmatpush1.msra.mxu0 0.0
  %2735 = vmatprep.subr.mxu0 0.0
  %2736 = vmatpush1.msra.mxu0 0.0
  %2737 = vmatprep.subr.mxu0 0.0
  %2738 = vmatpush1.msra.mxu0 0.0
  %2739 = vmatprep.subr.mxu0 0.0
  %2740 = vmatpush1.msra.mxu0 0.0
  %2741 = vmatprep.subr.mxu0 0.0
  %2742 = vmatpush1.msra.mxu0 0.0
  %2743 = vmatprep.subr.mxu0 0.0
  %2744 = vmatpush1.msra.mxu0 0.0
  %2745 = vmatprep.subr.mxu0 0.0
  %2746 = vmatpush1.msra.mxu0 0.0
  %2747 = vmatprep.subr.mxu0 0.0
  %2748 = vmatpush1.msra.mxu0 0.0
  %2749 = vmatprep.subr.mxu0 0.0
  %2750 = vmatpush1.msra.mxu0 0.0
  %2751 = vmatprep.subr.mxu0 0.0
  %2752 = vmatpush1.msra.mxu0 0.0
  %2753 = vmatprep.subr.mxu0 0.0
  %2754 = vmatpush1.msra.mxu0 0.0
  %2755 = vmatprep.subr.mxu0 0.0
  %2756 = vmatpush1.msra.mxu0 0.0
  %2757 = vmatprep.subr.mxu0 0.0
  %2758 = vmatpush1.msra.mxu0 0.0
  %2759 = vmatprep.subr.mxu0 0.0
  %2760 = vmatpush1.msra.mxu0 0.0
  %2761 = vmatprep.subr.mxu0 0.0
  %2762 = vmatpush1.msra.mxu0 0.0
  %2763 = vmatprep.subr.mxu0 0.0
  %2764 = vmatpush1.msra.mxu0 0.0
  %2765 = vmatprep.subr.mxu0 0.0
  %2766 = vmatpush1.msra.mxu0 0.0
  %2767 = vmatprep.subr.mxu0 0.0
  %2768 = vmatpush1.msra.mxu0 0.0
  %2769 = vmatprep.mubr.f32.mxu0 0.0
  %2770 = vmatmul.mubr.f32.gmra.mrb[0].mxu0 %v2703
  %v2771 = vpop.f32.mrb[0].mxu0
  %v2772 = vadd.f32 0.0, %v2771
  %v2773 = vpop.f32.mrb[0].mxu0
  %2774 = vdwg.mxu0
  %2775 = vrot.lane.b32.xlu0 %v2518, 96
  %v2776 = vpop.permute.xlu0 %2775
  %v2779 = vsel %vm586, %v2698, 0
  %2781 = vmatprep.subr.mxu0 0.0
  %2782 = vmatpush1.msra.mxu0 %v2776
  %2783 = vmatprep.subr.mxu0 0.0
  %2784 = vmatpush1.msra.mxu0 0.0
  %2785 = vmatprep.subr.mxu0 0.0
  %2786 = vmatpush1.msra.mxu0 0.0
  %2787 = vmatprep.subr.mxu0 0.0
  %2788 = vmatpush1.msra.mxu0 0.0
  %2789 = vmatprep.subr.mxu0 0.0
  %2790 = vmatpush1.msra.mxu0 0.0
  %2791 = vmatprep.subr.mxu0 0.0
  %2792 = vmatpush1.msra.mxu0 0.0
  %2793 = vmatprep.subr.mxu0 0.0
  %2794 = vmatpush1.msra.mxu0 0.0
  %2795 = vmatprep.subr.mxu0 0.0
  %2796 = vmatpush1.msra.mxu0 0.0
  %2797 = vmatprep.subr.mxu0 0.0
  %2798 = vmatpush1.msra.mxu0 0.0
  %2799 = vmatprep.subr.mxu0 0.0
  %2800 = vmatpush1.msra.mxu0 0.0
  %2801 = vmatprep.subr.mxu0 0.0
  %2802 = vmatpush1.msra.mxu0 0.0
  %2803 = vmatprep.subr.mxu0 0.0
  %2804 = vmatpush1.msra.mxu0 0.0
  %2805 = vmatprep.subr.mxu0 0.0
  %2806 = vmatpush1.msra.mxu0 0.0
  %2807 = vmatprep.subr.mxu0 0.0
  %2808 = vmatpush1.msra.mxu0 0.0
  %2809 = vmatprep.subr.mxu0 0.0
  %2810 = vmatpush1.msra.mxu0 0.0
  %2811 = vmatprep.subr.mxu0 0.0
  %2812 = vmatpush1.msra.mxu0 0.0
  %2813 = vmatprep.subr.mxu0 0.0
  %2814 = vmatpush1.msra.mxu0 0.0
  %2815 = vmatprep.subr.mxu0 0.0
  %2816 = vmatpush1.msra.mxu0 0.0
  %2817 = vmatprep.subr.mxu0 0.0
  %2818 = vmatpush1.msra.mxu0 0.0
  %2819 = vmatprep.subr.mxu0 0.0
  %2820 = vmatpush1.msra.mxu0 0.0
  %2821 = vmatprep.subr.mxu0 0.0
  %2822 = vmatpush1.msra.mxu0 0.0
  %2823 = vmatprep.subr.mxu0 0.0
  %2824 = vmatpush1.msra.mxu0 0.0
  %2825 = vmatprep.subr.mxu0 0.0
  %2826 = vmatpush1.msra.mxu0 0.0
  %2827 = vmatprep.subr.mxu0 0.0
  %2828 = vmatpush1.msra.mxu0 0.0
  %2829 = vmatprep.subr.mxu0 0.0
  %2830 = vmatpush1.msra.mxu0 0.0
  %2831 = vmatprep.subr.mxu0 0.0
  %2832 = vmatpush1.msra.mxu0 0.0
  %2833 = vmatprep.subr.mxu0 0.0
  %2834 = vmatpush1.msra.mxu0 0.0
  %2835 = vmatprep.subr.mxu0 0.0
  %2836 = vmatpush1.msra.mxu0 0.0
  %2837 = vmatprep.subr.mxu0 0.0
  %2838 = vmatpush1.msra.mxu0 0.0
  %2839 = vmatprep.subr.mxu0 0.0
  %2840 = vmatpush1.msra.mxu0 0.0
  %2841 = vmatprep.subr.mxu0 0.0
  %2842 = vmatpush1.msra.mxu0 0.0
  %2843 = vmatprep.subr.mxu0 0.0
  %2844 = vmatpush1.msra.mxu0 0.0
  %2845 = vmatprep.mubr.f32.mxu0 0.0
  %2846 = vmatmul.mubr.f32.gmra.mrb[0].mxu0 %v2779
  %v2847 = vpop.f32.mrb[0].mxu0
  %v2848 = vadd.f32 0.0, %v2847
  %v2849 = vpop.f32.mrb[0].mxu0
  %2850 = vdwg.mxu0
  %2851 = vrot.lane.b32.xlu0 %v2413, 120
  %v2852 = vpop.permute.xlu0 %2851
  %2853 = vrot.lane.b32.xlu0 %v2513, 120
  %v2854 = vpop.permute.xlu0 %2853
  %v2855 = vsel %vm586, %v2852, 0
  %v2857 = vsel %vm586, %v2854, 0
  %2859 = vmatprep.subr.mxu0 0.0
  %2860 = vmatpush1.xpose.msra.mxu0 %v2857
  %2861 = vmatprep.subr.mxu0 0.0
  %2862 = vmatpush1.xpose.msra.mxu0 0.0
  %2863 = vmatprep.subr.mxu0 0.0
  %2864 = vmatpush1.xpose.msra.mxu0 0.0
  %2865 = vmatprep.subr.mxu0 0.0
  %2866 = vmatpush1.xpose.msra.mxu0 0.0
  %2867 = vmatprep.subr.mxu0 0.0
  %2868 = vmatpush1.xpose.msra.mxu0 0.0
  %2869 = vmatprep.subr.mxu0 0.0
  %2870 = vmatpush1.xpose.msra.mxu0 0.0
  %2871 = vmatprep.subr.mxu0 0.0
  %2872 = vmatpush1.xpose.msra.mxu0 0.0
  %2873 = vmatprep.subr.mxu0 0.0
  %2874 = vmatpush1.xpose.msra.mxu0 0.0
  %2875 = vmatprep.subr.mxu0 0.0
  %2876 = vmatpush1.xpose.msra.mxu0 0.0
  %2877 = vmatprep.subr.mxu0 0.0
  %2878 = vmatpush1.xpose.msra.mxu0 0.0
  %2879 = vmatprep.subr.mxu0 0.0
  %2880 = vmatpush1.xpose.msra.mxu0 0.0
  %2881 = vmatprep.subr.mxu0 0.0
  %2882 = vmatpush1.xpose.msra.mxu0 0.0
  %2883 = vmatprep.subr.mxu0 0.0
  %2884 = vmatpush1.xpose.msra.mxu0 0.0
  %2885 = vmatprep.subr.mxu0 0.0
  %2886 = vmatpush1.xpose.msra.mxu0 0.0
  %2887 = vmatprep.subr.mxu0 0.0
  %2888 = vmatpush1.xpose.msra.mxu0 0.0
  %2889 = vmatprep.subr.mxu0 0.0
  %2890 = vmatpush1.xpose.msra.mxu0 0.0
  %2891 = vmatprep.subr.mxu0 0.0
  %2892 = vmatpush1.xpose.msra.mxu0 0.0
  %2893 = vmatprep.subr.mxu0 0.0
  %2894 = vmatpush1.xpose.msra.mxu0 0.0
  %2895 = vmatprep.subr.mxu0 0.0
  %2896 = vmatpush1.xpose.msra.mxu0 0.0
  %2897 = vmatprep.subr.mxu0 0.0
  %2898 = vmatpush1.xpose.msra.mxu0 0.0
  %2899 = vmatprep.subr.mxu0 0.0
  %2900 = vmatpush1.xpose.msra.mxu0 0.0
  %2901 = vmatprep.subr.mxu0 0.0
  %2902 = vmatpush1.xpose.msra.mxu0 0.0
  %2903 = vmatprep.subr.mxu0 0.0
  %2904 = vmatpush1.xpose.msra.mxu0 0.0
  %2905 = vmatprep.subr.mxu0 0.0
  %2906 = vmatpush1.xpose.msra.mxu0 0.0
  %2907 = vmatprep.subr.mxu0 0.0
  %2908 = vmatpush1.xpose.msra.mxu0 0.0
  %2909 = vmatprep.subr.mxu0 0.0
  %2910 = vmatpush1.xpose.msra.mxu0 0.0
  %2911 = vmatprep.subr.mxu0 0.0
  %2912 = vmatpush1.xpose.msra.mxu0 0.0
  %2913 = vmatprep.subr.mxu0 0.0
  %2914 = vmatpush1.xpose.msra.mxu0 0.0
  %2915 = vmatprep.subr.mxu0 0.0
  %2916 = vmatpush1.xpose.msra.mxu0 0.0
  %2917 = vmatprep.subr.mxu0 0.0
  %2918 = vmatpush1.xpose.msra.mxu0 0.0
  %2919 = vmatprep.subr.mxu0 0.0
  %2920 = vmatpush1.xpose.msra.mxu0 0.0
  %2921 = vmatprep.subr.mxu0 0.0
  %2922 = vmatpush1.xpose.msra.mxu0 0.0
  %2923 = vmatprep.mubr.f32.mxu0 0.0
  %2924 = vmatmul.mubr.f32.gmra.mrb[0].mxu0 %v2855
  %v2925 = vpop.f32.mrb[0].mxu0
  %v2926 = vadd.f32 0.0, %v2925
  %v2927 = vpop.f32.mrb[0].mxu0
  %2928 = vdwg.mxu0
  %2929 = vrot.lane.b32.xlu0 %v2418, 120
  %v2930 = vpop.permute.xlu0 %2929
  %2931 = vrot.lane.b32.xlu0 %v2518, 120
  %v2932 = vpop.permute.xlu0 %2931
  %v2933 = vsel %vm586, %v2930, 0
  %v2935 = vsel %vm586, %v2932, 0
  %2937 = vmatprep.subr.mxu0 0.0
  %2938 = vmatpush1.xpose.msra.mxu0 %v2935
  %2939 = vmatprep.subr.mxu0 0.0
  %2940 = vmatpush1.xpose.msra.mxu0 0.0
  %2941 = vmatprep.subr.mxu0 0.0
  %2942 = vmatpush1.xpose.msra.mxu0 0.0
  %2943 = vmatprep.subr.mxu0 0.0
  %2944 = vmatpush1.xpose.msra.mxu0 0.0
  %2945 = vmatprep.subr.mxu0 0.0
  %2946 = vmatpush1.xpose.msra.mxu0 0.0
  %2947 = vmatprep.subr.mxu0 0.0
  %2948 = vmatpush1.xpose.msra.mxu0 0.0
  %2949 = vmatprep.subr.mxu0 0.0
  %2950 = vmatpush1.xpose.msra.mxu0 0.0
  %2951 = vmatprep.subr.mxu0 0.0
  %2952 = vmatpush1.xpose.msra.mxu0 0.0
  %2953 = vmatprep.subr.mxu0 0.0
  %2954 = vmatpush1.xpose.msra.mxu0 0.0
  %2955 = vmatprep.subr.mxu0 0.0
  %2956 = vmatpush1.xpose.msra.mxu0 0.0
  %2957 = vmatprep.subr.mxu0 0.0
  %2958 = vmatpush1.xpose.msra.mxu0 0.0
  %2959 = vmatprep.subr.mxu0 0.0
  %2960 = vmatpush1.xpose.msra.mxu0 0.0
  %2961 = vmatprep.subr.mxu0 0.0
  %2962 = vmatpush1.xpose.msra.mxu0 0.0
  %2963 = vmatprep.subr.mxu0 0.0
  %2964 = vmatpush1.xpose.msra.mxu0 0.0
  %2965 = vmatprep.subr.mxu0 0.0
  %2966 = vmatpush1.xpose.msra.mxu0 0.0
  %2967 = vmatprep.subr.mxu0 0.0
  %2968 = vmatpush1.xpose.msra.mxu0 0.0
  %2969 = vmatprep.subr.mxu0 0.0
  %2970 = vmatpush1.xpose.msra.mxu0 0.0
  %2971 = vmatprep.subr.mxu0 0.0
  %2972 = vmatpush1.xpose.msra.mxu0 0.0
  %2973 = vmatprep.subr.mxu0 0.0
  %2974 = vmatpush1.xpose.msra.mxu0 0.0
  %2975 = vmatprep.subr.mxu0 0.0
  %2976 = vmatpush1.xpose.msra.mxu0 0.0
  %2977 = vmatprep.subr.mxu0 0.0
  %2978 = vmatpush1.xpose.msra.mxu0 0.0
  %2979 = vmatprep.subr.mxu0 0.0
  %2980 = vmatpush1.xpose.msra.mxu0 0.0
  %2981 = vmatprep.subr.mxu0 0.0
  %2982 = vmatpush1.xpose.msra.mxu0 0.0
  %2983 = vmatprep.subr.mxu0 0.0
  %2984 = vmatpush1.xpose.msra.mxu0 0.0
  %2985 = vmatprep.subr.mxu0 0.0
  %2986 = vmatpush1.xpose.msra.mxu0 0.0
  %2987 = vmatprep.subr.mxu0 0.0
  %2988 = vmatpush1.xpose.msra.mxu0 0.0
  %2989 = vmatprep.subr.mxu0 0.0
  %2990 = vmatpush1.xpose.msra.mxu0 0.0
  %2991 = vmatprep.subr.mxu0 0.0
  %2992 = vmatpush1.xpose.msra.mxu0 0.0
  %2993 = vmatprep.subr.mxu0 0.0
  %2994 = vmatpush1.xpose.msra.mxu0 0.0
  %2995 = vmatprep.subr.mxu0 0.0
  %2996 = vmatpush1.xpose.msra.mxu0 0.0
  %2997 = vmatprep.subr.mxu0 0.0
  %2998 = vmatpush1.xpose.msra.mxu0 0.0
  %2999 = vmatprep.subr.mxu0 0.0
  %3000 = vmatpush1.xpose.msra.mxu0 0.0
  %3001 = vmatprep.mubr.f32.mxu0 0.0
  %3002 = vmatmul.mubr.f32.gmra.mrb[0].mxu0 %v2933
  %v3003 = vpop.f32.mrb[0].mxu0
  %v3004 = vadd.f32 0.0, %v3003
  %v3005 = vpop.f32.mrb[0].mxu0
  %3006 = vdwg.mxu0
  %v3007 = vmul.f32 %v2926, 0.35355338
  %v3008 = vmul.f32 %v3004, 0.35355338
  %v3009 = vadd.f32 %v3007, %v489
  %v3010 = vadd.f32 %v3008, %v490
  %v3011 = vsel %vm586, %v3009, -inf
  %3012 = vmax.xlane.f32.xlu0 %v3011
  %v3013 = vpop.xlane.xlu0 %3012
  %v3014 = vsel %vm586, %v3010, -inf
  %3015 = vmax.xlane.f32.xlu0 %v3014
  %v3016 = vpop.xlane.xlu0 %3015
  %v3017 = vsub.f32 %v3009, %v3013
  %v3018 = vsub.f32 %v3010, %v3016
  %v3019 = vmul.f32 %v3017, 1.442695
  %v3020 = vpow.pop %v3019
  %v3021 = vmul.f32 %v3018, 1.442695
  %v3022 = vpow.pop %v3021
  %v3023 = vsel %vm586, %v3020, 0.0
  %3024 = vadd.xlane.f32.xlu0 %v3023
  %v3025 = vpop.xlane.xlu0 %3024
  %v3026 = vsel %vm586, %v3022, 0.0
  %3027 = vadd.xlane.f32.xlu0 %v3026
  %v3028 = vpop.xlane.xlu0 %3027
  %v3029 = vrcp.pop %v3025
  %v3030 = vrcp.pop %v3028
  %v3031 = vmul.f32 %v3020, %v3029
  %v3032 = vmul.f32 %v3022, %v3030
  %3033 = vrot.lane.b32.xlu0 %v2513, 88
  %v3034 = vpop.permute.xlu0 %3033
  %v3037 = vsel %vm586, %v3031, 0
  %3039 = vmatprep.subr.mxu0 0.0
  %3040 = vmatpush1.msra.mxu0 %v3034
  %3041 = vmatprep.subr.mxu0 0.0
  %3042 = vmatpush1.msra.mxu0 0.0
  %3043 = vmatprep.subr.mxu0 0.0
  %3044 = vmatpush1.msra.mxu0 0.0
  %3045 = vmatprep.subr.mxu0 0.0
  %3046 = vmatpush1.msra.mxu0 0.0
  %3047 = vmatprep.subr.mxu0 0.0
  %3048 = vmatpush1.msra.mxu0 0.0
  %3049 = vmatprep.subr.mxu0 0.0
  %3050 = vmatpush1.msra.mxu0 0.0
  %3051 = vmatprep.subr.mxu0 0.0
  %3052 = vmatpush1.msra.mxu0 0.0
  %3053 = vmatprep.subr.mxu0 0.0
  %3054 = vmatpush1.msra.mxu0 0.0
  %3055 = vmatprep.subr.mxu0 0.0
  %3056 = vmatpush1.msra.mxu0 0.0
  %3057 = vmatprep.subr.mxu0 0.0
  %3058 = vmatpush1.msra.mxu0 0.0
  %3059 = vmatprep.subr.mxu0 0.0
  %3060 = vmatpush1.msra.mxu0 0.0
  %3061 = vmatprep.subr.mxu0 0.0
  %3062 = vmatpush1.msra.mxu0 0.0
  %3063 = vmatprep.subr.mxu0 0.0
  %3064 = vmatpush1.msra.mxu0 0.0
  %3065 = vmatprep.subr.mxu0 0.0
  %3066 = vmatpush1.msra.mxu0 0.0
  %3067 = vmatprep.subr.mxu0 0.0
  %3068 = vmatpush1.msra.mxu0 0.0
  %3069 = vmatprep.subr.mxu0 0.0
  %3070 = vmatpush1.msra.mxu0 0.0
  %3071 = vmatprep.subr.mxu0 0.0
  %3072 = vmatpush1.msra.mxu0 0.0
  %3073 = vmatprep.subr.mxu0 0.0
  %3074 = vmatpush1.msra.mxu0 0.0
  %3075 = vmatprep.subr.mxu0 0.0
  %3076 = vmatpush1.msra.mxu0 0.0
  %3077 = vmatprep.subr.mxu0 0.0
  %3078 = vmatpush1.msra.mxu0 0.0
  %3079 = vmatprep.subr.mxu0 0.0
  %3080 = vmatpush1.msra.mxu0 0.0
  %3081 = vmatprep.subr.mxu0 0.0
  %3082 = vmatpush1.msra.mxu0 0.0
  %3083 = vmatprep.subr.mxu0 0.0
  %3084 = vmatpush1.msra.mxu0 0.0
  %3085 = vmatprep.subr.mxu0 0.0
  %3086 = vmatpush1.msra.mxu0 0.0
  %3087 = vmatprep.subr.mxu0 0.0
  %3088 = vmatpush1.msra.mxu0 0.0
  %3089 = vmatprep.subr.mxu0 0.0
  %3090 = vmatpush1.msra.mxu0 0.0
  %3091 = vmatprep.subr.mxu0 0.0
  %3092 = vmatpush1.msra.mxu0 0.0
  %3093 = vmatprep.subr.mxu0 0.0
  %3094 = vmatpush1.msra.mxu0 0.0
  %3095 = vmatprep.subr.mxu0 0.0
  %3096 = vmatpush1.msra.mxu0 0.0
  %3097 = vmatprep.subr.mxu0 0.0
  %3098 = vmatpush1.msra.mxu0 0.0
  %3099 = vmatprep.subr.mxu0 0.0
  %3100 = vmatpush1.msra.mxu0 0.0
  %3101 = vmatprep.subr.mxu0 0.0
  %3102 = vmatpush1.msra.mxu0 0.0
  %3103 = vmatprep.mubr.f32.mxu0 0.0
  %3104 = vmatmul.mubr.f32.gmra.mrb[0].mxu0 %v3037
  %v3105 = vpop.f32.mrb[0].mxu0
  %v3106 = vadd.f32 0.0, %v3105
  %v3107 = vpop.f32.mrb[0].mxu0
  %3108 = vdwg.mxu0
  %3109 = vrot.lane.b32.xlu0 %v2518, 88
  %v3110 = vpop.permute.xlu0 %3109
  %v3113 = vsel %vm586, %v3032, 0
  %3115 = vmatprep.subr.mxu0 0.0
  %3116 = vmatpush1.msra.mxu0 %v3110
  %3117 = vmatprep.subr.mxu0 0.0
  %3118 = vmatpush1.msra.mxu0 0.0
  %3119 = vmatprep.subr.mxu0 0.0
  %3120 = vmatpush1.msra.mxu0 0.0
  %3121 = vmatprep.subr.mxu0 0.0
  %3122 = vmatpush1.msra.mxu0 0.0
  %3123 = vmatprep.subr.mxu0 0.0
  %3124 = vmatpush1.msra.mxu0 0.0
  %3125 = vmatprep.subr.mxu0 0.0
  %3126 = vmatpush1.msra.mxu0 0.0
  %3127 = vmatprep.subr.mxu0 0.0
  %3128 = vmatpush1.msra.mxu0 0.0
  %3129 = vmatprep.subr.mxu0 0.0
  %3130 = vmatpush1.msra.mxu0 0.0
  %3131 = vmatprep.subr.mxu0 0.0
  %3132 = vmatpush1.msra.mxu0 0.0
  %3133 = vmatprep.subr.mxu0 0.0
  %3134 = vmatpush1.msra.mxu0 0.0
  %3135 = vmatprep.subr.mxu0 0.0
  %3136 = vmatpush1.msra.mxu0 0.0
  %3137 = vmatprep.subr.mxu0 0.0
  %3138 = vmatpush1.msra.mxu0 0.0
  %3139 = vmatprep.subr.mxu0 0.0
  %3140 = vmatpush1.msra.mxu0 0.0
  %3141 = vmatprep.subr.mxu0 0.0
  %3142 = vmatpush1.msra.mxu0 0.0
  %3143 = vmatprep.subr.mxu0 0.0
  %3144 = vmatpush1.msra.mxu0 0.0
  %3145 = vmatprep.subr.mxu0 0.0
  %3146 = vmatpush1.msra.mxu0 0.0
  %3147 = vmatprep.subr.mxu0 0.0
  %3148 = vmatpush1.msra.mxu0 0.0
  %3149 = vmatprep.subr.mxu0 0.0
  %3150 = vmatpush1.msra.mxu0 0.0
  %3151 = vmatprep.subr.mxu0 0.0
  %3152 = vmatpush1.msra.mxu0 0.0
  %3153 = vmatprep.subr.mxu0 0.0
  %3154 = vmatpush1.msra.mxu0 0.0
  %3155 = vmatprep.subr.mxu0 0.0
  %3156 = vmatpush1.msra.mxu0 0.0
  %3157 = vmatprep.subr.mxu0 0.0
  %3158 = vmatpush1.msra.mxu0 0.0
  %3159 = vmatprep.subr.mxu0 0.0
  %3160 = vmatpush1.msra.mxu0 0.0
  %3161 = vmatprep.subr.mxu0 0.0
  %3162 = vmatpush1.msra.mxu0 0.0
  %3163 = vmatprep.subr.mxu0 0.0
  %3164 = vmatpush1.msra.mxu0 0.0
  %3165 = vmatprep.subr.mxu0 0.0
  %3166 = vmatpush1.msra.mxu0 0.0
  %3167 = vmatprep.subr.mxu0 0.0
  %3168 = vmatpush1.msra.mxu0 0.0
  %3169 = vmatprep.subr.mxu0 0.0
  %3170 = vmatpush1.msra.mxu0 0.0
  %3171 = vmatprep.subr.mxu0 0.0
  %3172 = vmatpush1.msra.mxu0 0.0
  %3173 = vmatprep.subr.mxu0 0.0
  %3174 = vmatpush1.msra.mxu0 0.0
  %3175 = vmatprep.subr.mxu0 0.0
  %3176 = vmatpush1.msra.mxu0 0.0
  %3177 = vmatprep.subr.mxu0 0.0
  %3178 = vmatpush1.msra.mxu0 0.0
  %3179 = vmatprep.mubr.f32.mxu0 0.0
  %3180 = vmatmul.mubr.f32.gmra.mrb[0].mxu0 %v3113
  %v3181 = vpop.f32.mrb[0].mxu0
  %v3182 = vadd.f32 0.0, %v3181
  %v3183 = vpop.f32.mrb[0].mxu0
  %3184 = vdwg.mxu0
  %3185 = vrot.lane.b32.xlu0 %v2413, 112
  %v3186 = vpop.permute.xlu0 %3185
  %3187 = vrot.lane.b32.xlu0 %v2513, 112
  %v3188 = vpop.permute.xlu0 %3187
  %v3189 = vsel %vm586, %v3186, 0
  %v3191 = vsel %vm586, %v3188, 0
  %3193 = vmatprep.subr.mxu0 0.0
  %3194 = vmatpush1.xpose.msra.mxu0 %v3191
  %3195 = vmatprep.subr.mxu0 0.0
  %3196 = vmatpush1.xpose.msra.mxu0 0.0
  %3197 = vmatprep.subr.mxu0 0.0
  %3198 = vmatpush1.xpose.msra.mxu0 0.0
  %3199 = vmatprep.subr.mxu0 0.0
  %3200 = vmatpush1.xpose.msra.mxu0 0.0
  %3201 = vmatprep.subr.mxu0 0.0
  %3202 = vmatpush1.xpose.msra.mxu0 0.0
  %3203 = vmatprep.subr.mxu0 0.0
  %3204 = vmatpush1.xpose.msra.mxu0 0.0
  %3205 = vmatprep.subr.mxu0 0.0
  %3206 = vmatpush1.xpose.msra.mxu0 0.0
  %3207 = vmatprep.subr.mxu0 0.0
  %3208 = vmatpush1.xpose.msra.mxu0 0.0
  %3209 = vmatprep.subr.mxu0 0.0
  %3210 = vmatpush1.xpose.msra.mxu0 0.0
  %3211 = vmatprep.subr.mxu0 0.0
  %3212 = vmatpush1.xpose.msra.mxu0 0.0
  %3213 = vmatprep.subr.mxu0 0.0
  %3214 = vmatpush1.xpose.msra.mxu0 0.0
  %3215 = vmatprep.subr.mxu0 0.0
  %3216 = vmatpush1.xpose.msra.mxu0 0.0
  %3217 = vmatprep.subr.mxu0 0.0
  %3218 = vmatpush1.xpose.msra.mxu0 0.0
  %3219 = vmatprep.subr.mxu0 0.0
  %3220 = vmatpush1.xpose.msra.mxu0 0.0
  %3221 = vmatprep.subr.mxu0 0.0
  %3222 = vmatpush1.xpose.msra.mxu0 0.0
  %3223 = vmatprep.subr.mxu0 0.0
  %3224 = vmatpush1.xpose.msra.mxu0 0.0
  %3225 = vmatprep.subr.mxu0 0.0
  %3226 = vmatpush1.xpose.msra.mxu0 0.0
  %3227 = vmatprep.subr.mxu0 0.0
  %3228 = vmatpush1.xpose.msra.mxu0 0.0
  %3229 = vmatprep.subr.mxu0 0.0
  %3230 = vmatpush1.xpose.msra.mxu0 0.0
  %3231 = vmatprep.subr.mxu0 0.0
  %3232 = vmatpush1.xpose.msra.mxu0 0.0
  %3233 = vmatprep.subr.mxu0 0.0
  %3234 = vmatpush1.xpose.msra.mxu0 0.0
  %3235 = vmatprep.subr.mxu0 0.0
  %3236 = vmatpush1.xpose.msra.mxu0 0.0
  %3237 = vmatprep.subr.mxu0 0.0
  %3238 = vmatpush1.xpose.msra.mxu0 0.0
  %3239 = vmatprep.subr.mxu0 0.0
  %3240 = vmatpush1.xpose.msra.mxu0 0.0
  %3241 = vmatprep.subr.mxu0 0.0
  %3242 = vmatpush1.xpose.msra.mxu0 0.0
  %3243 = vmatprep.subr.mxu0 0.0
  %3244 = vmatpush1.xpose.msra.mxu0 0.0
  %3245 = vmatprep.subr.mxu0 0.0
  %3246 = vmatpush1.xpose.msra.mxu0 0.0
  %3247 = vmatprep.subr.mxu0 0.0
  %3248 = vmatpush1.xpose.msra.mxu0 0.0
  %3249 = vmatprep.subr.mxu0 0.0
  %3250 = vmatpush1.xpose.msra.mxu0 0.0
  %3251 = vmatprep.subr.mxu0 0.0
  %3252 = vmatpush1.xpose.msra.mxu0 0.0
  %3253 = vmatprep.subr.mxu0 0.0
  %3254 = vmatpush1.xpose.msra.mxu0 0.0
  %3255 = vmatprep.subr.mxu0 0.0
  %3256 = vmatpush1.xpose.msra.mxu0 0.0
  %3257 = vmatprep.mubr.f32.mxu0 0.0
  %3258 = vmatmul.mubr.f32.gmra.mrb[0].mxu0 %v3189
  %v3259 = vpop.f32.mrb[0].mxu0
  %v3260 = vadd.f32 0.0, %v3259
  %v3261 = vpop.f32.mrb[0].mxu0
  %3262 = vdwg.mxu0
  %3263 = vrot.lane.b32.xlu0 %v2418, 112
  %v3264 = vpop.permute.xlu0 %3263
  %3265 = vrot.lane.b32.xlu0 %v2518, 112
  %v3266 = vpop.permute.xlu0 %3265
  %v3267 = vsel %vm586, %v3264, 0
  %v3269 = vsel %vm586, %v3266, 0
  %3271 = vmatprep.subr.mxu0 0.0
  %3272 = vmatpush1.xpose.msra.mxu0 %v3269
  %3273 = vmatprep.subr.mxu0 0.0
  %3274 = vmatpush1.xpose.msra.mxu0 0.0
  %3275 = vmatprep.subr.mxu0 0.0
  %3276 = vmatpush1.xpose.msra.mxu0 0.0
  %3277 = vmatprep.subr.mxu0 0.0
  %3278 = vmatpush1.xpose.msra.mxu0 0.0
  %3279 = vmatprep.subr.mxu0 0.0
  %3280 = vmatpush1.xpose.msra.mxu0 0.0
  %3281 = vmatprep.subr.mxu0 0.0
  %3282 = vmatpush1.xpose.msra.mxu0 0.0
  %3283 = vmatprep.subr.mxu0 0.0
  %3284 = vmatpush1.xpose.msra.mxu0 0.0
  %3285 = vmatprep.subr.mxu0 0.0
  %3286 = vmatpush1.xpose.msra.mxu0 0.0
  %3287 = vmatprep.subr.mxu0 0.0
  %3288 = vmatpush1.xpose.msra.mxu0 0.0
  %3289 = vmatprep.subr.mxu0 0.0
  %3290 = vmatpush1.xpose.msra.mxu0 0.0
  %3291 = vmatprep.subr.mxu0 0.0
  %3292 = vmatpush1.xpose.msra.mxu0 0.0
  %3293 = vmatprep.subr.mxu0 0.0
  %3294 = vmatpush1.xpose.msra.mxu0 0.0
  %3295 = vmatprep.subr.mxu0 0.0
  %3296 = vmatpush1.xpose.msra.mxu0 0.0
  %3297 = vmatprep.subr.mxu0 0.0
  %3298 = vmatpush1.xpose.msra.mxu0 0.0
  %3299 = vmatprep.subr.mxu0 0.0
  %3300 = vmatpush1.xpose.msra.mxu0 0.0
  %3301 = vmatprep.subr.mxu0 0.0
  %3302 = vmatpush1.xpose.msra.mxu0 0.0
  %3303 = vmatprep.subr.mxu0 0.0
  %3304 = vmatpush1.xpose.msra.mxu0 0.0
  %3305 = vmatprep.subr.mxu0 0.0
  %3306 = vmatpush1.xpose.msra.mxu0 0.0
  %3307 = vmatprep.subr.mxu0 0.0
  %3308 = vmatpush1.xpose.msra.mxu0 0.0
  %3309 = vmatprep.subr.mxu0 0.0
  %3310 = vmatpush1.xpose.msra.mxu0 0.0
  %3311 = vmatprep.subr.mxu0 0.0
  %3312 = vmatpush1.xpose.msra.mxu0 0.0
  %3313 = vmatprep.subr.mxu0 0.0
  %3314 = vmatpush1.xpose.msra.mxu0 0.0
  %3315 = vmatprep.subr.mxu0 0.0
  %3316 = vmatpush1.xpose.msra.mxu0 0.0
  %3317 = vmatprep.subr.mxu0 0.0
  %3318 = vmatpush1.xpose.msra.mxu0 0.0
  %3319 = vmatprep.subr.mxu0 0.0
  %3320 = vmatpush1.xpose.msra.mxu0 0.0
  %3321 = vmatprep.subr.mxu0 0.0
  %3322 = vmatpush1.xpose.msra.mxu0 0.0
  %3323 = vmatprep.subr.mxu0 0.0
  %3324 = vmatpush1.xpose.msra.mxu0 0.0
  %3325 = vmatprep.subr.mxu0 0.0
  %3326 = vmatpush1.xpose.msra.mxu0 0.0
  %3327 = vmatprep.subr.mxu0 0.0
  %3328 = vmatpush1.xpose.msra.mxu0 0.0
  %3329 = vmatprep.subr.mxu0 0.0
  %3330 = vmatpush1.xpose.msra.mxu0 0.0
  %3331 = vmatprep.subr.mxu0 0.0
  %3332 = vmatpush1.xpose.msra.mxu0 0.0
  %3333 = vmatprep.subr.mxu0 0.0
  %3334 = vmatpush1.xpose.msra.mxu0 0.0
  %3335 = vmatprep.mubr.f32.mxu0 0.0
  %3336 = vmatmul.mubr.f32.gmra.mrb[0].mxu0 %v3267
  %v3337 = vpop.f32.mrb[0].mxu0
  %v3338 = vadd.f32 0.0, %v3337
  %v3339 = vpop.f32.mrb[0].mxu0
  %3340 = vdwg.mxu0
  %v3341 = vmul.f32 %v3260, 0.35355338
  %v3342 = vmul.f32 %v3338, 0.35355338
  %v3343 = vadd.f32 %v3341, %v489
  %v3344 = vadd.f32 %v3342, %v490
  %v3345 = vsel %vm586, %v3343, -inf
  %3346 = vmax.xlane.f32.xlu0 %v3345
  %v3347 = vpop.xlane.xlu0 %3346
  %v3348 = vsel %vm586, %v3344, -inf
  %3349 = vmax.xlane.f32.xlu0 %v3348
  %v3350 = vpop.xlane.xlu0 %3349
  %v3351 = vsub.f32 %v3343, %v3347
  %v3352 = vsub.f32 %v3344, %v3350
  %v3353 = vmul.f32 %v3351, 1.442695
  %v3354 = vpow.pop %v3353
  %v3355 = vmul.f32 %v3352, 1.442695
  %v3356 = vpow.pop %v3355
  %v3357 = vsel %vm586, %v3354, 0.0
  %3358 = vadd.xlane.f32.xlu0 %v3357
  %v3359 = vpop.xlane.xlu0 %3358
  %v3360 = vsel %vm586, %v3356, 0.0
  %3361 = vadd.xlane.f32.xlu0 %v3360
  %v3362 = vpop.xlane.xlu0 %3361
  %v3363 = vrcp.pop %v3359
  %v3364 = vrcp.pop %v3362
  %v3365 = vmul.f32 %v3354, %v3363
  %v3366 = vmul.f32 %v3356, %v3364
  %3367 = vrot.lane.b32.xlu0 %v2513, 80
  %v3368 = vpop.permute.xlu0 %3367
  %v3371 = vsel %vm586, %v3365, 0
  %3373 = vmatprep.subr.mxu0 0.0
  %3374 = vmatpush1.msra.mxu0 %v3368
  %3375 = vmatprep.subr.mxu0 0.0
  %3376 = vmatpush1.msra.mxu0 0.0
  %3377 = vmatprep.subr.mxu0 0.0
  %3378 = vmatpush1.msra.mxu0 0.0
  %3379 = vmatprep.subr.mxu0 0.0
  %3380 = vmatpush1.msra.mxu0 0.0
  %3381 = vmatprep.subr.mxu0 0.0
  %3382 = vmatpush1.msra.mxu0 0.0
  %3383 = vmatprep.subr.mxu0 0.0
  %3384 = vmatpush1.msra.mxu0 0.0
  %3385 = vmatprep.subr.mxu0 0.0
  %3386 = vmatpush1.msra.mxu0 0.0
  %3387 = vmatprep.subr.mxu0 0.0
  %3388 = vmatpush1.msra.mxu0 0.0
  %3389 = vmatprep.subr.mxu0 0.0
  %3390 = vmatpush1.msra.mxu0 0.0
  %3391 = vmatprep.subr.mxu0 0.0
  %3392 = vmatpush1.msra.mxu0 0.0
  %3393 = vmatprep.subr.mxu0 0.0
  %3394 = vmatpush1.msra.mxu0 0.0
  %3395 = vmatprep.subr.mxu0 0.0
  %3396 = vmatpush1.msra.mxu0 0.0
  %3397 = vmatprep.subr.mxu0 0.0
  %3398 = vmatpush1.msra.mxu0 0.0
  %3399 = vmatprep.subr.mxu0 0.0
  %3400 = vmatpush1.msra.mxu0 0.0
  %3401 = vmatprep.subr.mxu0 0.0
  %3402 = vmatpush1.msra.mxu0 0.0
  %3403 = vmatprep.subr.mxu0 0.0
  %3404 = vmatpush1.msra.mxu0 0.0
  %3405 = vmatprep.subr.mxu0 0.0
  %3406 = vmatpush1.msra.mxu0 0.0
  %3407 = vmatprep.subr.mxu0 0.0
  %3408 = vmatpush1.msra.mxu0 0.0
  %3409 = vmatprep.subr.mxu0 0.0
  %3410 = vmatpush1.msra.mxu0 0.0
  %3411 = vmatprep.subr.mxu0 0.0
  %3412 = vmatpush1.msra.mxu0 0.0
  %3413 = vmatprep.subr.mxu0 0.0
  %3414 = vmatpush1.msra.mxu0 0.0
  %3415 = vmatprep.subr.mxu0 0.0
  %3416 = vmatpush1.msra.mxu0 0.0
  %3417 = vmatprep.subr.mxu0 0.0
  %3418 = vmatpush1.msra.mxu0 0.0
  %3419 = vmatprep.subr.mxu0 0.0
  %3420 = vmatpush1.msra.mxu0 0.0
  %3421 = vmatprep.subr.mxu0 0.0
  %3422 = vmatpush1.msra.mxu0 0.0
  %3423 = vmatprep.subr.mxu0 0.0
  %3424 = vmatpush1.msra.mxu0 0.0
  %3425 = vmatprep.subr.mxu0 0.0
  %3426 = vmatpush1.msra.mxu0 0.0
  %3427 = vmatprep.subr.mxu0 0.0
  %3428 = vmatpush1.msra.mxu0 0.0
  %3429 = vmatprep.subr.mxu0 0.0
  %3430 = vmatpush1.msra.mxu0 0.0
  %3431 = vmatprep.subr.mxu0 0.0
  %3432 = vmatpush1.msra.mxu0 0.0
  %3433 = vmatprep.subr.mxu0 0.0
  %3434 = vmatpush1.msra.mxu0 0.0
  %3435 = vmatprep.subr.mxu0 0.0
  %3436 = vmatpush1.msra.mxu0 0.0
  %3437 = vmatprep.mubr.f32.mxu0 0.0
  %3438 = vmatmul.mubr.f32.gmra.mrb[0].mxu0 %v3371
  %v3439 = vpop.f32.mrb[0].mxu0
  %v3440 = vadd.f32 0.0, %v3439
  %v3441 = vpop.f32.mrb[0].mxu0
  %3442 = vdwg.mxu0
  %3443 = vrot.lane.b32.xlu0 %v2518, 80
  %v3444 = vpop.permute.xlu0 %3443
  %v3447 = vsel %vm586, %v3366, 0
  %3449 = vmatprep.subr.mxu0 0.0
  %3450 = vmatpush1.msra.mxu0 %v3444
  %3451 = vmatprep.subr.mxu0 0.0
  %3452 = vmatpush1.msra.mxu0 0.0
  %3453 = vmatprep.subr.mxu0 0.0
  %3454 = vmatpush1.msra.mxu0 0.0
  %3455 = vmatprep.subr.mxu0 0.0
  %3456 = vmatpush1.msra.mxu0 0.0
  %3457 = vmatprep.subr.mxu0 0.0
  %3458 = vmatpush1.msra.mxu0 0.0
  %3459 = vmatprep.subr.mxu0 0.0
  %3460 = vmatpush1.msra.mxu0 0.0
  %3461 = vmatprep.subr.mxu0 0.0
  %3462 = vmatpush1.msra.mxu0 0.0
  %3463 = vmatprep.subr.mxu0 0.0
  %3464 = vmatpush1.msra.mxu0 0.0
  %3465 = vmatprep.subr.mxu0 0.0
  %3466 = vmatpush1.msra.mxu0 0.0
  %3467 = vmatprep.subr.mxu0 0.0
  %3468 = vmatpush1.msra.mxu0 0.0
  %3469 = vmatprep.subr.mxu0 0.0
  %3470 = vmatpush1.msra.mxu0 0.0
  %3471 = vmatprep.subr.mxu0 0.0
  %3472 = vmatpush1.msra.mxu0 0.0
  %3473 = vmatprep.subr.mxu0 0.0
  %3474 = vmatpush1.msra.mxu0 0.0
  %3475 = vmatprep.subr.mxu0 0.0
  %3476 = vmatpush1.msra.mxu0 0.0
  %3477 = vmatprep.subr.mxu0 0.0
  %3478 = vmatpush1.msra.mxu0 0.0
  %3479 = vmatprep.subr.mxu0 0.0
  %3480 = vmatpush1.msra.mxu0 0.0
  %3481 = vmatprep.subr.mxu0 0.0
  %3482 = vmatpush1.msra.mxu0 0.0
  %3483 = vmatprep.subr.mxu0 0.0
  %3484 = vmatpush1.msra.mxu0 0.0
  %3485 = vmatprep.subr.mxu0 0.0
  %3486 = vmatpush1.msra.mxu0 0.0
  %3487 = vmatprep.subr.mxu0 0.0
  %3488 = vmatpush1.msra.mxu0 0.0
  %3489 = vmatprep.subr.mxu0 0.0
  %3490 = vmatpush1.msra.mxu0 0.0
  %3491 = vmatprep.subr.mxu0 0.0
  %3492 = vmatpush1.msra.mxu0 0.0
  %3493 = vmatprep.subr.mxu0 0.0
  %3494 = vmatpush1.msra.mxu0 0.0
  %3495 = vmatprep.subr.mxu0 0.0
  %3496 = vmatpush1.msra.mxu0 0.0
  %3497 = vmatprep.subr.mxu0 0.0
  %3498 = vmatpush1.msra.mxu0 0.0
  %3499 = vmatprep.subr.mxu0 0.0
  %3500 = vmatpush1.msra.mxu0 0.0
  %3501 = vmatprep.subr.mxu0 0.0
  %3502 = vmatpush1.msra.mxu0 0.0
  %3503 = vmatprep.subr.mxu0 0.0
  %3504 = vmatpush1.msra.mxu0 0.0
  %3505 = vmatprep.subr.mxu0 0.0
  %3506 = vmatpush1.msra.mxu0 0.0
  %3507 = vmatprep.subr.mxu0 0.0
  %3508 = vmatpush1.msra.mxu0 0.0
  %3509 = vmatprep.subr.mxu0 0.0
  %3510 = vmatpush1.msra.mxu0 0.0
  %3511 = vmatprep.subr.mxu0 0.0
  %3512 = vmatpush1.msra.mxu0 0.0
  %3513 = vmatprep.mubr.f32.mxu0 0.0
  %3514 = vmatmul.mubr.f32.gmra.mrb[0].mxu0 %v3447
  %v3515 = vpop.f32.mrb[0].mxu0
  %v3516 = vadd.f32 0.0, %v3515
  %v3517 = vpop.f32.mrb[0].mxu0
  %3518 = vdwg.mxu0
  %3519 = vrot.lane.b32.xlu0 %v2413, 104
  %v3520 = vpop.permute.xlu0 %3519
  %3521 = vrot.lane.b32.xlu0 %v2513, 104
  %v3522 = vpop.permute.xlu0 %3521
  %v3523 = vsel %vm586, %v3520, 0
  %v3525 = vsel %vm586, %v3522, 0
  %3527 = vmatprep.subr.mxu0 0.0
  %3528 = vmatpush1.xpose.msra.mxu0 %v3525
  %3529 = vmatprep.subr.mxu0 0.0
  %3530 = vmatpush1.xpose.msra.mxu0 0.0
  %3531 = vmatprep.subr.mxu0 0.0
  %3532 = vmatpush1.xpose.msra.mxu0 0.0
  %3533 = vmatprep.subr.mxu0 0.0
  %3534 = vmatpush1.xpose.msra.mxu0 0.0
  %3535 = vmatprep.subr.mxu0 0.0
  %3536 = vmatpush1.xpose.msra.mxu0 0.0
  %3537 = vmatprep.subr.mxu0 0.0
  %3538 = vmatpush1.xpose.msra.mxu0 0.0
  %3539 = vmatprep.subr.mxu0 0.0
  %3540 = vmatpush1.xpose.msra.mxu0 0.0
  %3541 = vmatprep.subr.mxu0 0.0
  %3542 = vmatpush1.xpose.msra.mxu0 0.0
  %3543 = vmatprep.subr.mxu0 0.0
  %3544 = vmatpush1.xpose.msra.mxu0 0.0
  %3545 = vmatprep.subr.mxu0 0.0
  %3546 = vmatpush1.xpose.msra.mxu0 0.0
  %3547 = vmatprep.subr.mxu0 0.0
  %3548 = vmatpush1.xpose.msra.mxu0 0.0
  %3549 = vmatprep.subr.mxu0 0.0
  %3550 = vmatpush1.xpose.msra.mxu0 0.0
  %3551 = vmatprep.subr.mxu0 0.0
  %3552 = vmatpush1.xpose.msra.mxu0 0.0
  %3553 = vmatprep.subr.mxu0 0.0
  %3554 = vmatpush1.xpose.msra.mxu0 0.0
  %3555 = vmatprep.subr.mxu0 0.0
  %3556 = vmatpush1.xpose.msra.mxu0 0.0
  %3557 = vmatprep.subr.mxu0 0.0
  %3558 = vmatpush1.xpose.msra.mxu0 0.0
  %3559 = vmatprep.subr.mxu0 0.0
  %3560 = vmatpush1.xpose.msra.mxu0 0.0
  %3561 = vmatprep.subr.mxu0 0.0
  %3562 = vmatpush1.xpose.msra.mxu0 0.0
  %3563 = vmatprep.subr.mxu0 0.0
  %3564 = vmatpush1.xpose.msra.mxu0 0.0
  %3565 = vmatprep.subr.mxu0 0.0
  %3566 = vmatpush1.xpose.msra.mxu0 0.0
  %3567 = vmatprep.subr.mxu0 0.0
  %3568 = vmatpush1.xpose.msra.mxu0 0.0
  %3569 = vmatprep.subr.mxu0 0.0
  %3570 = vmatpush1.xpose.msra.mxu0 0.0
  %3571 = vmatprep.subr.mxu0 0.0
  %3572 = vmatpush1.xpose.msra.mxu0 0.0
  %3573 = vmatprep.subr.mxu0 0.0
  %3574 = vmatpush1.xpose.msra.mxu0 0.0
  %3575 = vmatprep.subr.mxu0 0.0
  %3576 = vmatpush1.xpose.msra.mxu0 0.0
  %3577 = vmatprep.subr.mxu0 0.0
  %3578 = vmatpush1.xpose.msra.mxu0 0.0
  %3579 = vmatprep.subr.mxu0 0.0
  %3580 = vmatpush1.xpose.msra.mxu0 0.0
  %3581 = vmatprep.subr.mxu0 0.0
  %3582 = vmatpush1.xpose.msra.mxu0 0.0
  %3583 = vmatprep.subr.mxu0 0.0
  %3584 = vmatpush1.xpose.msra.mxu0 0.0
  %3585 = vmatprep.subr.mxu0 0.0
  %3586 = vmatpush1.xpose.msra.mxu0 0.0
  %3587 = vmatprep.subr.mxu0 0.0
  %3588 = vmatpush1.xpose.msra.mxu0 0.0
  %3589 = vmatprep.subr.mxu0 0.0
  %3590 = vmatpush1.xpose.msra.mxu0 0.0
  %3591 = vmatprep.mubr.f32.mxu0 0.0
  %3592 = vmatmul.mubr.f32.gmra.mrb[0].mxu0 %v3523
  %v3593 = vpop.f32.mrb[0].mxu0
  %v3594 = vadd.f32 0.0, %v3593
  %v3595 = vpop.f32.mrb[0].mxu0
  %3596 = vdwg.mxu0
  %3597 = vrot.lane.b32.xlu0 %v2418, 104
  %v3598 = vpop.permute.xlu0 %3597
  %3599 = vrot.lane.b32.xlu0 %v2518, 104
  %v3600 = vpop.permute.xlu0 %3599
  %v3601 = vsel %vm586, %v3598, 0
  %v3603 = vsel %vm586, %v3600, 0
  %3605 = vmatprep.subr.mxu0 0.0
  %3606 = vmatpush1.xpose.msra.mxu0 %v3603
  %3607 = vmatprep.subr.mxu0 0.0
  %3608 = vmatpush1.xpose.msra.mxu0 0.0
  %3609 = vmatprep.subr.mxu0 0.0
  %3610 = vmatpush1.xpose.msra.mxu0 0.0
  %3611 = vmatprep.subr.mxu0 0.0
  %3612 = vmatpush1.xpose.msra.mxu0 0.0
  %3613 = vmatprep.subr.mxu0 0.0
  %3614 = vmatpush1.xpose.msra.mxu0 0.0
  %3615 = vmatprep.subr.mxu0 0.0
  %3616 = vmatpush1.xpose.msra.mxu0 0.0
  %3617 = vmatprep.subr.mxu0 0.0
  %3618 = vmatpush1.xpose.msra.mxu0 0.0
  %3619 = vmatprep.subr.mxu0 0.0
  %3620 = vmatpush1.xpose.msra.mxu0 0.0
  %3621 = vmatprep.subr.mxu0 0.0
  %3622 = vmatpush1.xpose.msra.mxu0 0.0
  %3623 = vmatprep.subr.mxu0 0.0
  %3624 = vmatpush1.xpose.msra.mxu0 0.0
  %3625 = vmatprep.subr.mxu0 0.0
  %3626 = vmatpush1.xpose.msra.mxu0 0.0
  %3627 = vmatprep.subr.mxu0 0.0
  %3628 = vmatpush1.xpose.msra.mxu0 0.0
  %3629 = vmatprep.subr.mxu0 0.0
  %3630 = vmatpush1.xpose.msra.mxu0 0.0
  %3631 = vmatprep.subr.mxu0 0.0
  %3632 = vmatpush1.xpose.msra.mxu0 0.0
  %3633 = vmatprep.subr.mxu0 0.0
  %3634 = vmatpush1.xpose.msra.mxu0 0.0
  %3635 = vmatprep.subr.mxu0 0.0
  %3636 = vmatpush1.xpose.msra.mxu0 0.0
  %3637 = vmatprep.subr.mxu0 0.0
  %3638 = vmatpush1.xpose.msra.mxu0 0.0
  %3639 = vmatprep.subr.mxu0 0.0
  %3640 = vmatpush1.xpose.msra.mxu0 0.0
  %3641 = vmatprep.subr.mxu0 0.0
  %3642 = vmatpush1.xpose.msra.mxu0 0.0
  %3643 = vmatprep.subr.mxu0 0.0
  %3644 = vmatpush1.xpose.msra.mxu0 0.0
  %3645 = vmatprep.subr.mxu0 0.0
  %3646 = vmatpush1.xpose.msra.mxu0 0.0
  %3647 = vmatprep.subr.mxu0 0.0
  %3648 = vmatpush1.xpose.msra.mxu0 0.0
  %3649 = vmatprep.subr.mxu0 0.0
  %3650 = vmatpush1.xpose.msra.mxu0 0.0
  %3651 = vmatprep.subr.mxu0 0.0
  %3652 = vmatpush1.xpose.msra.mxu0 0.0
  %3653 = vmatprep.subr.mxu0 0.0
  %3654 = vmatpush1.xpose.msra.mxu0 0.0
  %3655 = vmatprep.subr.mxu0 0.0
  %3656 = vmatpush1.xpose.msra.mxu0 0.0
  %3657 = vmatprep.subr.mxu0 0.0
  %3658 = vmatpush1.xpose.msra.mxu0 0.0
  %3659 = vmatprep.subr.mxu0 0.0
  %3660 = vmatpush1.xpose.msra.mxu0 0.0
  %3661 = vmatprep.subr.mxu0 0.0
  %3662 = vmatpush1.xpose.msra.mxu0 0.0
  %3663 = vmatprep.subr.mxu0 0.0
  %3664 = vmatpush1.xpose.msra.mxu0 0.0
  %3665 = vmatprep.subr.mxu0 0.0
  %3666 = vmatpush1.xpose.msra.mxu0 0.0
  %3667 = vmatprep.subr.mxu0 0.0
  %3668 = vmatpush1.xpose.msra.mxu0 0.0
  %3669 = vmatprep.mubr.f32.mxu0 0.0
  %3670 = vmatmul.mubr.f32.gmra.mrb[0].mxu0 %v3601
  %v3671 = vpop.f32.mrb[0].mxu0
  %v3672 = vadd.f32 0.0, %v3671
  %v3673 = vpop.f32.mrb[0].mxu0
  %3674 = vdwg.mxu0
  %v3675 = vmul.f32 %v3594, 0.35355338
  %v3676 = vmul.f32 %v3672, 0.35355338
  %v3677 = vadd.f32 %v3675, %v489
  %v3678 = vadd.f32 %v3676, %v490
  %v3679 = vsel %vm586, %v3677, -inf
  %3680 = vmax.xlane.f32.xlu0 %v3679
  %v3681 = vpop.xlane.xlu0 %3680
  %v3682 = vsel %vm586, %v3678, -inf
  %3683 = vmax.xlane.f32.xlu0 %v3682
  %v3684 = vpop.xlane.xlu0 %3683
  %v3685 = vsub.f32 %v3677, %v3681
  %v3686 = vsub.f32 %v3678, %v3684
  %v3687 = vmul.f32 %v3685, 1.442695
  %v3688 = vpow.pop %v3687
  %v3689 = vmul.f32 %v3686, 1.442695
  %v3690 = vpow.pop %v3689
  %v3691 = vsel %vm586, %v3688, 0.0
  %3692 = vadd.xlane.f32.xlu0 %v3691
  %v3693 = vpop.xlane.xlu0 %3692
  %v3694 = vsel %vm586, %v3690, 0.0
  %3695 = vadd.xlane.f32.xlu0 %v3694
  %v3696 = vpop.xlane.xlu0 %3695
  %v3697 = vrcp.pop %v3693
  %v3698 = vrcp.pop %v3696
  %v3699 = vmul.f32 %v3688, %v3697
  %v3700 = vmul.f32 %v3690, %v3698
  %3701 = vrot.lane.b32.xlu0 %v2513, 72
  %v3702 = vpop.permute.xlu0 %3701
  %v3705 = vsel %vm586, %v3699, 0
  %3707 = vmatprep.subr.mxu0 0.0
  %3708 = vmatpush1.msra.mxu0 %v3702
  %3709 = vmatprep.subr.mxu0 0.0
  %3710 = vmatpush1.msra.mxu0 0.0
  %3711 = vmatprep.subr.mxu0 0.0
  %3712 = vmatpush1.msra.mxu0 0.0
  %3713 = vmatprep.subr.mxu0 0.0
  %3714 = vmatpush1.msra.mxu0 0.0
  %3715 = vmatprep.subr.mxu0 0.0
  %3716 = vmatpush1.msra.mxu0 0.0
  %3717 = vmatprep.subr.mxu0 0.0
  %3718 = vmatpush1.msra.mxu0 0.0
  %3719 = vmatprep.subr.mxu0 0.0
  %3720 = vmatpush1.msra.mxu0 0.0
  %3721 = vmatprep.subr.mxu0 0.0
  %3722 = vmatpush1.msra.mxu0 0.0
  %3723 = vmatprep.subr.mxu0 0.0
  %3724 = vmatpush1.msra.mxu0 0.0
  %3725 = vmatprep.subr.mxu0 0.0
  %3726 = vmatpush1.msra.mxu0 0.0
  %3727 = vmatprep.subr.mxu0 0.0
  %3728 = vmatpush1.msra.mxu0 0.0
  %3729 = vmatprep.subr.mxu0 0.0
  %3730 = vmatpush1.msra.mxu0 0.0
  %3731 = vmatprep.subr.mxu0 0.0
  %3732 = vmatpush1.msra.mxu0 0.0
  %3733 = vmatprep.subr.mxu0 0.0
  %3734 = vmatpush1.msra.mxu0 0.0
  %3735 = vmatprep.subr.mxu0 0.0
  %3736 = vmatpush1.msra.mxu0 0.0
  %3737 = vmatprep.subr.mxu0 0.0
  %3738 = vmatpush1.msra.mxu0 0.0
  %3739 = vmatprep.subr.mxu0 0.0
  %3740 = vmatpush1.msra.mxu0 0.0
  %3741 = vmatprep.subr.mxu0 0.0
  %3742 = vmatpush1.msra.mxu0 0.0
  %3743 = vmatprep.subr.mxu0 0.0
  %3744 = vmatpush1.msra.mxu0 0.0
  %3745 = vmatprep.subr.mxu0 0.0
  %3746 = vmatpush1.msra.mxu0 0.0
  %3747 = vmatprep.subr.mxu0 0.0
  %3748 = vmatpush1.msra.mxu0 0.0
  %3749 = vmatprep.subr.mxu0 0.0
  %3750 = vmatpush1.msra.mxu0 0.0
  %3751 = vmatprep.subr.mxu0 0.0
  %3752 = vmatpush1.msra.mxu0 0.0
  %3753 = vmatprep.subr.mxu0 0.0
  %3754 = vmatpush1.msra.mxu0 0.0
  %3755 = vmatprep.subr.mxu0 0.0
  %3756 = vmatpush1.msra.mxu0 0.0
  %3757 = vmatprep.subr.mxu0 0.0
  %3758 = vmatpush1.msra.mxu0 0.0
  %3759 = vmatprep.subr.mxu0 0.0
  %3760 = vmatpush1.msra.mxu0 0.0
  %3761 = vmatprep.subr.mxu0 0.0
  %3762 = vmatpush1.msra.mxu0 0.0
  %3763 = vmatprep.subr.mxu0 0.0
  %3764 = vmatpush1.msra.mxu0 0.0
  %3765 = vmatprep.subr.mxu0 0.0
  %3766 = vmatpush1.msra.mxu0 0.0
  %3767 = vmatprep.subr.mxu0 0.0
  %3768 = vmatpush1.msra.mxu0 0.0
  %3769 = vmatprep.subr.mxu0 0.0
  %3770 = vmatpush1.msra.mxu0 0.0
  %3771 = vmatprep.mubr.f32.mxu0 0.0
  %3772 = vmatmul.mubr.f32.gmra.mrb[0].mxu0 %v3705
  %v3773 = vpop.f32.mrb[0].mxu0
  %v3774 = vadd.f32 0.0, %v3773
  %v3775 = vpop.f32.mrb[0].mxu0
  %3776 = vdwg.mxu0
  %3777 = vrot.lane.b32.xlu0 %v2518, 72
  %v3778 = vpop.permute.xlu0 %3777
  %v3781 = vsel %vm586, %v3700, 0
  %3783 = vmatprep.subr.mxu0 0.0
  %3784 = vmatpush1.msra.mxu0 %v3778
  %3785 = vmatprep.subr.mxu0 0.0
  %3786 = vmatpush1.msra.mxu0 0.0
  %3787 = vmatprep.subr.mxu0 0.0
  %3788 = vmatpush1.msra.mxu0 0.0
  %3789 = vmatprep.subr.mxu0 0.0
  %3790 = vmatpush1.msra.mxu0 0.0
  %3791 = vmatprep.subr.mxu0 0.0
  %3792 = vmatpush1.msra.mxu0 0.0
  %3793 = vmatprep.subr.mxu0 0.0
  %3794 = vmatpush1.msra.mxu0 0.0
  %3795 = vmatprep.subr.mxu0 0.0
  %3796 = vmatpush1.msra.mxu0 0.0
  %3797 = vmatprep.subr.mxu0 0.0
  %3798 = vmatpush1.msra.mxu0 0.0
  %3799 = vmatprep.subr.mxu0 0.0
  %3800 = vmatpush1.msra.mxu0 0.0
  %3801 = vmatprep.subr.mxu0 0.0
  %3802 = vmatpush1.msra.mxu0 0.0
  %3803 = vmatprep.subr.mxu0 0.0
  %3804 = vmatpush1.msra.mxu0 0.0
  %3805 = vmatprep.subr.mxu0 0.0
  %3806 = vmatpush1.msra.mxu0 0.0
  %3807 = vmatprep.subr.mxu0 0.0
  %3808 = vmatpush1.msra.mxu0 0.0
  %3809 = vmatprep.subr.mxu0 0.0
  %3810 = vmatpush1.msra.mxu0 0.0
  %3811 = vmatprep.subr.mxu0 0.0
  %3812 = vmatpush1.msra.mxu0 0.0
  %3813 = vmatprep.subr.mxu0 0.0
  %3814 = vmatpush1.msra.mxu0 0.0
  %3815 = vmatprep.subr.mxu0 0.0
  %3816 = vmatpush1.msra.mxu0 0.0
  %3817 = vmatprep.subr.mxu0 0.0
  %3818 = vmatpush1.msra.mxu0 0.0
  %3819 = vmatprep.subr.mxu0 0.0
  %3820 = vmatpush1.msra.mxu0 0.0
  %3821 = vmatprep.subr.mxu0 0.0
  %3822 = vmatpush1.msra.mxu0 0.0
  %3823 = vmatprep.subr.mxu0 0.0
  %3824 = vmatpush1.msra.mxu0 0.0
  %3825 = vmatprep.subr.mxu0 0.0
  %3826 = vmatpush1.msra.mxu0 0.0
  %3827 = vmatprep.subr.mxu0 0.0
  %3828 = vmatpush1.msra.mxu0 0.0
  %3829 = vmatprep.subr.mxu0 0.0
  %3830 = vmatpush1.msra.mxu0 0.0
  %3831 = vmatprep.subr.mxu0 0.0
  %3832 = vmatpush1.msra.mxu0 0.0
  %3833 = vmatprep.subr.mxu0 0.0
  %3834 = vmatpush1.msra.mxu0 0.0
  %3835 = vmatprep.subr.mxu0 0.0
  %3836 = vmatpush1.msra.mxu0 0.0
  %3837 = vmatprep.subr.mxu0 0.0
  %3838 = vmatpush1.msra.mxu0 0.0
  %3839 = vmatprep.subr.mxu0 0.0
  %3840 = vmatpush1.msra.mxu0 0.0
  %3841 = vmatprep.subr.mxu0 0.0
  %3842 = vmatpush1.msra.mxu0 0.0
  %3843 = vmatprep.subr.mxu0 0.0
  %3844 = vmatpush1.msra.mxu0 0.0
  %3845 = vmatprep.subr.mxu0 0.0
  %3846 = vmatpush1.msra.mxu0 0.0
  %3847 = vmatprep.mubr.f32.mxu0 0.0
  %3848 = vmatmul.mubr.f32.gmra.mrb[0].mxu0 %v3781
  %v3849 = vpop.f32.mrb[0].mxu0
  %v3850 = vadd.f32 0.0, %v3849
  %v3851 = vpop.f32.mrb[0].mxu0
  %3852 = vdwg.mxu0
  %3855 = vrot.lane.b32.xlu0 %v3106, 8
  %v3856 = vpop.permute.xlu0 %3855
  %3857 = vrot.lane.b32.xlu0 %v3182, 8
  %v3858 = vpop.permute.xlu0 %3857
  %3863 = vrot.lane.b32.xlu0 %v3440, 16
  %v3864 = vpop.permute.xlu0 %3863
  %3865 = vrot.lane.b32.xlu0 %v3516, 16
  %v3866 = vpop.permute.xlu0 %3865
  %3871 = vrot.lane.b32.xlu0 %v3774, 24
  %v3872 = vpop.permute.xlu0 %3871
  %3873 = vrot.lane.b32.xlu0 %v3850, 24
  %v3874 = vpop.permute.xlu0 %3873
  %v3877 = vsel %vm586, %v2772, %v3856
  %v3878 = vsel %vm586, %v2848, %v3858
  %v3879 = vsel %vm1944, %v3877, %v3864
  %v3880 = vsel %vm1944, %v3878, %v3866
  %v3881 = vsel %vm1947, %v3879, %v3872
  %v3882 = vsel %vm1947, %v3880, %v3874
  %v3883 = vld [vmem:[%s53] sm:$0xff]
  %v3884 = vld [vmem:[%s53 + $0x8] sm:$0xff]
  %v3885 = vld [vmem:[%s53 + $0x10] sm:$0xff]
  %v3886 = vld [vmem:[%s53 + $0x18] sm:$0xff]
  %v3887 = vld [vmem:[%s55] sm:$0x1]
  %v3889 = vlaneseq
  %v3890 = vshrl.u32 %v3889, 7
  %v3891 = vsub.s32 0, %v3890
  %v3892 = vrot.slane %v3887, %v3891
  %v3895 = vsel %vm349, %v3881, 0
  %v3898 = vsel %vm349, %v3882, 0
  %3900 = vmatprep.subr.mxu0 0.0
  %3901 = vmatpush1.msra.mxu0 %v3883
  %3902 = vmatprep.subr.mxu0 0.0
  %3903 = vmatpush1.msra.mxu0 %v3884
  %3904 = vmatprep.subr.mxu0 0.0
  %3905 = vmatpush1.msra.mxu0 %v3885
  %3906 = vmatprep.subr.mxu0 0.0
  %3907 = vmatpush1.msra.mxu0 %v3886
  %3908 = vmatprep.subr.mxu0 0.0
  %3909 = vmatpush1.msra.mxu0 0.0
  %3910 = vmatprep.subr.mxu0 0.0
  %3911 = vmatpush1.msra.mxu0 0.0
  %3912 = vmatprep.subr.mxu0 0.0
  %3913 = vmatpush1.msra.mxu0 0.0
  %3914 = vmatprep.subr.mxu0 0.0
  %3915 = vmatpush1.msra.mxu0 0.0
  %3916 = vmatprep.subr.mxu0 0.0
  %3917 = vmatpush1.msra.mxu0 0.0
  %3918 = vmatprep.subr.mxu0 0.0
  %3919 = vmatpush1.msra.mxu0 0.0
  %3920 = vmatprep.subr.mxu0 0.0
  %3921 = vmatpush1.msra.mxu0 0.0
  %3922 = vmatprep.subr.mxu0 0.0
  %3923 = vmatpush1.msra.mxu0 0.0
  %3924 = vmatprep.subr.mxu0 0.0
  %3925 = vmatpush1.msra.mxu0 0.0
  %3926 = vmatprep.subr.mxu0 0.0
  %3927 = vmatpush1.msra.mxu0 0.0
  %3928 = vmatprep.subr.mxu0 0.0
  %3929 = vmatpush1.msra.mxu0 0.0
  %3930 = vmatprep.subr.mxu0 0.0
  %3931 = vmatpush1.msra.mxu0 0.0
  %3932 = vmatprep.subr.mxu0 0.0
  %3933 = vmatpush1.msra.mxu0 0.0
  %3934 = vmatprep.subr.mxu0 0.0
  %3935 = vmatpush1.msra.mxu0 0.0
  %3936 = vmatprep.subr.mxu0 0.0
  %3937 = vmatpush1.msra.mxu0 0.0
  %3938 = vmatprep.subr.mxu0 0.0
  %3939 = vmatpush1.msra.mxu0 0.0
  %3940 = vmatprep.subr.mxu0 0.0
  %3941 = vmatpush1.msra.mxu0 0.0
  %3942 = vmatprep.subr.mxu0 0.0
  %3943 = vmatpush1.msra.mxu0 0.0
  %3944 = vmatprep.subr.mxu0 0.0
  %3945 = vmatpush1.msra.mxu0 0.0
  %3946 = vmatprep.subr.mxu0 0.0
  %3947 = vmatpush1.msra.mxu0 0.0
  %3948 = vmatprep.subr.mxu0 0.0
  %3949 = vmatpush1.msra.mxu0 0.0
  %3950 = vmatprep.subr.mxu0 0.0
  %3951 = vmatpush1.msra.mxu0 0.0
  %3952 = vmatprep.subr.mxu0 0.0
  %3953 = vmatpush1.msra.mxu0 0.0
  %3954 = vmatprep.subr.mxu0 0.0
  %3955 = vmatpush1.msra.mxu0 0.0
  %3956 = vmatprep.subr.mxu0 0.0
  %3957 = vmatpush1.msra.mxu0 0.0
  %3958 = vmatprep.subr.mxu0 0.0
  %3959 = vmatpush1.msra.mxu0 0.0
  %3960 = vmatprep.subr.mxu0 0.0
  %3961 = vmatpush1.msra.mxu0 0.0
  %3962 = vmatprep.subr.mxu0 0.0
  %3963 = vmatpush1.msra.mxu0 0.0
  %3964 = vmatprep.mubr.f32.mxu0 0.0
  %3965 = vmatmul.mubr.f32.gmra.mrb[0].mxu0 %v3895
  %v3966 = vpop.f32.mrb[0].mxu0
  %v3967 = vadd.f32 %v3892, %v3966
  %v3968 = vpop.f32.mrb[0].mxu0
  %3969 = vmatprep.mubr.f32.mxu0 0.0
  %3970 = vmatmul.mubr.f32.gmra.mrb[0].mxu0 %v3898
  %v3971 = vpop.f32.mrb[0].mxu0
  %v3972 = vadd.f32 %v3892, %v3971
  %v3973 = vpop.f32.mrb[0].mxu0
  %3974 = vdwg.mxu0
  %v3975 = vadd.f32 %v2327, %v3967
  %v3976 = vadd.f32 %v2328, %v3972
  %v3977 = vld [vmem:[%s57] sm:$0x1]
  %v3978 = vld [vmem:[%s59] sm:$0x1]
  %v3979 = vsel %vm349, %v3975, 0.0
  %3980 = vadd.xlane.f32.xlu0 %v3979
  %v3981 = vpop.xlane.xlu0 %3980
  %v3982 = vsel %vm349, %v3976, 0.0
  %3983 = vadd.xlane.f32.xlu0 %v3982
  %v3984 = vpop.xlane.xlu0 %3983
  %v3985 = vmul.f32 %v3981, %v356
  %v3986 = vmul.f32 %v3984, %v356
  %v3987 = vsub.f32 %v3975, %v3985
  %v3988 = vsub.f32 %v3976, %v3986
  %v3989 = vmul.f32 %v3987, %v3987
  %v3990 = vmul.f32 %v3988, %v3988
  %v3991 = vsel %vm349, %v3989, 0.0
  %3992 = vadd.xlane.f32.xlu0 %v3991
  %v3993 = vpop.xlane.xlu0 %3992
  %v3994 = vsel %vm349, %v3990, 0.0
  %3995 = vadd.xlane.f32.xlu0 %v3994
  %v3996 = vpop.xlane.xlu0 %3995
  %v3997 = vmul.f32 %v3993, %v356
  %v3998 = vmul.f32 %v3996, %v356
  %v3999 = vadd.f32 %v3997, 1e-05
  %v4000 = vadd.f32 %v3998, 1e-05
  %v4001 = vrsqrt.pop %v3999
  %v4002 = vrsqrt.pop %v4000
  %v4003 = vmul.f32 %v3987, %v4001
  %v4004 = vmul.f32 %v3988, %v4002
  %v4006 = vlaneseq
  %v4007 = vshrl.u32 %v4006, 7
  %v4008 = vsub.s32 0, %v4007
  %v4009 = vrot.slane %v3977, %v4008
  %v4011 = vmul.f32 %v4003, %v4009
  %v4012 = vmul.f32 %v4004, %v4009
  %v4014 = vlaneseq
  %v4015 = vshrl.u32 %v4014, 7
  %v4016 = vsub.s32 0, %v4015
  %v4017 = vrot.slane %v3978, %v4016
  %v4019 = vadd.f32 %v4011, %v4017
  %v4020 = vadd.f32 %v4012, %v4017
  %v4021 = vld [vmem:[%s65] sm:$0xff]
  %v4022 = vld [vmem:[%s65 + $0x8] sm:$0xff]
  %v4023 = vld [vmem:[%s65 + $0x10] sm:$0xff]
  %v4024 = vld [vmem:[%s65 + $0x18] sm:$0xff]
  %v4025 = vld [vmem:[%s67] sm:$0x1]
  %v4027 = vlaneseq
  %v4028 = vshrl.u32 %v4027, 7
  %v4029 = vsub.s32 0, %v4028
  %v4030 = vrot.slane %v4025, %v4029
  %v4033 = vsel %vm349, %v4019, 0
  %v4036 = vsel %vm349, %v4020, 0
  %4038 = vmatprep.subr.mxu0 0.0
  %4039 = vmatpush1.msra.mxu0 %v4021
  %4040 = vmatprep.subr.mxu0 0.0
  %4041 = vmatpush1.msra.mxu0 %v4022
  %4042 = vmatprep.subr.mxu0 0.0
  %4043 = vmatpush1.msra.mxu0 %v4023
  %4044 = vmatprep.subr.mxu0 0.0
  %4045 = vmatpush1.msra.mxu0 %v4024
  %4046 = vmatprep.subr.mxu0 0.0
  %4047 = vmatpush1.msra.mxu0 0.0
  %4048 = vmatprep.subr.mxu0 0.0
  %4049 = vmatpush1.msra.mxu0 0.0
  %4050 = vmatprep.subr.mxu0 0.0
  %4051 = vmatpush1.msra.mxu0 0.0
  %4052 = vmatprep.subr.mxu0 0.0
  %4053 = vmatpush1.msra.mxu0 0.0
  %4054 = vmatprep.subr.mxu0 0.0
  %4055 = vmatpush1.msra.mxu0 0.0
  %4056 = vmatprep.subr.mxu0 0.0
  %4057 = vmatpush1.msra.mxu0 0.0
  %4058 = vmatprep.subr.mxu0 0.0
  %4059 = vmatpush1.msra.mxu0 0.0
  %4060 = vmatprep.subr.mxu0 0.0
  %4061 = vmatpush1.msra.mxu0 0.0
  %4062 = vmatprep.subr.mxu0 0.0
  %4063 = vmatpush1.msra.mxu0 0.0
  %4064 = vmatprep.subr.mxu0 0.0
  %4065 = vmatpush1.msra.mxu0 0.0
  %4066 = vmatprep.subr.mxu0 0.0
  %4067 = vmatpush1.msra.mxu0 0.0
  %4068 = vmatprep.subr.mxu0 0.0
  %4069 = vmatpush1.msra.mxu0 0.0
  %4070 = vmatprep.subr.mxu0 0.0
  %4071 = vmatpush1.msra.mxu0 0.0
  %4072 = vmatprep.subr.mxu0 0.0
  %4073 = vmatpush1.msra.mxu0 0.0
  %4074 = vmatprep.subr.mxu0 0.0
  %4075 = vmatpush1.msra.mxu0 0.0
  %4076 = vmatprep.subr.mxu0 0.0
  %4077 = vmatpush1.msra.mxu0 0.0
  %4078 = vmatprep.subr.mxu0 0.0
  %4079 = vmatpush1.msra.mxu0 0.0
  %4080 = vmatprep.subr.mxu0 0.0
  %4081 = vmatpush1.msra.mxu0 0.0
  %4082 = vmatprep.subr.mxu0 0.0
  %4083 = vmatpush1.msra.mxu0 0.0
  %4084 = vmatprep.subr.mxu0 0.0
  %4085 = vmatpush1.msra.mxu0 0.0
  %4086 = vmatprep.subr.mxu0 0.0
  %4087 = vmatpush1.msra.mxu0 0.0
  %4088 = vmatprep.subr.mxu0 0.0
  %4089 = vmatpush1.msra.mxu0 0.0
  %4090 = vmatprep.subr.mxu0 0.0
  %4091 = vmatpush1.msra.mxu0 0.0
  %4092 = vmatprep.subr.mxu0 0.0
  %4093 = vmatpush1.msra.mxu0 0.0
  %4094 = vmatprep.subr.mxu0 0.0
  %4095 = vmatpush1.msra.mxu0 0.0
  %4096 = vmatprep.subr.mxu0 0.0
  %4097 = vmatpush1.msra.mxu0 0.0
  %4098 = vmatprep.subr.mxu0 0.0
  %4099 = vmatpush1.msra.mxu0 0.0
  %4100 = vmatprep.subr.mxu0 0.0
  %4101 = vmatpush1.msra.mxu0 0.0
  %4102 = vmatprep.mubr.f32.mxu0 0.0
  %4103 = vmatmul.mubr.f32.gmra.mrb[0].mxu0 %v4033
  %v4104 = vpop.f32.mrb[0].mxu0
  %v4105 = vadd.f32 %v4030, %v4104
  %v4106 = vpop.f32.mrb[0].mxu0
  %4107 = vmatprep.mubr.f32.mxu0 0.0
  %4108 = vmatmul.mubr.f32.gmra.mrb[0].mxu0 %v4036
  %v4109 = vpop.f32.mrb[0].mxu0
  %v4110 = vadd.f32 %v4030, %v4109
  %v4111 = vpop.f32.mrb[0].mxu0
  %4112 = vdwg.mxu0
  %v4113 = vmax.f32 %v4105, 0.0
  %v4114 = vmax.f32 %v4110, 0.0
  %v4115 = vld [vmem:[%s69] sm:$0xff]
  %v4116 = vld [vmem:[%s69 + $0x8] sm:$0xff]
  %v4117 = vld [vmem:[%s69 + $0x10] sm:$0xff]
  %v4118 = vld [vmem:[%s69 + $0x18] sm:$0xff]
  %v4119 = vld [vmem:[%s69 + $0x20] sm:$0xff]
  %v4120 = vld [vmem:[%s69 + $0x28] sm:$0xff]
  %v4121 = vld [vmem:[%s69 + $0x30] sm:$0xff]
  %v4122 = vld [vmem:[%s69 + $0x38] sm:$0xff]
  %v4123 = vld [vmem:[%s71] sm:$0x1]
  %v4125 = vlaneseq
  %v4126 = vshrl.u32 %v4125, 7
  %v4127 = vsub.s32 0, %v4126
  %v4128 = vrot.slane %v4123, %v4127
  %v4131 = vsel %vm2197, %v4113, 0
  %v4134 = vsel %vm2197, %v4114, 0
  %4136 = vmatprep.subr.mxu0 0.0
  %4137 = vmatpush1.msra.mxu0 %v4115
  %4138 = vmatprep.subr.mxu0 0.0
  %4139 = vmatpush1.msra.mxu0 %v4116
  %4140 = vmatprep.subr.mxu0 0.0
  %4141 = vmatpush1.msra.mxu0 %v4117
  %4142 = vmatprep.subr.mxu0 0.0
  %4143 = vmatpush1.msra.mxu0 %v4118
  %4144 = vmatprep.subr.mxu0 0.0
  %4145 = vmatpush1.msra.mxu0 %v4119
  %4146 = vmatprep.subr.mxu0 0.0
  %4147 = vmatpush1.msra.mxu0 %v4120
  %4148 = vmatprep.subr.mxu0 0.0
  %4149 = vmatpush1.msra.mxu0 %v4121
  %4150 = vmatprep.subr.mxu0 0.0
  %4151 = vmatpush1.msra.mxu0 %v4122
  %4152 = vmatprep.subr.mxu0 0.0
  %4153 = vmatpush1.msra.mxu0 0.0
  %4154 = vmatprep.subr.mxu0 0.0
  %4155 = vmatpush1.msra.mxu0 0.0
  %4156 = vmatprep.subr.mxu0 0.0
  %4157 = vmatpush1.msra.mxu0 0.0
  %4158 = vmatprep.subr.mxu0 0.0
  %4159 = vmatpush1.msra.mxu0 0.0
  %4160 = vmatprep.subr.mxu0 0.0
  %4161 = vmatpush1.msra.mxu0 0.0
  %4162 = vmatprep.subr.mxu0 0.0
  %4163 = vmatpush1.msra.mxu0 0.0
  %4164 = vmatprep.subr.mxu0 0.0
  %4165 = vmatpush1.msra.mxu0 0.0
  %4166 = vmatprep.subr.mxu0 0.0
  %4167 = vmatpush1.msra.mxu0 0.0
  %4168 = vmatprep.subr.mxu0 0.0
  %4169 = vmatpush1.msra.mxu0 0.0
  %4170 = vmatprep.subr.mxu0 0.0
  %4171 = vmatpush1.msra.mxu0 0.0
  %4172 = vmatprep.subr.mxu0 0.0
  %4173 = vmatpush1.msra.mxu0 0.0
  %4174 = vmatprep.subr.mxu0 0.0
  %4175 = vmatpush1.msra.mxu0 0.0
  %4176 = vmatprep.subr.mxu0 0.0
  %4177 = vmatpush1.msra.mxu0 0.0
  %4178 = vmatprep.subr.mxu0 0.0
  %4179 = vmatpush1.msra.mxu0 0.0
  %4180 = vmatprep.subr.mxu0 0.0
  %4181 = vmatpush1.msra.mxu0 0.0
  %4182 = vmatprep.subr.mxu0 0.0
  %4183 = vmatpush1.msra.mxu0 0.0
  %4184 = vmatprep.subr.mxu0 0.0
  %4185 = vmatpush1.msra.mxu0 0.0
  %4186 = vmatprep.subr.mxu0 0.0
  %4187 = vmatpush1.msra.mxu0 0.0
  %4188 = vmatprep.subr.mxu0 0.0
  %4189 = vmatpush1.msra.mxu0 0.0
  %4190 = vmatprep.subr.mxu0 0.0
  %4191 = vmatpush1.msra.mxu0 0.0
  %4192 = vmatprep.subr.mxu0 0.0
  %4193 = vmatpush1.msra.mxu0 0.0
  %4194 = vmatprep.subr.mxu0 0.0
  %4195 = vmatpush1.msra.mxu0 0.0
  %4196 = vmatprep.subr.mxu0 0.0
  %4197 = vmatpush1.msra.mxu0 0.0
  %4198 = vmatprep.subr.mxu0 0.0
  %4199 = vmatpush1.msra.mxu0 0.0
  %4200 = vmatprep.mubr.f32.mxu0 0.0
  %4201 = vmatmul.mubr.f32.gmra.mrb[0].mxu0 %v4131
  %v4202 = vpop.f32.mrb[0].mxu0
  %v4203 = vadd.f32 %v4128, %v4202
  %v4204 = vpop.f32.mrb[0].mxu0
  %4205 = vmatprep.mubr.f32.mxu0 0.0
  %4206 = vmatmul.mubr.f32.gmra.mrb[0].mxu0 %v4134
  %v4207 = vpop.f32.mrb[0].mxu0
  %v4208 = vadd.f32 %v4128, %v4207
  %v4209 = vpop.f32.mrb[0].mxu0
  %4210 = vdwg.mxu0
  %v4211 = vadd.f32 %v4019, %v4203
  %v4212 = vadd.f32 %v4020, %v4208
  %v4213 = vld [vmem:[%s61] sm:$0x1]
  %v4214 = vld [vmem:[%s63] sm:$0x1]
  %v4215 = vsel %vm349, %v4211, 0.0
  %4216 = vadd.xlane.f32.xlu0 %v4215
  %v4217 = vpop.xlane.xlu0 %4216
  %v4218 = vsel %vm349, %v4212, 0.0
  %4219 = vadd.xlane.f32.xlu0 %v4218
  %v4220 = vpop.xlane.xlu0 %4219
  %v4221 = vmul.f32 %v4217, %v356
  %v4222 = vmul.f32 %v4220, %v356
  %v4223 = vsub.f32 %v4211, %v4221
  %v4224 = vsub.f32 %v4212, %v4222
  %v4225 = vmul.f32 %v4223, %v4223
  %v4226 = vmul.f32 %v4224, %v4224
  %v4227 = vsel %vm349, %v4225, 0.0
  %4228 = vadd.xlane.f32.xlu0 %v4227
  %v4229 = vpop.xlane.xlu0 %4228
  %v4230 = vsel %vm349, %v4226, 0.0
  %4231 = vadd.xlane.f32.xlu0 %v4230
  %v4232 = vpop.xlane.xlu0 %4231
  %v4233 = vmul.f32 %v4229, %v356
  %v4234 = vmul.f32 %v4232, %v356
  %v4235 = vadd.f32 %v4233, 1e-05
  %v4236 = vadd.f32 %v4234, 1e-05
  %v4237 = vrsqrt.pop %v4235
  %v4238 = vrsqrt.pop %v4236
  %v4239 = vmul.f32 %v4223, %v4237
  %v4240 = vmul.f32 %v4224, %v4238
  %v4242 = vlaneseq
  %v4243 = vshrl.u32 %v4242, 7
  %v4244 = vsub.s32 0, %v4243
  %v4245 = vrot.slane %v4213, %v4244
  %v4247 = vmul.f32 %v4239, %v4245
  %v4248 = vmul.f32 %v4240, %v4245
  %v4250 = vlaneseq
  %v4251 = vshrl.u32 %v4250, 7
  %v4252 = vsub.s32 0, %v4251
  %v4253 = vrot.slane %v4214, %v4252
  %v4255 = vadd.f32 %v4247, %v4253
  %v4256 = vadd.f32 %v4248, %v4253
  %v4257 = vld [vmem:[%s73] sm:$0xff]
  %v4258 = vld [vmem:[%s73 + $0x8] sm:$0xff]
  %v4259 = vld [vmem:[%s73 + $0x10] sm:$0xff]
  %v4260 = vld [vmem:[%s73 + $0x18] sm:$0xff]
  %v4261 = vld [vmem:[%s75] sm:$0x1]
  %v4263 = vlaneseq
  %v4264 = vshrl.u32 %v4263, 7
  %v4265 = vsub.s32 0, %v4264
  %v4266 = vrot.slane %v4261, %v4265
  %v4269 = vsel %vm349, %v4255, 0
  %v4272 = vsel %vm349, %v4256, 0
  %4274 = vmatprep.subr.mxu0 0.0
  %4275 = vmatpush1.msra.mxu0 %v4257
  %4276 = vmatprep.subr.mxu0 0.0
  %4277 = vmatpush1.msra.mxu0 %v4258
  %4278 = vmatprep.subr.mxu0 0.0
  %4279 = vmatpush1.msra.mxu0 %v4259
  %4280 = vmatprep.subr.mxu0 0.0
  %4281 = vmatpush1.msra.mxu0 %v4260
  %4282 = vmatprep.subr.mxu0 0.0
  %4283 = vmatpush1.msra.mxu0 0.0
  %4284 = vmatprep.subr.mxu0 0.0
  %4285 = vmatpush1.msra.mxu0 0.0
  %4286 = vmatprep.subr.mxu0 0.0
  %4287 = vmatpush1.msra.mxu0 0.0
  %4288 = vmatprep.subr.mxu0 0.0
  %4289 = vmatpush1.msra.mxu0 0.0
  %4290 = vmatprep.subr.mxu0 0.0
  %4291 = vmatpush1.msra.mxu0 0.0
  %4292 = vmatprep.subr.mxu0 0.0
  %4293 = vmatpush1.msra.mxu0 0.0
  %4294 = vmatprep.subr.mxu0 0.0
  %4295 = vmatpush1.msra.mxu0 0.0
  %4296 = vmatprep.subr.mxu0 0.0
  %4297 = vmatpush1.msra.mxu0 0.0
  %4298 = vmatprep.subr.mxu0 0.0
  %4299 = vmatpush1.msra.mxu0 0.0
  %4300 = vmatprep.subr.mxu0 0.0
  %4301 = vmatpush1.msra.mxu0 0.0
  %4302 = vmatprep.subr.mxu0 0.0
  %4303 = vmatpush1.msra.mxu0 0.0
  %4304 = vmatprep.subr.mxu0 0.0
  %4305 = vmatpush1.msra.mxu0 0.0
  %4306 = vmatprep.subr.mxu0 0.0
  %4307 = vmatpush1.msra.mxu0 0.0
  %4308 = vmatprep.subr.mxu0 0.0
  %4309 = vmatpush1.msra.mxu0 0.0
  %4310 = vmatprep.subr.mxu0 0.0
  %4311 = vmatpush1.msra.mxu0 0.0
  %4312 = vmatprep.subr.mxu0 0.0
  %4313 = vmatpush1.msra.mxu0 0.0
  %4314 = vmatprep.subr.mxu0 0.0
  %4315 = vmatpush1.msra.mxu0 0.0
  %4316 = vmatprep.subr.mxu0 0.0
  %4317 = vmatpush1.msra.mxu0 0.0
  %4318 = vmatprep.subr.mxu0 0.0
  %4319 = vmatpush1.msra.mxu0 0.0
  %4320 = vmatprep.subr.mxu0 0.0
  %4321 = vmatpush1.msra.mxu0 0.0
  %4322 = vmatprep.subr.mxu0 0.0
  %4323 = vmatpush1.msra.mxu0 0.0
  %4324 = vmatprep.subr.mxu0 0.0
  %4325 = vmatpush1.msra.mxu0 0.0
  %4326 = vmatprep.subr.mxu0 0.0
  %4327 = vmatpush1.msra.mxu0 0.0
  %4328 = vmatprep.subr.mxu0 0.0
  %4329 = vmatpush1.msra.mxu0 0.0
  %4330 = vmatprep.subr.mxu0 0.0
  %4331 = vmatpush1.msra.mxu0 0.0
  %4332 = vmatprep.subr.mxu0 0.0
  %4333 = vmatpush1.msra.mxu0 0.0
  %4334 = vmatprep.subr.mxu0 0.0
  %4335 = vmatpush1.msra.mxu0 0.0
  %4336 = vmatprep.subr.mxu0 0.0
  %4337 = vmatpush1.msra.mxu0 0.0
  %4338 = vmatprep.mubr.f32.mxu0 0.0
  %4339 = vmatmul.mubr.f32.gmra.mrb[0].mxu0 %v4269
  %v4340 = vpop.f32.mrb[0].mxu0
  %v4341 = vadd.f32 %v4266, %v4340
  %v4342 = vpop.f32.mrb[0].mxu0
  %4343 = vmatprep.mubr.f32.mxu0 0.0
  %4344 = vmatmul.mubr.f32.gmra.mrb[0].mxu0 %v4272
  %v4345 = vpop.f32.mrb[0].mxu0
  %v4346 = vadd.f32 %v4266, %v4345
  %v4347 = vpop.f32.mrb[0].mxu0
  %4348 = vdwg.mxu0
  %v4349 = vlaneseq
  %v4350 = vand.u32 %v4349, 127
  %v4351 = vmul.f32 %v4341, 0.5
  %v4352 = vmul.f32 %v4346, 0.5
  %v4353 = vtanh.pop %v4351
  %v4354 = vtanh.pop %v4352
  %v4355 = vadd.f32 %v4353, 1.0
  %v4356 = vadd.f32 %v4354, 1.0
  %v4357 = vmul.f32 %v4355, 0.5
  %v4358 = vmul.f32 %v4356, 0.5
  %vm4359 = vcmp.eq.s32.totalorder %v4350, 3
  %v4360 = vsel %vm4359, %v4357, %v4341
  %v4361 = vsel %vm4359, %v4358, %v4346
  %4362 = vst [vmem:[%s77] sm:$0xff] %v4360
  %4363 = vst [vmem:[%s77 + $0x8] sm:$0xff] %v4361
  // Predicated region
  $region154: #{transformer_forward.1} parent=0 // pred_check
    _
  $region155: #{transformer_forward.1} parent=0 // pred_check_branch
    %4365 = sbr.rel (0) target = $region157
  $region156: #{transformer_forward.1} parent=0 // pred_region
    _
  $region157: #{transformer_forward.1} parent=0 // pred_fallthru
    _
  // Predicated region
  $region158: #{transformer_forward.1} parent=0 // pred_check
    _
  $region159: #{transformer_forward.1} parent=0 // pred_check_branch
    %4367 = sbr.rel (0) target = $region161
  $region160: #{transformer_forward.1} parent=0 // pred_region
    _
  $region161: #{transformer_forward.1} parent=0 // pred_fallthru
    _

</llo_original>
